<compile_context>
chip_gen: v7x
topology: tpu7x:2x2x1
jax: 0.10.0
libtpu: 0.0.40
codegen_flags: <defaults>
</compile_context>

<pallas_src>
import math
import functools

import jax
import jax.numpy as jnp
from jax.experimental import pallas as pl
from jax.experimental.pallas import tpu as pltpu


F32 = jnp.float32
BF16 = jnp.bfloat16
EPS = 1e-5
MASK_VALUE = -1e30


def _round_up(x, m):
    return (x + m - 1) // m * m


def _device_kind():
    try:
        return jax.devices()[0].device_kind.lower()
    except Exception:
        return ""


def _is_gen(kind, n):
    return (f"v{n}" in kind) or (f"tpu{n}" in kind)


def _vmem_limit_bytes(kind):
    if _is_gen(kind, 7):
        return 48 * 1024 * 1024      # v7x: 64 MiB physical -> leave DMA headroom
    if _is_gen(kind, 5) or _is_gen(kind, 6):
        return 96 * 1024 * 1024      # v5e/v6e: 128 MiB physical
    return 64 * 1024 * 1024


def _pick_ffn_tile(intermediate):
    for cand in (512, 256, 128):
        if intermediate % cand == 0:
            return cand
    return intermediate


def _const_weight_spec(shape):
    """BlockSpec for a weight whose block never changes -> single-buffer it."""
    ndim = len(shape)
    idx = lambda *args: (0,) * ndim
    if hasattr(pl, "Buffered"):
        try:
            return pl.BlockSpec(shape, idx, pipeline_mode=pl.Buffered(1))
        except TypeError:
            pass
    return pl.BlockSpec(shape, idx)


def _rms_normalize(x, w):
    xf = x.astype(F32)
    var = jnp.mean(xf * xf, axis=-1, keepdims=True)
    return xf * jax.lax.rsqrt(var + EPS) * w


def _rotate_half(x):
    d = x.shape[-1]
    return jnp.concatenate([-x[..., d // 2:], x[..., : d // 2]], axis=-1)


def _swap_halves(x):
    """concat([x2, x1]); the rotate_half sign is folded into the sin table."""
    d = x.shape[-1]
    if d % 128 == 0:
        return pltpu.roll(x, shift=d // 2, axis=-1)      # XLU, hides under MXU push
    # TODO(synk): for head_dim not a lane multiple, a strided pltpu.roll on the
    # packed (TQ, H) slab would avoid this lane concat entirely.
    return jnp.concatenate([x[..., d // 2:], x[..., : d // 2]], axis=-1)


# ---------------------------------------------------------------------------
# Kernel 1: attention_norm -> fused QKV matmul -> RoPE (score scale folded in)
#           q/k/v written lane-dense as (TQ, H) blocks
# ---------------------------------------------------------------------------
def _qkv_rope_kernel(x_ref, nw_ref, wqkv_ref, cos_ref, sin_ref,
                     q_ref, k_ref, v_ref, *, n_heads, head_dim):
    H = n_heads * head_dim
    xn = _rms_normalize(x_ref[...], nw_ref[...])
    qkv = jnp.dot(xn.astype(BF16), wqkv_ref[...],
                  preferred_element_type=jnp.float32)           # (tq, 3H) f32
    cos = cos_ref[...]                                          # (tq, D) f32
    sin = sin_ref[...]                                          # sign-folded sin
    scale = 1.0 / math.sqrt(head_dim)
    cos_q = cos * scale                                         # hoisted out of loop
    sin_q = sin * scale
    q_parts, k_parts = [], []
    for h in range(n_heads):                                    # static unrolled
        qh = qkv[:, h * head_dim:(h + 1) * head_dim]
        kh = qkv[:, H + h * head_dim:H + (h + 1) * head_dim]
        q_parts.append(qh * cos_q + _swap_halves(qh) * sin_q)   # 1/sqrt(D) folded
        k_parts.append(kh * cos + _swap_halves(kh) * sin)
    q_ref[...] = jnp.concatenate(q_parts, axis=-1).astype(q_ref.dtype)
    k_ref[...] = jnp.concatenate(k_parts, axis=-1).astype(k_ref.dtype)
    v_ref[...] = qkv[:, 2 * H:].astype(v_ref.dtype)             # lane-dense copy


# ---------------------------------------------------------------------------
# Kernel 2: flash attention with segment-ID block-diagonal masking and
#           tile-level skipping of fully-masked KV tiles (scalar prefetch)
# ---------------------------------------------------------------------------
def _flash_attn_kernel(smin_ref, smax_ref, segq_ref, segk_ref,
                       q_ref, k_ref, v_ref, o_ref,
                       m_sc, l_sc, acc_sc, *, hb, head_dim):
    D = head_dim
    qi = pl.program_id(1)
    ki = pl.program_id(2)

    @pl.when(ki == 0)
    def _():
        m_sc[...] = jnp.full(m_sc.shape, MASK_VALUE, m_sc.dtype)
        l_sc[...] = jnp.zeros(l_sc.shape, l_sc.dtype)
        acc_sc[...] = jnp.zeros(acc_sc.shape, acc_sc.dtype)

    # Segments are contiguous per image -> tiles interact iff their id ranges
    # overlap.  Skipping saves both MXU matmuls + exp/reductions per masked tile.
    overlap = jnp.logical_and(smin_ref[qi] <= smax_ref[ki],
                              smin_ref[ki] <= smax_ref[qi])

    @pl.when(overlap)
    def _():
        mask = segq_ref[...] == segk_ref[...]                   # (tq,1)==(1,tkv)
        q = q_ref[...]                                          # (tq, hb*D) bf16 (pre-scaled)
        k = k_ref[...]                                          # (tkv, hb*D) bf16
        v = v_ref[...]
        for hh in range(hb):                                    # static unrolled
            sl = slice(hh * D, (hh + 1) * D)
            s = jax.lax.dot_general(
                q[:, sl], k[:, sl], (((1,), (1,)), ((), ())),
                preferred_element_type=jnp.float32)             # (tq, tkv) f32
            s = jnp.where(mask, s, MASK_VALUE)
            m_prev = m_sc[:, hh:hh + 1]
            m_new = jnp.maximum(m_prev, jnp.max(s, axis=-1, keepdims=True))
            alpha = jnp.exp(m_prev - m_new)
            p = jnp.exp(s - m_new)
            l_sc[:, hh:hh + 1] = alpha * l_sc[:, hh:hh + 1] + jnp.sum(
                p, axis=-1, keepdims=True)
            acc_sc[:, sl] = alpha * acc_sc[:, sl] + jnp.dot(
                p.astype(BF16), v[:, sl], preferred_element_type=jnp.float32)
            m_sc[:, hh:hh + 1] = m_new

    @pl.when(ki == pl.num_programs(2) - 1)
    def _():
        parts = []
        for hh in range(hb):
            inv_l = pl.reciprocal(l_sc[:, hh:hh + 1], approx=True)   # EUP
            parts.append(acc_sc[:, hh * D:(hh + 1) * D] * inv_l)
        o = parts[0] if hb == 1 else jnp.concatenate(parts, axis=-1)
        o_ref[...] = o.astype(o_ref.dtype)                      # lane-dense (tq, hb*D)


# ---------------------------------------------------------------------------
# Kernel 3: o_proj + residual + ffn_norm + gate/up + SiLU-mul + down_proj
#           + residual, tiled over the FFN intermediate dimension
# ---------------------------------------------------------------------------
def _oproj_ffn_kernel(x_ref, attn_ref, wo_ref, fw_ref, w1_ref, w3_ref, w2_ref,
                      o_ref, h_sc, hn_sc, acc_sc):
    ki = pl.program_id(1)

    @pl.when(ki == 0)
    def _():
        h = x_ref[...] + jnp.dot(attn_ref[...], wo_ref[...],
                                 preferred_element_type=jnp.float32)
        h_sc[...] = h
        hn_sc[...] = _rms_normalize(h, fw_ref[...]).astype(BF16)
        acc_sc[...] = jnp.zeros(acc_sc.shape, acc_sc.dtype)

    hn = hn_sc[...]
    gate = jnp.dot(hn, w1_ref[...], preferred_element_type=jnp.float32)  # (tq, TI)
    up = jnp.dot(hn, w3_ref[...], preferred_element_type=jnp.float32)    # (tq, TI)
    act = gate * jax.nn.sigmoid(gate) * up                               # silu_and_mul (EUP)
    acc_sc[...] += jnp.dot(act.astype(BF16), w2_ref[...],
                           preferred_element_type=jnp.float32)

    @pl.when(ki == pl.num_programs(1) - 1)
    def _():
        o_ref[...] = h_sc[...] + acc_sc[...]


# ---------------------------------------------------------------------------
# Wrapper
# ---------------------------------------------------------------------------
def pixtral_hf_transformer_block(params, hidden_states, segment_ids, cos, sin):
    """hidden_states: (S, H) f32; segment_ids: (S,) int32 (one id per image);
    cos/sin: (S, head_dim) f32 (HF rotate_half convention)."""
    S, H = hidden_states.shape
    n_heads = params["n_heads"]
    D = H // n_heads
    I = params["w2"].shape[0]

    kind = _device_kind()
    vmem_limit = _vmem_limit_bytes(kind)
    big_mxu = _is_gen(kind, 6) or _is_gen(kind, 7)   # 2x256^2 MXUs

    # sequence tiling (pad S so blocks satisfy the (8, 128) layout rules);
    # TQ=256 fills the 256-wide MXU on v6e/v7x for long sequences while keeping
    # >=2 grid steps per parallel axis for v7x megacore sharding.
    if S <= 128:
        S_pad = _round_up(S, 8)
        TQ = TKV = S_pad
    else:
        TQ = TKV = 256 if (big_mxu and S >= 512) else 128
        S_pad = _round_up(S, TQ)
    pad = S_pad - S
    n_tiles = S_pad // TQ

    # heads per attention grid step so q/k/v/output blocks are lane-dense (>=128)
    hb = 1
    while (hb * D) % 128 != 0 and hb < n_heads:
        hb += 1
    if n_heads % hb != 0:
        hb = n_heads

    x = jnp.pad(hidden_states.astype(F32), ((0, pad), (0, 0)))
    cos_p = jnp.pad(cos.astype(F32), ((0, pad), (0, 0)))
    # fold the rotate_half sign into sin so the kernel only swaps halves
    sign = jnp.concatenate([-jnp.ones((D // 2,), F32), jnp.ones((D - D // 2,), F32)])
    sin_p = jnp.pad(sin.astype(F32), ((0, pad), (0, 0))) * sign[None, :]

    # pad tokens get segment -1: they only attend to each other (finite, discarded)
    seg = segment_ids.astype(jnp.int32)
    if pad:
        seg = jnp.concatenate([seg, jnp.full((pad,), -1, dtype=jnp.int32)])
    seg_col = seg.reshape(S_pad, 1)
    seg_row = seg.reshape(1, S_pad)
    seg_tiles = seg.reshape(n_tiles, TQ)
    seg_min = jnp.min(seg_tiles, axis=1).astype(jnp.int32)      # per-tile range for skip
    seg_max = jnp.max(seg_tiles, axis=1).astype(jnp.int32)

    # ---- 1) norm + QKV + RoPE (lane-dense (S_pad, H) q/k/v outputs) -----------
    qkv_kernel = functools.partial(_qkv_rope_kernel, n_heads=n_heads, head_dim=D)
    q, k, v = pl.pallas_call(
        qkv_kernel,
        grid=(n_tiles,),
        in_specs=[
            pl.BlockSpec((TQ, H), lambda i: (i, 0)),
            pl.BlockSpec((1, H), lambda i: (0, 0)),
            _const_weight_spec((H, 3 * H)),                     # constant -> Buffered(1)
            pl.BlockSpec((TQ, D), lambda i: (i, 0)),
            pl.BlockSpec((TQ, D), lambda i: (i, 0)),
        ],
        out_specs=[
            pl.BlockSpec((TQ, H), lambda i: (i, 0)),
            pl.BlockSpec((TQ, H), lambda i: (i, 0)),
            pl.BlockSpec((TQ, H), lambda i: (i, 0)),
        ],
        out_shape=[
            jax.ShapeDtypeStruct((S_pad, H), BF16),
            jax.ShapeDtypeStruct((S_pad, H), BF16),
            jax.ShapeDtypeStruct((S_pad, H), BF16),
        ],
        compiler_params=pltpu.CompilerParams(
            dimension_semantics=("parallel",),
            vmem_limit_bytes=vmem_limit),
    )(x, params["attn_norm_w"], params["wqkv"], cos_p, sin_p)

    # ---- 2) flash attention with segment masking + masked-tile skipping -------
    attn_kernel = functools.partial(_flash_attn_kernel, hb=hb, head_dim=D)
    attn = pl.pallas_call(
        attn_kernel,
        grid_spec=pltpu.PrefetchScalarGridSpec(
            num_scalar_prefetch=2,                              # seg_min, seg_max -> SMEM
            grid=(n_heads // hb, n_tiles, n_tiles),
            in_specs=[
                pl.BlockSpec((TQ, 1), lambda h, qi, ki, *_: (qi, 0)),
                pl.BlockSpec((1, TKV), lambda h, qi, ki, *_: (0, ki)),
                pl.BlockSpec((TQ, hb * D), lambda h, qi, ki, *_: (qi, h)),
                pl.BlockSpec((TKV, hb * D), lambda h, qi, ki, *_: (ki, h)),
                pl.BlockSpec((TKV, hb * D), lambda h, qi, ki, *_: (ki, h)),
            ],
            out_specs=pl.BlockSpec((TQ, hb * D), lambda h, qi, ki, *_: (qi, h)),
            scratch_shapes=[
                pltpu.VMEM((TQ, hb), F32),                      # running max
                pltpu.VMEM((TQ, hb), F32),                      # running denom
                pltpu.VMEM((TQ, hb * D), F32),                  # output accumulator
            ]),
        out_shape=jax.ShapeDtypeStruct((S_pad, H), BF16),
        compiler_params=pltpu.CompilerParams(
            dimension_semantics=("parallel", "parallel", "arbitrary"),
            vmem_limit_bytes=vmem_limit),
    )(seg_min, seg_max, seg_col, seg_row, q, k, v)

    # ---- 3) o_proj + residual + ffn_norm + SwiGLU MLP (I-tiled) + residual ----
    TI = _pick_ffn_tile(I)
    n_i = I // TI
    out = pl.pallas_call(
        _oproj_ffn_kernel,
        grid=(n_tiles, n_i),
        in_specs=[
            pl.BlockSpec((TQ, H), lambda i, ki: (i, 0)),
            pl.BlockSpec((TQ, H), lambda i, ki: (i, 0)),
            _const_weight_spec((H, H)),                         # wo constant -> Buffered(1)
            pl.BlockSpec((1, H), lambda i, ki: (0, 0)),
            pl.BlockSpec((H, TI), lambda i, ki: (0, ki)),       # gate columns of w13
            pl.BlockSpec((H, TI), lambda i, ki: (0, ki + n_i)),  # up columns of w13
            pl.BlockSpec((TI, H), lambda i, ki: (ki, 0)),       # w2 row blocks
        ],
        out_specs=pl.BlockSpec((TQ, H), lambda i, ki: (i, 0)),
        out_shape=jax.ShapeDtypeStruct((S_pad, H), F32),
        scratch_shapes=[
            pltpu.VMEM((TQ, H), F32),                           # residual h
            pltpu.VMEM((TQ, H), BF16),                          # rmsnorm(h)
            pltpu.VMEM((TQ, H), F32),                           # down_proj accumulator
        ],
        compiler_params=pltpu.CompilerParams(
            dimension_semantics=("parallel", "arbitrary"),
            vmem_limit_bytes=vmem_limit),
    )(x, attn, params["wo"], params["ffn_norm_w"],
      params["w13"], params["w13"], params["w2"])

    return out[:S]


# ---------------------------------------------------------------------------
# Pure-JAX reference (matches the PyTorch forward semantics)
# ---------------------------------------------------------------------------
def reference_block(params, hidden_states, segment_ids, cos, sin):
    n_heads = params["n_heads"]
    S, H = hidden_states.shape
    D = H // n_heads
    I = params["w2"].shape[0]
    wqkv = params["wqkv"].astype(F32)
    wo = params["wo"].astype(F32)
    w13 = params["w13"].astype(F32)
    w2 = params["w2"].astype(F32)

    xn = _rms_normalize(hidden_states, params["attn_norm_w"])
    qkv = xn @ wqkv
    q = qkv[:, :H].reshape(S, n_heads, D)
    k = qkv[:, H:2 * H].reshape(S, n_heads, D)
    v = qkv[:, 2 * H:].reshape(S, n_heads, D)

    def rope(t):
        return t * cos[:, None, :] + _rotate_half(t) * sin[:, None, :]

    q, k = rope(q), rope(k)
    s = jnp.einsum("qhd,khd->hqk", q, k) / math.sqrt(D)
    mask = segment_ids[:, None] == segment_ids[None, :]
    s = jnp.where(mask[None], s, -jnp.inf)
    p = jax.nn.softmax(s, axis=-1)
    o = jnp.einsum("hqk,khd->qhd", p, v).reshape(S, H)
    h = hidden_states + o @ wo
    hn = _rms_normalize(h, params["ffn_norm_w"])
    g = hn @ w13
    act = jax.nn.silu(g[:, :I]) * g[:, I:]
    return h + act @ w2


# ---------------------------------------------------------------------------
if __name__ == "__main__":
    HIDDEN = 256
    N_HEADS = 4
    HEAD_DIM = HIDDEN // N_HEADS
    INTERMEDIATE = 512
    ROPE_THETA = 10000.0

    # two "images" worth of patch tokens -> block-diagonal attention mask
    PATCHES = [256, 16]
    S = sum(PATCHES)

    key = jax.random.PRNGKey(0)
    k_x, k_qkv, k_o, k_13, k_2, k_n1, k_n2 = jax.random.split(key, 7)

    def bf16_w(k, shape, scale=0.02):
        return (jax.random.normal(k, shape, dtype=jnp.float32) * scale).astype(BF16)

    params = {
        "n_heads": N_HEADS,
        "attn_norm_w": 1.0 + 0.05 * jax.random.normal(k_n1, (1, HIDDEN), dtype=jnp.float32),
        "ffn_norm_w": 1.0 + 0.05 * jax.random.normal(k_n2, (1, HIDDEN), dtype=jnp.float32),
        "wqkv": bf16_w(k_qkv, (HIDDEN, 3 * HIDDEN)),
        "wo": bf16_w(k_o, (HIDDEN, HIDDEN)),
        "w13": bf16_w(k_13, (HIDDEN, 2 * INTERMEDIATE)),
        "w2": bf16_w(k_2, (INTERMEDIATE, HIDDEN)),
    }

    hidden_states = jax.random.normal(k_x, (S, HIDDEN), dtype=jnp.float32)
    segment_ids = jnp.concatenate(
        [jnp.full((n,), i, dtype=jnp.int32) for i, n in enumerate(PATCHES)])

    # HF-style rotary table: cos/sin of shape (S, head_dim), emb = cat(freqs, freqs)
    inv_freq = 1.0 / (ROPE_THETA ** (
        jnp.arange(0, HEAD_DIM, 2, dtype=jnp.float32) / HEAD_DIM))
    pos = jnp.arange(S, dtype=jnp.float32)
    freqs = jnp.outer(pos, inv_freq)
    emb = jnp.concatenate([freqs, freqs], axis=-1)
    cos, sin = jnp.cos(emb), jnp.sin(emb)

    out = pixtral_hf_transformer_block(params, hidden_states, segment_ids, cos, sin)
    out = jax.block_until_ready(out)

    assert out.shape == (S, HIDDEN), out.shape
    assert bool(jnp.all(jnp.isfinite(out)))

    ref = reference_block(params, hidden_states, segment_ids, cos, sin)
    max_diff = float(jnp.max(jnp.abs(out - ref)))
    assert max_diff < 5e-2, f"max diff vs reference: {max_diff}"

    print("KERNEL_OK")
</pallas_src>

<mosaic_0001>
module attributes {stable_mosaic.version = 11 : i64} {
  func.func @_qkv_rope_kernel(%arg0: i32, %arg1: memref<128x256xf32, #tpu.memory_space<vmem>>, %arg2: memref<1x256xf32, #tpu.memory_space<vmem>>, %arg3: memref<256x768xbf16, #tpu.memory_space<vmem>>, %arg4: memref<128x64xf32, #tpu.memory_space<vmem>>, %arg5: memref<128x64xf32, #tpu.memory_space<vmem>>, %arg6: memref<128x256xbf16, #tpu.memory_space<vmem>>, %arg7: memref<128x256xbf16, #tpu.memory_space<vmem>>, %arg8: memref<128x256xbf16, #tpu.memory_space<vmem>>) attributes {dimension_semantics = [#tpu.dimension_semantics<parallel>], iteration_bounds = array<i64: 3>, scalar_prefetch = 0 : i64, scratch_operands = 0 : i64, tpu.core_type = #tpu.core_type<tc>, window_params = [{transform_indices = @transform_0, window_bounds = array<i64: 128, 256>}, {pipeline_mode = #tpu.pipeline_mode<synchronous>, transform_indices = @transform_1, window_bounds = array<i64: 1, 256>}, {pipeline_mode = #tpu.pipeline_mode<synchronous>, transform_indices = @transform_2, window_bounds = array<i64: 256, 768>}, {transform_indices = @transform_3, window_bounds = array<i64: 128, 64>}, {transform_indices = @transform_4, window_bounds = array<i64: 128, 64>}, {transform_indices = @transform_5, window_bounds = array<i64: 128, 256>}, {transform_indices = @transform_6, window_bounds = array<i64: 128, 256>}, {transform_indices = @transform_7, window_bounds = array<i64: 128, 256>}]} {
    %c0 = arith.constant 0 : index
    %c0_0 = arith.constant 0 : index
    %0 = vector.load %arg1[%c0, %c0_0] : memref<128x256xf32, #tpu.memory_space<vmem>>, vector<128x256xf32>
    %c0_1 = arith.constant 0 : index
    %c0_2 = arith.constant 0 : index
    %1 = vector.load %arg2[%c0_1, %c0_2] : memref<1x256xf32, #tpu.memory_space<vmem>>, vector<1x256xf32>
    %2 = arith.mulf %0, %0 : vector<128x256xf32>
    %cst = arith.constant dense<0.000000e+00> : vector<128xf32>
    %3 = vector.multi_reduction <add>, %2, %cst [1] : vector<128x256xf32> to vector<128xf32>
    %4 = vector.shape_cast %3 : vector<128xf32> to vector<128x1xf32>
    %cst_3 = arith.constant 2.560000e+02 : f32
    %5 = vector.broadcast %cst_3 : f32 to vector<128x1xf32>
    %6 = arith.divf %4, %5 : vector<128x1xf32>
    %cst_4 = arith.constant 9.99999974E-6 : f32
    %7 = vector.broadcast %cst_4 : f32 to vector<128x1xf32>
    %8 = arith.addf %6, %7 : vector<128x1xf32>
    %9 = math.rsqrt %8 : vector<128x1xf32>
    %10 = vector.broadcast %9 : vector<128x1xf32> to vector<128x256xf32>
    %11 = arith.mulf %0, %10 : vector<128x256xf32>
    %12 = vector.broadcast %1 : vector<1x256xf32> to vector<128x256xf32>
    %13 = arith.mulf %11, %12 : vector<128x256xf32>
    %14 = arith.truncf %13 : vector<128x256xf32> to vector<128x256xbf16>
    %c0_5 = arith.constant 0 : index
    %c0_6 = arith.constant 0 : index
    %15 = vector.load %arg3[%c0_5, %c0_6] : memref<256x768xbf16, #tpu.memory_space<vmem>>, vector<256x768xbf16>
    %cst_7 = arith.constant dense<0.000000e+00> : vector<128x768xf32>
    %16 = tpu.matmul %14, %15, %cst_7 {dimension_numbers = #tpu.dot_dimension_numbers<[1], [0], [0], [1], [0, 0, 1, 1], [], []>} : vector<128x256xbf16>, vector<256x768xbf16>, vector<128x768xf32> -> vector<128x768xf32>
    %c0_8 = arith.constant 0 : index
    %c0_9 = arith.constant 0 : index
    %17 = vector.load %arg4[%c0_8, %c0_9] : memref<128x64xf32, #tpu.memory_space<vmem>>, vector<128x64xf32>
    %c0_10 = arith.constant 0 : index
    %c0_11 = arith.constant 0 : index
    %18 = vector.load %arg5[%c0_10, %c0_11] : memref<128x64xf32, #tpu.memory_space<vmem>>, vector<128x64xf32>
    %cst_12 = arith.constant 1.250000e-01 : f32
    %19 = vector.broadcast %cst_12 : f32 to vector<128x64xf32>
    %20 = arith.mulf %17, %19 : vector<128x64xf32>
    %cst_13 = arith.constant 1.250000e-01 : f32
    %21 = vector.broadcast %cst_13 : f32 to vector<128x64xf32>
    %22 = arith.mulf %18, %21 : vector<128x64xf32>
    %23 = vector.extract_strided_slice %16 {offsets = [0, 0], sizes = [128, 64], strides = [1, 1]} : vector<128x768xf32> to vector<128x64xf32>
    %24 = vector.extract_strided_slice %16 {offsets = [0, 256], sizes = [128, 64], strides = [1, 1]} : vector<128x768xf32> to vector<128x64xf32>
    %25 = arith.mulf %23, %20 : vector<128x64xf32>
    %26 = vector.extract_strided_slice %23 {offsets = [0, 32], sizes = [128, 32], strides = [1, 1]} : vector<128x64xf32> to vector<128x32xf32>
    %27 = vector.extract_strided_slice %23 {offsets = [0, 0], sizes = [128, 32], strides = [1, 1]} : vector<128x64xf32> to vector<128x32xf32>
    %28 = tpu.concatenate %26, %27 in 1 : vector<128x32xf32>, vector<128x32xf32> -> vector<128x64xf32>
    %29 = arith.mulf %28, %22 : vector<128x64xf32>
    %30 = arith.addf %25, %29 : vector<128x64xf32>
    %31 = arith.mulf %24, %17 : vector<128x64xf32>
    %32 = vector.extract_strided_slice %24 {offsets = [0, 32], sizes = [128, 32], strides = [1, 1]} : vector<128x64xf32> to vector<128x32xf32>
    %33 = vector.extract_strided_slice %24 {offsets = [0, 0], sizes = [128, 32], strides = [1, 1]} : vector<128x64xf32> to vector<128x32xf32>
    %34 = tpu.concatenate %32, %33 in 1 : vector<128x32xf32>, vector<128x32xf32> -> vector<128x64xf32>
    %35 = arith.mulf %34, %18 : vector<128x64xf32>
    %36 = arith.addf %31, %35 : vector<128x64xf32>
    %37 = vector.extract_strided_slice %16 {offsets = [0, 64], sizes = [128, 64], strides = [1, 1]} : vector<128x768xf32> to vector<128x64xf32>
    %38 = vector.extract_strided_slice %16 {offsets = [0, 320], sizes = [128, 64], strides = [1, 1]} : vector<128x768xf32> to vector<128x64xf32>
    %39 = arith.mulf %37, %20 : vector<128x64xf32>
    %40 = vector.extract_strided_slice %37 {offsets = [0, 32], sizes = [128, 32], strides = [1, 1]} : vector<128x64xf32> to vector<128x32xf32>
    %41 = vector.extract_strided_slice %37 {offsets = [0, 0], sizes = [128, 32], strides = [1, 1]} : vector<128x64xf32> to vector<128x32xf32>
    %42 = tpu.concatenate %40, %41 in 1 : vector<128x32xf32>, vector<128x32xf32> -> vector<128x64xf32>
    %43 = arith.mulf %42, %22 : vector<128x64xf32>
    %44 = arith.addf %39, %43 : vector<128x64xf32>
    %45 = arith.mulf %38, %17 : vector<128x64xf32>
    %46 = vector.extract_strided_slice %38 {offsets = [0, 32], sizes = [128, 32], strides = [1, 1]} : vector<128x64xf32> to vector<128x32xf32>
    %47 = vector.extract_strided_slice %38 {offsets = [0, 0], sizes = [128, 32], strides = [1, 1]} : vector<128x64xf32> to vector<128x32xf32>
    %48 = tpu.concatenate %46, %47 in 1 : vector<128x32xf32>, vector<128x32xf32> -> vector<128x64xf32>
    %49 = arith.mulf %48, %18 : vector<128x64xf32>
    %50 = arith.addf %45, %49 : vector<128x64xf32>
    %51 = vector.extract_strided_slice %16 {offsets = [0, 128], sizes = [128, 64], strides = [1, 1]} : vector<128x768xf32> to vector<128x64xf32>
    %52 = vector.extract_strided_slice %16 {offsets = [0, 384], sizes = [128, 64], strides = [1, 1]} : vector<128x768xf32> to vector<128x64xf32>
    %53 = arith.mulf %51, %20 : vector<128x64xf32>
    %54 = vector.extract_strided_slice %51 {offsets = [0, 32], sizes = [128, 32], strides = [1, 1]} : vector<128x64xf32> to vector<128x32xf32>
    %55 = vector.extract_strided_slice %51 {offsets = [0, 0], sizes = [128, 32], strides = [1, 1]} : vector<128x64xf32> to vector<128x32xf32>
    %56 = tpu.concatenate %54, %55 in 1 : vector<128x32xf32>, vector<128x32xf32> -> vector<128x64xf32>
    %57 = arith.mulf %56, %22 : vector<128x64xf32>
    %58 = arith.addf %53, %57 : vector<128x64xf32>
    %59 = arith.mulf %52, %17 : vector<128x64xf32>
    %60 = vector.extract_strided_slice %52 {offsets = [0, 32], sizes = [128, 32], strides = [1, 1]} : vector<128x64xf32> to vector<128x32xf32>
    %61 = vector.extract_strided_slice %52 {offsets = [0, 0], sizes = [128, 32], strides = [1, 1]} : vector<128x64xf32> to vector<128x32xf32>
    %62 = tpu.concatenate %60, %61 in 1 : vector<128x32xf32>, vector<128x32xf32> -> vector<128x64xf32>
    %63 = arith.mulf %62, %18 : vector<128x64xf32>
    %64 = arith.addf %59, %63 : vector<128x64xf32>
    %65 = vector.extract_strided_slice %16 {offsets = [0, 192], sizes = [128, 64], strides = [1, 1]} : vector<128x768xf32> to vector<128x64xf32>
    %66 = vector.extract_strided_slice %16 {offsets = [0, 448], sizes = [128, 64], strides = [1, 1]} : vector<128x768xf32> to vector<128x64xf32>
    %67 = arith.mulf %65, %20 : vector<128x64xf32>
    %68 = vector.extract_strided_slice %65 {offsets = [0, 32], sizes = [128, 32], strides = [1, 1]} : vector<128x64xf32> to vector<128x32xf32>
    %69 = vector.extract_strided_slice %65 {offsets = [0, 0], sizes = [128, 32], strides = [1, 1]} : vector<128x64xf32> to vector<128x32xf32>
    %70 = tpu.concatenate %68, %69 in 1 : vector<128x32xf32>, vector<128x32xf32> -> vector<128x64xf32>
    %71 = arith.mulf %70, %22 : vector<128x64xf32>
    %72 = arith.addf %67, %71 : vector<128x64xf32>
    %73 = arith.mulf %66, %17 : vector<128x64xf32>
    %74 = vector.extract_strided_slice %66 {offsets = [0, 32], sizes = [128, 32], strides = [1, 1]} : vector<128x64xf32> to vector<128x32xf32>
    %75 = vector.extract_strided_slice %66 {offsets = [0, 0], sizes = [128, 32], strides = [1, 1]} : vector<128x64xf32> to vector<128x32xf32>
    %76 = tpu.concatenate %74, %75 in 1 : vector<128x32xf32>, vector<128x32xf32> -> vector<128x64xf32>
    %77 = arith.mulf %76, %18 : vector<128x64xf32>
    %78 = arith.addf %73, %77 : vector<128x64xf32>
    %79 = tpu.concatenate %30, %44, %58, %72 in 1 : vector<128x64xf32>, vector<128x64xf32>, vector<128x64xf32>, vector<128x64xf32> -> vector<128x256xf32>
    %80 = arith.truncf %79 : vector<128x256xf32> to vector<128x256xbf16>
    %c0_14 = arith.constant 0 : index
    %c0_15 = arith.constant 0 : index
    %81 = vector.load %arg6[%c0_14, %c0_15] : memref<128x256xbf16, #tpu.memory_space<vmem>>, vector<128x256xbf16>
    tpu.vector_store %arg6[%c0_14, %c0_15], %80 {strides = array<i32>} : memref<128x256xbf16, #tpu.memory_space<vmem>>, vector<128x256xbf16>,
    %82 = tpu.concatenate %36, %50, %64, %78 in 1 : vector<128x64xf32>, vector<128x64xf32>, vector<128x64xf32>, vector<128x64xf32> -> vector<128x256xf32>
    %83 = arith.truncf %82 : vector<128x256xf32> to vector<128x256xbf16>
    %c0_16 = arith.constant 0 : index
    %c0_17 = arith.constant 0 : index
    %84 = vector.load %arg7[%c0_16, %c0_17] : memref<128x256xbf16, #tpu.memory_space<vmem>>, vector<128x256xbf16>
    tpu.vector_store %arg7[%c0_16, %c0_17], %83 {strides = array<i32>} : memref<128x256xbf16, #tpu.memory_space<vmem>>, vector<128x256xbf16>,
    %85 = vector.extract_strided_slice %16 {offsets = [0, 512], sizes = [128, 256], strides = [1, 1]} : vector<128x768xf32> to vector<128x256xf32>
    %86 = arith.truncf %85 : vector<128x256xf32> to vector<128x256xbf16>
    %c0_18 = arith.constant 0 : index
    %c0_19 = arith.constant 0 : index
    %87 = vector.load %arg8[%c0_18, %c0_19] : memref<128x256xbf16, #tpu.memory_space<vmem>>, vector<128x256xbf16>
    tpu.vector_store %arg8[%c0_18, %c0_19], %86 {strides = array<i32>} : memref<128x256xbf16, #tpu.memory_space<vmem>>, vector<128x256xbf16>,
    return
  }
  func.func @transform_0(%arg0: i32) -> (i32, i32) {
    %c0_i32 = arith.constant 0 : i32
    %c0_i32_0 = arith.constant 0 : i32
    return %arg0, %c0_i32 : i32, i32
  }
  func.func @transform_1(%arg0: i32) -> (i32, i32) {
    %c0_i32 = arith.constant 0 : i32
    %c0_i32_0 = arith.constant 0 : i32
    %c0_i32_1 = arith.constant 0 : i32
    return %c0_i32, %c0_i32_0 : i32, i32
  }
  func.func @transform_2(%arg0: i32) -> (i32, i32) {
    %c0_i32 = arith.constant 0 : i32
    %c0_i32_0 = arith.constant 0 : i32
    %c0_i32_1 = arith.constant 0 : i32
    return %c0_i32, %c0_i32_0 : i32, i32
  }
  func.func @transform_3(%arg0: i32) -> (i32, i32) {
    %c0_i32 = arith.constant 0 : i32
    %c0_i32_0 = arith.constant 0 : i32
    return %arg0, %c0_i32 : i32, i32
  }
  func.func @transform_4(%arg0: i32) -> (i32, i32) {
    %c0_i32 = arith.constant 0 : i32
    %c0_i32_0 = arith.constant 0 : i32
    return %arg0, %c0_i32 : i32, i32
  }
  func.func @transform_5(%arg0: i32) -> (i32, i32) {
    %c0_i32 = arith.constant 0 : i32
    %c0_i32_0 = arith.constant 0 : i32
    return %arg0, %c0_i32 : i32, i32
  }
  func.func @transform_6(%arg0: i32) -> (i32, i32) {
    %c0_i32 = arith.constant 0 : i32
    %c0_i32_0 = arith.constant 0 : i32
    return %arg0, %c0_i32 : i32, i32
  }
  func.func @transform_7(%arg0: i32) -> (i32, i32) {
    %c0_i32 = arith.constant 0 : i32
    %c0_i32_0 = arith.constant 0 : i32
    return %arg0, %c0_i32 : i32, i32
  }
}

</mosaic_0001>

<llo_original>
// kernel: tpu_custom_call.1
$region0: #{tpu_custom_call.1}
  #allocation0 [shape = 'u32[]', space=smem, size = 0x4, offset = 0x4, fixed_abs, tag = 'smem constant byte address 0x4 - core index']
  #allocation1 [shape = 'u32[144,128]{1,0:T(1,128)}', space=vmem, size = 0x12000, scoped, tag = 'internal scratch']
  %s0 = inlined_call_operand.hbm [shape: f32[384,256], index: 0, kind: input, shape index: {}]
  %s1 = inlined_call_operand.hbm [shape: f32[1,256], index: 1, kind: input, shape index: {}]
  %s2 = inlined_call_operand.hbm [shape: bf16[256,768], index: 2, kind: input, shape index: {}]
  %s3 = inlined_call_operand.hbm [shape: f32[384,64], index: 3, kind: input, shape index: {}]
  %s4 = inlined_call_operand.hbm [shape: f32[384,64], index: 4, kind: input, shape index: {}]
  %s5 = inlined_call_operand.hbm [shape: bf16[384,256], index: 5, kind: output, shape index: {0}]
  %s6 = inlined_call_operand.hbm [shape: bf16[384,256], index: 6, kind: output, shape index: {1}]
  %s7 = inlined_call_operand.hbm [shape: bf16[384,256], index: 7, kind: output, shape index: {2}]
  %8 = xla_tuple %s5, %s6, %s7
  %s9 = sld [smem:[#allocation0]]
  $region89: #{tpu_custom_call.1} parent=0
    _
  %s11 = ssub.s32 1, %s9
  %s12 = scalar_select 0, %s11, %s9
  $region1: #{tpu_custom_call.1} parent=0
    #allocation2 [shape = 'u8[262144]{0}', space=vmem, size = 0x40000, scoped, tag = 'input window, operand 0']
    #allocation3 [shape = 's32[2]{0}', space=sflag, size = 0x8, scoped, tag = 'scoped memory for tpu_custom_call.1']
    #allocation4 [shape = 's32[2]{0}', space=sflag, size = 0x8, scoped, tag = 'scoped memory for tpu_custom_call.1']
    #allocation5 [shape = 'u8[1024]{0}', space=vmem, size = 0x400, scoped, tag = 'input window, operand 1, single buffered']
    #allocation6 [shape = 's32[1]{0}', space=sflag, size = 0x4, scoped, tag = 'scoped memory for tpu_custom_call.1']
    #allocation7 [shape = 'u8[393216]{0}', space=vmem, size = 0x60000, scoped, tag = 'input window, operand 2, single buffered']
    #allocation8 [shape = 'u8[131072]{0}', space=vmem, size = 0x20000, scoped, tag = 'input window, operand 3']
    #allocation9 [shape = 's32[2]{0}', space=sflag, size = 0x8, scoped, tag = 'scoped memory for tpu_custom_call.1']
    #allocation10 [shape = 'u8[131072]{0}', space=vmem, size = 0x20000, scoped, tag = 'input window, operand 4']
    #allocation11 [shape = 'u8[131072]{0}', space=vmem, size = 0x20000, scoped, tag = 'output window, operand 0']
    #allocation12 [shape = 'u8[131072]{0}', space=vmem, size = 0x20000, scoped, tag = 'output window, operand 1']
    #allocation13 [shape = 's32[2]{0}', space=sflag, size = 0x8, scoped, tag = 'scoped memory for tpu_custom_call.1']
    #allocation14 [shape = 'u8[131072]{0}', space=vmem, size = 0x20000, scoped, tag = 'output window, operand 2']
    %13 = vsyncpa [#allocation3], 0
    %s14 = scalar_lea.sflag [#allocation3], 1
    %15 = vsyncpa %s14, 0
    %16 = vsyncpa [#allocation6], 0
    %17 = vsyncpa [#allocation9], 0
    %s18 = scalar_lea.sflag [#allocation9], 1
    %19 = vsyncpa %s18, 0
    %20 = vsyncpa [#allocation4], 0
    %s21 = scalar_lea.sflag [#allocation4], 1
    %22 = vsyncpa %s21, 0
    %23 = vsyncpa [#allocation13], 0
    %s24 = scalar_lea.sflag [#allocation13], 1
    %25 = vsyncpa %s24, 0
    loop: start=0, step=1, limit=5
    $region2: #{tpu_custom_call.1} parent=1 // loop_pre_header
      _
    $region3: #{tpu_custom_call.1} parent=1 // loop_header
      %s27 = sphi 0, %s31
      %p28 = scmp.ge.s32.totalorder %s27, 5
      %s37 = sphi 0, %s39
      %s40 = sphi 0, %s37
      %s41 = sphi 0, %s40
      %s57 = sphi 0, %s41
      %s61 = sphi 0, %s61
      %s63 = sphi 0, %s61
      %s64 = sphi 0, %s63
      %s78 = sphi 0, %s64
      %s82 = sphi 0, %s82
      %s84 = sphi 0, %s82
      %s85 = sphi 0, %s84
      %s99 = sphi 0, %s85
      %s105 = sphi 0, %s107
      %s108 = sphi 0, %s105
      %s109 = sphi 0, %s108
      %s125 = sphi 0, %s109
      %s131 = sphi 0, %s133
      %s134 = sphi 0, %s131
      %s135 = sphi 0, %s134
      %s151 = sphi 0, %s135
      %s157 = sphi 0, %s159
      %s160 = sphi 0, %s157
      %s161 = sphi 0, %s160
      %s177 = sphi 0, %s161
      %s183 = sphi 0, %s185
      %s186 = sphi 0, %s183
      %s187 = sphi 0, %s186
      %s203 = sphi 0, %s187
      %s209 = sphi 0, %s211
      %s212 = sphi 0, %s209
      %s213 = sphi 0, %s212
      %s229 = sphi 0, %s213
    $region4: #{tpu_custom_call.1} parent=1 // loop_header_branch
      %30 = sbr.rel (%p28) target = $region8
    $region5: #{tpu_custom_call.1} parent=1 // loop_body
      %s32 = ssub.s32 %s27, 1
      %s33 = ssub.s32 %s27, 2
      %s34 = sadd.s32 %s27, 1
      %s35 = ssub.s32 %s27, %s34
      %p36 = scmp.eq.s32.totalorder %s35, 0
      %s38 = sadd.s32 %s37, 1
      %s39 = scalar_select %p36, %s37, %s38
      %p42 = pneg %p36
      %p43 = scmp.eq.s32.totalorder %s27, 2
      %p44 = por %p42, %p43
      %p45 = scmp.ne.s32.totalorder %s37, %s40
      %p46 = scmp.eq.s32.totalorder %s27, 0
      %p47 = por %p45, %p46
      %p48 = scmp.ne.s32.totalorder %s37, %s40
      %p49 = scmp.eq.s32.totalorder %s32, 2
      %p50 = por %p48, %p49
      %p51 = scmp.ne.s32.totalorder %s40, %s41
      %p52 = scmp.eq.s32.totalorder %s32, 0
      %p53 = por %p51, %p52
      %p54 = scmp.ne.s32.totalorder %s40, %s41
      %p55 = scmp.eq.s32.totalorder %s33, 2
      %p56 = por %p54, %p55
      %p58 = scmp.ne.s32.totalorder %s41, %s57
      %p59 = scmp.eq.s32.totalorder %s33, 0
      %p60 = por %p58, %p59
      %s62 = sadd.s32 %s61, 1
      %p65 = scmp.eq.s32.totalorder %s27, 2
      %p66 = scmp.ne.s32.totalorder %s61, %s63
      %p67 = scmp.eq.s32.totalorder %s27, 0
      %p68 = por %p66, %p67
      %p69 = scmp.ne.s32.totalorder %s61, %s63
      %p70 = scmp.eq.s32.totalorder %s32, 2
      %p71 = por %p69, %p70
      %p72 = scmp.ne.s32.totalorder %s63, %s64
      %p73 = scmp.eq.s32.totalorder %s32, 0
      %p74 = por %p72, %p73
      %p75 = scmp.ne.s32.totalorder %s63, %s64
      %p76 = scmp.eq.s32.totalorder %s33, 2
      %p77 = por %p75, %p76
      %p79 = scmp.ne.s32.totalorder %s64, %s78
      %p80 = scmp.eq.s32.totalorder %s33, 0
      %p81 = por %p79, %p80
      %s83 = sadd.s32 %s82, 1
      %p86 = scmp.eq.s32.totalorder %s27, 2
      %p87 = scmp.ne.s32.totalorder %s82, %s84
      %p88 = scmp.eq.s32.totalorder %s27, 0
      %p89 = por %p87, %p88
      %p90 = scmp.ne.s32.totalorder %s82, %s84
      %p91 = scmp.eq.s32.totalorder %s32, 2
      %p92 = por %p90, %p91
      %p93 = scmp.ne.s32.totalorder %s84, %s85
      %p94 = scmp.eq.s32.totalorder %s32, 0
      %p95 = por %p93, %p94
      %p96 = scmp.ne.s32.totalorder %s84, %s85
      %p97 = scmp.eq.s32.totalorder %s33, 2
      %p98 = por %p96, %p97
      %p100 = scmp.ne.s32.totalorder %s85, %s99
      %p101 = scmp.eq.s32.totalorder %s33, 0
      %p102 = por %p100, %p101
      %s103 = ssub.s32 %s27, %s34
      %p104 = scmp.eq.s32.totalorder %s103, 0
      %s106 = sadd.s32 %s105, 1
      %s107 = scalar_select %p104, %s105, %s106
      %p110 = pneg %p104
      %p111 = scmp.eq.s32.totalorder %s27, 2
      %p112 = por %p110, %p111
      %p113 = scmp.ne.s32.totalorder %s105, %s108
      %p114 = scmp.eq.s32.totalorder %s27, 0
      %p115 = por %p113, %p114
      %p116 = scmp.ne.s32.totalorder %s105, %s108
      %p117 = scmp.eq.s32.totalorder %s32, 2
      %p118 = por %p116, %p117
      %p119 = scmp.ne.s32.totalorder %s108, %s109
      %p120 = scmp.eq.s32.totalorder %s32, 0
      %p121 = por %p119, %p120
      %p122 = scmp.ne.s32.totalorder %s108, %s109
      %p123 = scmp.eq.s32.totalorder %s33, 2
      %p124 = por %p122, %p123
      %p126 = scmp.ne.s32.totalorder %s109, %s125
      %p127 = scmp.eq.s32.totalorder %s33, 0
      %p128 = por %p126, %p127
      %s129 = ssub.s32 %s27, %s34
      %p130 = scmp.eq.s32.totalorder %s129, 0
      %s132 = sadd.s32 %s131, 1
      %s133 = scalar_select %p130, %s131, %s132
      %p136 = pneg %p130
      %p137 = scmp.eq.s32.totalorder %s27, 2
      %p138 = por %p136, %p137
      %p139 = scmp.ne.s32.totalorder %s131, %s134
      %p140 = scmp.eq.s32.totalorder %s27, 0
      %p141 = por %p139, %p140
      %p142 = scmp.ne.s32.totalorder %s131, %s134
      %p143 = scmp.eq.s32.totalorder %s32, 2
      %p144 = por %p142, %p143
      %p145 = scmp.ne.s32.totalorder %s134, %s135
      %p146 = scmp.eq.s32.totalorder %s32, 0
      %p147 = por %p145, %p146
      %p148 = scmp.ne.s32.totalorder %s134, %s135
      %p149 = scmp.eq.s32.totalorder %s33, 2
      %p150 = por %p148, %p149
      %p152 = scmp.ne.s32.totalorder %s135, %s151
      %p153 = scmp.eq.s32.totalorder %s33, 0
      %p154 = por %p152, %p153
      %s155 = ssub.s32 %s27, %s34
      %p156 = scmp.eq.s32.totalorder %s155, 0
      %s158 = sadd.s32 %s157, 1
      %s159 = scalar_select %p156, %s157, %s158
      %p162 = pneg %p156
      %p163 = scmp.eq.s32.totalorder %s27, 2
      %p164 = por %p162, %p163
      %p165 = scmp.ne.s32.totalorder %s157, %s160
      %p166 = scmp.eq.s32.totalorder %s27, 0
      %p167 = por %p165, %p166
      %p168 = scmp.ne.s32.totalorder %s157, %s160
      %p169 = scmp.eq.s32.totalorder %s32, 2
      %p170 = por %p168, %p169
      %p171 = scmp.ne.s32.totalorder %s160, %s161
      %p172 = scmp.eq.s32.totalorder %s32, 0
      %p173 = por %p171, %p172
      %p174 = scmp.ne.s32.totalorder %s160, %s161
      %p175 = scmp.eq.s32.totalorder %s33, 2
      %p176 = por %p174, %p175
      %p178 = scmp.ne.s32.totalorder %s161, %s177
      %p179 = scmp.eq.s32.totalorder %s33, 0
      %p180 = por %p178, %p179
      %s181 = ssub.s32 %s27, %s34
      %p182 = scmp.eq.s32.totalorder %s181, 0
      %s184 = sadd.s32 %s183, 1
      %s185 = scalar_select %p182, %s183, %s184
      %p188 = pneg %p182
      %p189 = scmp.eq.s32.totalorder %s27, 2
      %p190 = por %p188, %p189
      %p191 = scmp.ne.s32.totalorder %s183, %s186
      %p192 = scmp.eq.s32.totalorder %s27, 0
      %p193 = por %p191, %p192
      %p194 = scmp.ne.s32.totalorder %s183, %s186
      %p195 = scmp.eq.s32.totalorder %s32, 2
      %p196 = por %p194, %p195
      %p197 = scmp.ne.s32.totalorder %s186, %s187
      %p198 = scmp.eq.s32.totalorder %s32, 0
      %p199 = por %p197, %p198
      %p200 = scmp.ne.s32.totalorder %s186, %s187
      %p201 = scmp.eq.s32.totalorder %s33, 2
      %p202 = por %p200, %p201
      %p204 = scmp.ne.s32.totalorder %s187, %s203
      %p205 = scmp.eq.s32.totalorder %s33, 0
      %p206 = por %p204, %p205
      %s207 = ssub.s32 %s27, %s34
      %p208 = scmp.eq.s32.totalorder %s207, 0
      %s210 = sadd.s32 %s209, 1
      %s211 = scalar_select %p208, %s209, %s210
      %p214 = pneg %p208
      %p215 = scmp.eq.s32.totalorder %s27, 2
      %p216 = por %p214, %p215
      %p217 = scmp.ne.s32.totalorder %s209, %s212
      %p218 = scmp.eq.s32.totalorder %s27, 0
      %p219 = por %p217, %p218
      %p220 = scmp.ne.s32.totalorder %s209, %s212
      %p221 = scmp.eq.s32.totalorder %s32, 2
      %p222 = por %p220, %p221
      %p223 = scmp.ne.s32.totalorder %s212, %s213
      %p224 = scmp.eq.s32.totalorder %s32, 0
      %p225 = por %p223, %p224
      %p226 = scmp.ne.s32.totalorder %s212, %s213
      %p227 = scmp.eq.s32.totalorder %s33, 2
      %p228 = por %p226, %p227
      %p230 = scmp.ne.s32.totalorder %s213, %s229
      %p231 = scmp.eq.s32.totalorder %s33, 0
      %p232 = por %p230, %p231
      %p233 = scmp.le.s32.totalorder 1, %s27
      %p234 = scmp.lt.s32.totalorder %s27, 4
      %p235 = pnand %p233, %p234
      %p236 = pneg %p235
      // Predicated region
      $region9: #{tpu_custom_call.1} parent=5 // pred_check
        _
      $region10: #{tpu_custom_call.1} parent=5 // pred_check_branch
        %238 = sbr.rel (%p235) target = $region12
      $region11: #{tpu_custom_call.1} parent=5 // pred_region
        %s239 = ssub.s32 %s27, 1
        // Predicated region
        $region13: #{tpu_custom_call.1} parent=11 // pred_check
          %p240 = pneg %p74
        $region14: #{tpu_custom_call.1} parent=11 // pred_check_branch
          %242 = sbr.rel (%p240) target = $region16
        $region15: #{tpu_custom_call.1} parent=11 // pred_region
          %s244 = ssub.s32 32, 32
          %245 = vsyncadd [#allocation6], %s244
          %s247 = sshll.u32 [#allocation5], 4
          %s248 = int_to_ptr.vmem [resolvable:$true] %s247
          %250 = dma.hbm_to_vmem [thread:$0]  %s1, 32, %s248, [#allocation6]
        $region16: #{tpu_custom_call.1} parent=11 // pred_fallthru
          _
        // Predicated region
        $region17: #{tpu_custom_call.1} parent=11 // pred_check
          %p251 = pneg %p95
        $region18: #{tpu_custom_call.1} parent=11 // pred_check_branch
          %253 = sbr.rel (%p251) target = $region20
        $region19: #{tpu_custom_call.1} parent=11 // pred_region
          %s255 = ssub.s32 12288, 12288
          %256 = vsyncadd [#allocation6], %s255
          %s257 = sshll.u32 [#allocation7], 4
          %s258 = int_to_ptr.vmem [resolvable:$true] %s257
          %263 = dma.hbm_to_vmem [thread:$0]  %s2, 12288, %s258, [#allocation6], 384, 384, 24
        $region20: #{tpu_custom_call.1} parent=11 // pred_fallthru
          _
      $region12: #{tpu_custom_call.1} parent=5 // pred_fallthru
        _
      %p264 = scmp.lt.s32.totalorder %s27, 3
      // Predicated region
      $region21: #{tpu_custom_call.1} parent=5 // pred_check
        %p265 = pneg %p264
      $region22: #{tpu_custom_call.1} parent=5 // pred_check_branch
        %267 = sbr.rel (%p265) target = $region24
      $region23: #{tpu_custom_call.1} parent=5 // pred_region
        // Predicated region
        $region25: #{tpu_custom_call.1} parent=23 // pred_check
          %p268 = pneg %p47
        $region26: #{tpu_custom_call.1} parent=23 // pred_check_branch
          %270 = sbr.rel (%p268) target = $region28
        $region27: #{tpu_custom_call.1} parent=23 // pred_region
          %s271 = sand.u32 %s37, 1
          %s272 = scalar_lea.sflag [#allocation3], %s271
          %s273 = sand.u32 %s37, 1
          %s274 = smul.addr %s273, 256
          %s275 = scalar_lea.vmem [#allocation2], %s274
          %s276 = smul.u32 16, %s27
          %s278 = ssub.s32 4096, 4096
          %279 = vsyncadd %s272, %s278
          %s280 = smul.addr %s276, 2
          %s281 = smul.addr %s280, 128
          %s282 = scalar_lea.hbm %s0, %s281
          %s283 = sshll.u32 %s275, 4
          %s284 = int_to_ptr.vmem [resolvable:$true] %s283
          %289 = dma.hbm_to_vmem [thread:$0]  %s282, 4096, %s284, %s272, 256, 256, 16
        $region28: #{tpu_custom_call.1} parent=23 // pred_fallthru
          _
        // Predicated region
        $region29: #{tpu_custom_call.1} parent=23 // pred_check
          %p290 = pneg %p115
        $region30: #{tpu_custom_call.1} parent=23 // pred_check_branch
          %292 = sbr.rel (%p290) target = $region32
        $region31: #{tpu_custom_call.1} parent=23 // pred_region
          %s293 = sand.u32 %s27, 1
          %s294 = scalar_lea.sflag [#allocation9], %s293
          %s295 = sand.u32 %s105, 1
          %s296 = smul.addr %s295, 128
          %s297 = scalar_lea.vmem [#allocation8], %s296
          %s298 = smul.u32 16, %s27
          %s300 = ssub.s32 2048, 2048
          %301 = vsyncadd %s294, %s300
          %s302 = smul.addr %s298, 128
          %s303 = scalar_lea.hbm %s3, %s302
          %s304 = sshll.u32 %s297, 4
          %s305 = int_to_ptr.vmem [resolvable:$true] %s304
          %310 = dma.hbm_to_vmem [thread:$0]  %s303, 2048, %s305, %s294, 128, 128, 8
        $region32: #{tpu_custom_call.1} parent=23 // pred_fallthru
          _
        // Predicated region
        $region33: #{tpu_custom_call.1} parent=23 // pred_check
          %p311 = pneg %p141
        $region34: #{tpu_custom_call.1} parent=23 // pred_check_branch
          %313 = sbr.rel (%p311) target = $region36
        $region35: #{tpu_custom_call.1} parent=23 // pred_region
          %s314 = sand.u32 %s27, 1
          %s315 = scalar_lea.sflag [#allocation9], %s314
          %s316 = sand.u32 %s131, 1
          %s317 = smul.addr %s316, 128
          %s318 = scalar_lea.vmem [#allocation10], %s317
          %s319 = smul.u32 16, %s27
          %s321 = ssub.s32 2048, 2048
          %322 = vsyncadd %s315, %s321
          %s323 = smul.addr %s319, 128
          %s324 = scalar_lea.hbm %s4, %s323
          %s325 = sshll.u32 %s318, 4
          %s326 = int_to_ptr.vmem [resolvable:$true] %s325
          %331 = dma.hbm_to_vmem [thread:$0]  %s324, 2048, %s326, %s315, 128, 128, 8
        $region36: #{tpu_custom_call.1} parent=23 // pred_fallthru
          _
      $region24: #{tpu_custom_call.1} parent=5 // pred_fallthru
        _
      %p332 = scmp.le.s32.totalorder 1, %s27
      %p333 = scmp.lt.s32.totalorder %s27, 4
      %p334 = pnand %p332, %p333
      %p335 = pneg %p334
      // Predicated region
      $region37: #{tpu_custom_call.1} parent=5 // pred_check
        _
      $region38: #{tpu_custom_call.1} parent=5 // pred_check_branch
        %337 = sbr.rel (%p334) target = $region40
      $region39: #{tpu_custom_call.1} parent=5 // pred_region
        %s338 = ssub.s32 %s27, 1
        %s339 = sand.u32 %s40, 1
        %s340 = scalar_lea.sflag [#allocation3], %s339
        %s341 = sand.u32 %s40, 1
        %s342 = smul.addr %s341, 256
        %s343 = scalar_lea.vmem [#allocation2], %s342
        // Predicated region
        $region41: #{tpu_custom_call.1} parent=39 // pred_check
          %p344 = pneg %p53
        $region42: #{tpu_custom_call.1} parent=39 // pred_check_branch
          %346 = sbr.rel (%p344) target = $region44
        $region43: #{tpu_custom_call.1} parent=39 // pred_region
          %347 = dma.done %s340, 4096
        $region44: #{tpu_custom_call.1} parent=39 // pred_fallthru
          _
        // Predicated region
        $region45: #{tpu_custom_call.1} parent=39 // pred_check
          %p348 = pneg %p74
        $region46: #{tpu_custom_call.1} parent=39 // pred_check_branch
          %350 = sbr.rel (%p348) target = $region48
        $region47: #{tpu_custom_call.1} parent=39 // pred_region
          %351 = dma.done [#allocation6], 32
        $region48: #{tpu_custom_call.1} parent=39 // pred_fallthru
          _
        // Predicated region
        $region49: #{tpu_custom_call.1} parent=39 // pred_check
          %p352 = pneg %p95
        $region50: #{tpu_custom_call.1} parent=39 // pred_check_branch
          %354 = sbr.rel (%p352) target = $region52
        $region51: #{tpu_custom_call.1} parent=39 // pred_region
          %355 = dma.done [#allocation6], 12288
        $region52: #{tpu_custom_call.1} parent=39 // pred_fallthru
          _
        %s356 = sand.u32 %s32, 1
        %s357 = scalar_lea.sflag [#allocation9], %s356
        %s358 = sand.u32 %s108, 1
        %s359 = smul.addr %s358, 128
        %s360 = scalar_lea.vmem [#allocation8], %s359
        // Predicated region
        $region53: #{tpu_custom_call.1} parent=39 // pred_check
          %p361 = pneg %p121
        $region54: #{tpu_custom_call.1} parent=39 // pred_check_branch
          %363 = sbr.rel (%p361) target = $region56
        $region55: #{tpu_custom_call.1} parent=39 // pred_region
          %364 = dma.done %s357, 2048
        $region56: #{tpu_custom_call.1} parent=39 // pred_fallthru
          _
        %s365 = sand.u32 %s32, 1
        %s366 = scalar_lea.sflag [#allocation9], %s365
        %s367 = sand.u32 %s134, 1
        %s368 = smul.addr %s367, 128
        %s369 = scalar_lea.vmem [#allocation10], %s368
        // Predicated region
        $region57: #{tpu_custom_call.1} parent=39 // pred_check
          %p370 = pneg %p147
        $region58: #{tpu_custom_call.1} parent=39 // pred_check_branch
          %372 = sbr.rel (%p370) target = $region60
        $region59: #{tpu_custom_call.1} parent=39 // pred_region
          %373 = dma.done %s366, 2048
        $region60: #{tpu_custom_call.1} parent=39 // pred_fallthru
          _
        %s374 = sand.u32 %s40, 1
        %s375 = scalar_lea.sflag [#allocation3], %s374
        %s376 = sand.u32 %s40, 1
        %s377 = smul.addr %s376, 256
        %s378 = scalar_lea.vmem [#allocation2], %s377
        %p379 = pneg %p53
        %p380 = pneg %p50
        %p381 = pneg %p74
        %p382 = pneg %p71
        %p383 = pneg %p95
        %p384 = pneg %p92
        %s385 = sand.u32 %s32, 1
        %s386 = scalar_lea.sflag [#allocation9], %s385
        %s387 = sand.u32 %s108, 1
        %s388 = smul.addr %s387, 128
        %s389 = scalar_lea.vmem [#allocation8], %s388
        %p390 = pneg %p121
        %p391 = pneg %p118
        %s392 = sand.u32 %s32, 1
        %s393 = scalar_lea.sflag [#allocation9], %s392
        %s394 = sand.u32 %s134, 1
        %s395 = smul.addr %s394, 128
        %s396 = scalar_lea.vmem [#allocation10], %s395
        %p397 = pneg %p147
        %p398 = pneg %p144
        %p399 = pneg %p173
        %p400 = pneg %p170
        %s401 = sand.u32 %s160, 1
        %s402 = scalar_lea.sflag [#allocation4], %s401
        %s403 = sand.u32 %s160, 1
        %s404 = smul.addr %s403, 128
        %s405 = scalar_lea.vmem [#allocation11], %s404
        %p406 = pneg %p199
        %p407 = pneg %p196
        %s408 = sand.u32 %s32, 1
        %s409 = scalar_lea.sflag [#allocation13], %s408
        %s410 = sand.u32 %s186, 1
        %s411 = smul.addr %s410, 128
        %s412 = scalar_lea.vmem [#allocation12], %s411
        %p413 = pneg %p225
        %p414 = pneg %p222
        %s415 = sand.u32 %s32, 1
        %s416 = scalar_lea.sflag [#allocation13], %s415
        %s417 = sand.u32 %s212, 1
        %s418 = smul.addr %s417, 128
        %s419 = scalar_lea.vmem [#allocation14], %s418
        %s420 = smul.u32 16, %s32
        %s421 = smul.u32 16, %s32
        %s422 = smul.u32 16, %s32
        %s423 = smul.u32 16, %s32
        %s424 = smul.u32 16, %s32
        %s425 = smul.u32 16, %s32
        %v426 = vld [vmem:[%s343] sm:$0xff]
        %v427 = vld [vmem:[%s343 + $0x8] sm:$0xff]
        %v428 = vld [vmem:[%s343 + $0x10] sm:$0xff]
        %v429 = vld [vmem:[%s343 + $0x18] sm:$0xff]
        %v430 = vld [vmem:[%s343 + $0x20] sm:$0xff]
        %v431 = vld [vmem:[%s343 + $0x28] sm:$0xff]
        %v432 = vld [vmem:[%s343 + $0x30] sm:$0xff]
        %v433 = vld [vmem:[%s343 + $0x38] sm:$0xff]
        %v434 = vld [vmem:[%s343 + $0x40] sm:$0xff]
        %v435 = vld [vmem:[%s343 + $0x48] sm:$0xff]
        %v436 = vld [vmem:[%s343 + $0x50] sm:$0xff]
        %v437 = vld [vmem:[%s343 + $0x58] sm:$0xff]
        %v438 = vld [vmem:[%s343 + $0x60] sm:$0xff]
        %v439 = vld [vmem:[%s343 + $0x68] sm:$0xff]
        %v440 = vld [vmem:[%s343 + $0x70] sm:$0xff]
        %v441 = vld [vmem:[%s343 + $0x78] sm:$0xff]
        %v442 = vld [vmem:[%s343 + $0x80] sm:$0xff]
        %v443 = vld [vmem:[%s343 + $0x88] sm:$0xff]
        %v444 = vld [vmem:[%s343 + $0x90] sm:$0xff]
        %v445 = vld [vmem:[%s343 + $0x98] sm:$0xff]
        %v446 = vld [vmem:[%s343 + $0xa0] sm:$0xff]
        %v447 = vld [vmem:[%s343 + $0xa8] sm:$0xff]
        %v448 = vld [vmem:[%s343 + $0xb0] sm:$0xff]
        %v449 = vld [vmem:[%s343 + $0xb8] sm:$0xff]
        %v450 = vld [vmem:[%s343 + $0xc0] sm:$0xff]
        %v451 = vld [vmem:[%s343 + $0xc8] sm:$0xff]
        %v452 = vld [vmem:[%s343 + $0xd0] sm:$0xff]
        %v453 = vld [vmem:[%s343 + $0xd8] sm:$0xff]
        %v454 = vld [vmem:[%s343 + $0xe0] sm:$0xff]
        %v455 = vld [vmem:[%s343 + $0xe8] sm:$0xff]
        %v456 = vld [vmem:[%s343 + $0xf0] sm:$0xff]
        %v457 = vld [vmem:[%s343 + $0xf8] sm:$0xff]
        %v458 = vld [vmem:[#allocation5] sm:$0x3]
        %v459 = vmul.f32 %v426, %v426
        %v460 = vmul.f32 %v427, %v427
        %v461 = vmul.f32 %v428, %v428
        %v462 = vmul.f32 %v429, %v429
        %v463 = vmul.f32 %v430, %v430
        %v464 = vmul.f32 %v431, %v431
        %v465 = vmul.f32 %v432, %v432
        %v466 = vmul.f32 %v433, %v433
        %v467 = vmul.f32 %v434, %v434
        %v468 = vmul.f32 %v435, %v435
        %v469 = vmul.f32 %v436, %v436
        %v470 = vmul.f32 %v437, %v437
        %v471 = vmul.f32 %v438, %v438
        %v472 = vmul.f32 %v439, %v439
        %v473 = vmul.f32 %v440, %v440
        %v474 = vmul.f32 %v441, %v441
        %v475 = vmul.f32 %v442, %v442
        %v476 = vmul.f32 %v443, %v443
        %v477 = vmul.f32 %v444, %v444
        %v478 = vmul.f32 %v445, %v445
        %v479 = vmul.f32 %v446, %v446
        %v480 = vmul.f32 %v447, %v447
        %v481 = vmul.f32 %v448, %v448
        %v482 = vmul.f32 %v449, %v449
        %v483 = vmul.f32 %v450, %v450
        %v484 = vmul.f32 %v451, %v451
        %v485 = vmul.f32 %v452, %v452
        %v486 = vmul.f32 %v453, %v453
        %v487 = vmul.f32 %v454, %v454
        %v488 = vmul.f32 %v455, %v455
        %v489 = vmul.f32 %v456, %v456
        %v490 = vmul.f32 %v457, %v457
        %v491 = vadd.f32 %v459, %v460
        %492 = vadd.xlane.f32.xlu0 %v491
        %v493 = vpop.xlane.xlu0 %492
        %v494 = vadd.f32 %v461, %v462
        %495 = vadd.xlane.f32.xlu0 %v494
        %v496 = vpop.xlane.xlu0 %495
        %v497 = vadd.f32 %v463, %v464
        %498 = vadd.xlane.f32.xlu0 %v497
        %v499 = vpop.xlane.xlu0 %498
        %v500 = vadd.f32 %v465, %v466
        %501 = vadd.xlane.f32.xlu0 %v500
        %v502 = vpop.xlane.xlu0 %501
        %v503 = vadd.f32 %v467, %v468
        %504 = vadd.xlane.f32.xlu0 %v503
        %v505 = vpop.xlane.xlu0 %504
        %v506 = vadd.f32 %v469, %v470
        %507 = vadd.xlane.f32.xlu0 %v506
        %v508 = vpop.xlane.xlu0 %507
        %v509 = vadd.f32 %v471, %v472
        %510 = vadd.xlane.f32.xlu0 %v509
        %v511 = vpop.xlane.xlu0 %510
        %v512 = vadd.f32 %v473, %v474
        %513 = vadd.xlane.f32.xlu0 %v512
        %v514 = vpop.xlane.xlu0 %513
        %v515 = vadd.f32 %v475, %v476
        %516 = vadd.xlane.f32.xlu0 %v515
        %v517 = vpop.xlane.xlu0 %516
        %v518 = vadd.f32 %v477, %v478
        %519 = vadd.xlane.f32.xlu0 %v518
        %v520 = vpop.xlane.xlu0 %519
        %v521 = vadd.f32 %v479, %v480
        %522 = vadd.xlane.f32.xlu0 %v521
        %v523 = vpop.xlane.xlu0 %522
        %v524 = vadd.f32 %v481, %v482
        %525 = vadd.xlane.f32.xlu0 %v524
        %v526 = vpop.xlane.xlu0 %525
        %v527 = vadd.f32 %v483, %v484
        %528 = vadd.xlane.f32.xlu0 %v527
        %v529 = vpop.xlane.xlu0 %528
        %v530 = vadd.f32 %v485, %v486
        %531 = vadd.xlane.f32.xlu0 %v530
        %v532 = vpop.xlane.xlu0 %531
        %v533 = vadd.f32 %v487, %v488
        %534 = vadd.xlane.f32.xlu0 %v533
        %v535 = vpop.xlane.xlu0 %534
        %v536 = vadd.f32 %v489, %v490
        %537 = vadd.xlane.f32.xlu0 %v536
        %v538 = vpop.xlane.xlu0 %537
        %v539 = vrcp.pop 256.0
        %v540 = vmul.f32 %v493, %v539
        %v541 = vmul.f32 %v496, %v539
        %v542 = vmul.f32 %v499, %v539
        %v543 = vmul.f32 %v502, %v539
        %v544 = vmul.f32 %v505, %v539
        %v545 = vmul.f32 %v508, %v539
        %v546 = vmul.f32 %v511, %v539
        %v547 = vmul.f32 %v514, %v539
        %v548 = vmul.f32 %v517, %v539
        %v549 = vmul.f32 %v520, %v539
        %v550 = vmul.f32 %v523, %v539
        %v551 = vmul.f32 %v526, %v539
        %v552 = vmul.f32 %v529, %v539
        %v553 = vmul.f32 %v532, %v539
        %v554 = vmul.f32 %v535, %v539
        %v555 = vmul.f32 %v538, %v539
        %v556 = vadd.f32 %v540, 1e-05
        %v557 = vadd.f32 %v541, 1e-05
        %v558 = vadd.f32 %v542, 1e-05
        %v559 = vadd.f32 %v543, 1e-05
        %v560 = vadd.f32 %v544, 1e-05
        %v561 = vadd.f32 %v545, 1e-05
        %v562 = vadd.f32 %v546, 1e-05
        %v563 = vadd.f32 %v547, 1e-05
        %v564 = vadd.f32 %v548, 1e-05
        %v565 = vadd.f32 %v549, 1e-05
        %v566 = vadd.f32 %v550, 1e-05
        %v567 = vadd.f32 %v551, 1e-05
        %v568 = vadd.f32 %v552, 1e-05
        %v569 = vadd.f32 %v553, 1e-05
        %v570 = vadd.f32 %v554, 1e-05
        %v571 = vadd.f32 %v555, 1e-05
        %v572 = vrsqrt.pop %v556
        %v573 = vrsqrt.pop %v557
        %v574 = vrsqrt.pop %v558
        %v575 = vrsqrt.pop %v559
        %v576 = vrsqrt.pop %v560
        %v577 = vrsqrt.pop %v561
        %v578 = vrsqrt.pop %v562
        %v579 = vrsqrt.pop %v563
        %v580 = vrsqrt.pop %v564
        %v581 = vrsqrt.pop %v565
        %v582 = vrsqrt.pop %v566
        %v583 = vrsqrt.pop %v567
        %v584 = vrsqrt.pop %v568
        %v585 = vrsqrt.pop %v569
        %v586 = vrsqrt.pop %v570
        %v587 = vrsqrt.pop %v571
        %v588 = vmul.f32 %v426, %v572
        %v589 = vmul.f32 %v427, %v572
        %v590 = vmul.f32 %v428, %v573
        %v591 = vmul.f32 %v429, %v573
        %v592 = vmul.f32 %v430, %v574
        %v593 = vmul.f32 %v431, %v574
        %v594 = vmul.f32 %v432, %v575
        %v595 = vmul.f32 %v433, %v575
        %v596 = vmul.f32 %v434, %v576
        %v597 = vmul.f32 %v435, %v576
        %v598 = vmul.f32 %v436, %v577
        %v599 = vmul.f32 %v437, %v577
        %v600 = vmul.f32 %v438, %v578
        %v601 = vmul.f32 %v439, %v578
        %v602 = vmul.f32 %v440, %v579
        %v603 = vmul.f32 %v441, %v579
        %v604 = vmul.f32 %v442, %v580
        %v605 = vmul.f32 %v443, %v580
        %v606 = vmul.f32 %v444, %v581
        %v607 = vmul.f32 %v445, %v581
        %v608 = vmul.f32 %v446, %v582
        %v609 = vmul.f32 %v447, %v582
        %v610 = vmul.f32 %v448, %v583
        %v611 = vmul.f32 %v449, %v583
        %v612 = vmul.f32 %v450, %v584
        %v613 = vmul.f32 %v451, %v584
        %v614 = vmul.f32 %v452, %v585
        %v615 = vmul.f32 %v453, %v585
        %v616 = vmul.f32 %v454, %v586
        %v617 = vmul.f32 %v455, %v586
        %v618 = vmul.f32 %v456, %v587
        %v619 = vmul.f32 %v457, %v587
        %v621 = vlaneseq
        %v622 = vshrl.u32 %v621, 7
        %v623 = vsub.s32 0, %v622
        %v624 = vrot.slane %v458, %v623
        %v625 = vlaneseq
        %v626 = vshrl.u32 %v625, 7
        %v627 = vsub.s32 1, %v626
        %v628 = vrot.slane %v458, %v627
        %v631 = vmul.f32 %v588, %v624
        %v632 = vmul.f32 %v589, %v628
        %v633 = vmul.f32 %v590, %v624
        %v634 = vmul.f32 %v591, %v628
        %v635 = vmul.f32 %v592, %v624
        %v636 = vmul.f32 %v593, %v628
        %v637 = vmul.f32 %v594, %v624
        %v638 = vmul.f32 %v595, %v628
        %v639 = vmul.f32 %v596, %v624
        %v640 = vmul.f32 %v597, %v628
        %v641 = vmul.f32 %v598, %v624
        %v642 = vmul.f32 %v599, %v628
        %v643 = vmul.f32 %v600, %v624
        %v644 = vmul.f32 %v601, %v628
        %v645 = vmul.f32 %v602, %v624
        %v646 = vmul.f32 %v603, %v628
        %v647 = vmul.f32 %v604, %v624
        %v648 = vmul.f32 %v605, %v628
        %v649 = vmul.f32 %v606, %v624
        %v650 = vmul.f32 %v607, %v628
        %v651 = vmul.f32 %v608, %v624
        %v652 = vmul.f32 %v609, %v628
        %v653 = vmul.f32 %v610, %v624
        %v654 = vmul.f32 %v611, %v628
        %v655 = vmul.f32 %v612, %v624
        %v656 = vmul.f32 %v613, %v628
        %v657 = vmul.f32 %v614, %v624
        %v658 = vmul.f32 %v615, %v628
        %v659 = vmul.f32 %v616, %v624
        %v660 = vmul.f32 %v617, %v628
        %v661 = vmul.f32 %v618, %v624
        %v662 = vmul.f32 %v619, %v628
        %v663 = vpack.c.bf16 %v633, %v631
        %v664 = vpack.c.bf16 %v634, %v632
        %v665 = vpack.c.bf16 %v637, %v635
        %v666 = vpack.c.bf16 %v638, %v636
        %v667 = vpack.c.bf16 %v641, %v639
        %v668 = vpack.c.bf16 %v642, %v640
        %v669 = vpack.c.bf16 %v645, %v643
        %v670 = vpack.c.bf16 %v646, %v644
        %v671 = vpack.c.bf16 %v649, %v647
        %v672 = vpack.c.bf16 %v650, %v648
        %v673 = vpack.c.bf16 %v653, %v651
        %v674 = vpack.c.bf16 %v654, %v652
        %v675 = vpack.c.bf16 %v657, %v655
        %v676 = vpack.c.bf16 %v658, %v656
        %v677 = vpack.c.bf16 %v661, %v659
        %v678 = vpack.c.bf16 %v662, %v660
        %v679 = vld [vmem:[#allocation7] sm:$0xff]
        %v680 = vld [vmem:[#allocation7 + $0x8] sm:$0xff]
        %v681 = vld [vmem:[#allocation7 + $0x10] sm:$0xff]
        %v682 = vld [vmem:[#allocation7 + $0x18] sm:$0xff]
        %v683 = vld [vmem:[#allocation7 + $0x20] sm:$0xff]
        %v684 = vld [vmem:[#allocation7 + $0x28] sm:$0xff]
        %v685 = vld [vmem:[#allocation7 + $0x30] sm:$0xff]
        %v686 = vld [vmem:[#allocation7 + $0x38] sm:$0xff]
        %v687 = vld [vmem:[#allocation7 + $0x40] sm:$0xff]
        %v688 = vld [vmem:[#allocation7 + $0x48] sm:$0xff]
        %v689 = vld [vmem:[#allocation7 + $0x50] sm:$0xff]
        %v690 = vld [vmem:[#allocation7 + $0x58] sm:$0xff]
        %v691 = vld [vmem:[#allocation7 + $0x60] sm:$0xff]
        %v692 = vld [vmem:[#allocation7 + $0x68] sm:$0xff]
        %v693 = vld [vmem:[#allocation7 + $0x70] sm:$0xff]
        %v694 = vld [vmem:[#allocation7 + $0x78] sm:$0xff]
        %v695 = vld [vmem:[#allocation7 + $0x80] sm:$0xff]
        %v696 = vld [vmem:[#allocation7 + $0x88] sm:$0xff]
        %v697 = vld [vmem:[#allocation7 + $0x90] sm:$0xff]
        %v698 = vld [vmem:[#allocation7 + $0x98] sm:$0xff]
        %v699 = vld [vmem:[#allocation7 + $0xa0] sm:$0xff]
        %v700 = vld [vmem:[#allocation7 + $0xa8] sm:$0xff]
        %v701 = vld [vmem:[#allocation7 + $0xb0] sm:$0xff]
        %v702 = vld [vmem:[#allocation7 + $0xb8] sm:$0xff]
        %v703 = vld [vmem:[#allocation7 + $0xc0] sm:$0xff]
        %v704 = vld [vmem:[#allocation7 + $0xc8] sm:$0xff]
        %v705 = vld [vmem:[#allocation7 + $0xd0] sm:$0xff]
        %v706 = vld [vmem:[#allocation7 + $0xd8] sm:$0xff]
        %v707 = vld [vmem:[#allocation7 + $0xe0] sm:$0xff]
        %v708 = vld [vmem:[#allocation7 + $0xe8] sm:$0xff]
        %v709 = vld [vmem:[#allocation7 + $0xf0] sm:$0xff]
        %v710 = vld [vmem:[#allocation7 + $0xf8] sm:$0xff]
        %v711 = vld [vmem:[#allocation7 + $0x100] sm:$0xff]
        %v712 = vld [vmem:[#allocation7 + $0x108] sm:$0xff]
        %v713 = vld [vmem:[#allocation7 + $0x110] sm:$0xff]
        %v714 = vld [vmem:[#allocation7 + $0x118] sm:$0xff]
        %v715 = vld [vmem:[#allocation7 + $0x120] sm:$0xff]
        %v716 = vld [vmem:[#allocation7 + $0x128] sm:$0xff]
        %v717 = vld [vmem:[#allocation7 + $0x130] sm:$0xff]
        %v718 = vld [vmem:[#allocation7 + $0x138] sm:$0xff]
        %v719 = vld [vmem:[#allocation7 + $0x140] sm:$0xff]
        %v720 = vld [vmem:[#allocation7 + $0x148] sm:$0xff]
        %v721 = vld [vmem:[#allocation7 + $0x150] sm:$0xff]
        %v722 = vld [vmem:[#allocation7 + $0x158] sm:$0xff]
        %v723 = vld [vmem:[#allocation7 + $0x160] sm:$0xff]
        %v724 = vld [vmem:[#allocation7 + $0x168] sm:$0xff]
        %v725 = vld [vmem:[#allocation7 + $0x170] sm:$0xff]
        %v726 = vld [vmem:[#allocation7 + $0x178] sm:$0xff]
        %v727 = vld [vmem:[#allocation7 + $0x180] sm:$0xff]
        %v728 = vld [vmem:[#allocation7 + $0x188] sm:$0xff]
        %v729 = vld [vmem:[#allocation7 + $0x190] sm:$0xff]
        %v730 = vld [vmem:[#allocation7 + $0x198] sm:$0xff]
        %v731 = vld [vmem:[#allocation7 + $0x1a0] sm:$0xff]
        %v732 = vld [vmem:[#allocation7 + $0x1a8] sm:$0xff]
        %v733 = vld [vmem:[#allocation7 + $0x1b0] sm:$0xff]
        %v734 = vld [vmem:[#allocation7 + $0x1b8] sm:$0xff]
        %v735 = vld [vmem:[#allocation7 + $0x1c0] sm:$0xff]
        %v736 = vld [vmem:[#allocation7 + $0x1c8] sm:$0xff]
        %v737 = vld [vmem:[#allocation7 + $0x1d0] sm:$0xff]
        %v738 = vld [vmem:[#allocation7 + $0x1d8] sm:$0xff]
        %v739 = vld [vmem:[#allocation7 + $0x1e0] sm:$0xff]
        %v740 = vld [vmem:[#allocation7 + $0x1e8] sm:$0xff]
        %v741 = vld [vmem:[#allocation7 + $0x1f0] sm:$0xff]
        %v742 = vld [vmem:[#allocation7 + $0x1f8] sm:$0xff]
        %v743 = vld [vmem:[#allocation7 + $0x200] sm:$0xff]
        %v744 = vld [vmem:[#allocation7 + $0x208] sm:$0xff]
        %v745 = vld [vmem:[#allocation7 + $0x210] sm:$0xff]
        %v746 = vld [vmem:[#allocation7 + $0x218] sm:$0xff]
        %v747 = vld [vmem:[#allocation7 + $0x220] sm:$0xff]
        %v748 = vld [vmem:[#allocation7 + $0x228] sm:$0xff]
        %v749 = vld [vmem:[#allocation7 + $0x230] sm:$0xff]
        %v750 = vld [vmem:[#allocation7 + $0x238] sm:$0xff]
        %v751 = vld [vmem:[#allocation7 + $0x240] sm:$0xff]
        %v752 = vld [vmem:[#allocation7 + $0x248] sm:$0xff]
        %v753 = vld [vmem:[#allocation7 + $0x250] sm:$0xff]
        %v754 = vld [vmem:[#allocation7 + $0x258] sm:$0xff]
        %v755 = vld [vmem:[#allocation7 + $0x260] sm:$0xff]
        %v756 = vld [vmem:[#allocation7 + $0x268] sm:$0xff]
        %v757 = vld [vmem:[#allocation7 + $0x270] sm:$0xff]
        %v758 = vld [vmem:[#allocation7 + $0x278] sm:$0xff]
        %v759 = vld [vmem:[#allocation7 + $0x280] sm:$0xff]
        %v760 = vld [vmem:[#allocation7 + $0x288] sm:$0xff]
        %v761 = vld [vmem:[#allocation7 + $0x290] sm:$0xff]
        %v762 = vld [vmem:[#allocation7 + $0x298] sm:$0xff]
        %v763 = vld [vmem:[#allocation7 + $0x2a0] sm:$0xff]
        %v764 = vld [vmem:[#allocation7 + $0x2a8] sm:$0xff]
        %v765 = vld [vmem:[#allocation7 + $0x2b0] sm:$0xff]
        %v766 = vld [vmem:[#allocation7 + $0x2b8] sm:$0xff]
        %v767 = vld [vmem:[#allocation7 + $0x2c0] sm:$0xff]
        %v768 = vld [vmem:[#allocation7 + $0x2c8] sm:$0xff]
        %v769 = vld [vmem:[#allocation7 + $0x2d0] sm:$0xff]
        %v770 = vld [vmem:[#allocation7 + $0x2d8] sm:$0xff]
        %v771 = vld [vmem:[#allocation7 + $0x2e0] sm:$0xff]
        %v772 = vld [vmem:[#allocation7 + $0x2e8] sm:$0xff]
        %v773 = vld [vmem:[#allocation7 + $0x2f0] sm:$0xff]
        %v774 = vld [vmem:[#allocation7 + $0x2f8] sm:$0xff]
        %v871 = vunpack.c.l.b16 %v679
        %v872 = vunpack.c.h.b16 %v679
        %v873 = vunpack.c.l.b16 %v680
        %v874 = vunpack.c.h.b16 %v680
        %v875 = vunpack.c.l.b16 %v681
        %v876 = vunpack.c.h.b16 %v681
        %v877 = vunpack.c.l.b16 %v682
        %v878 = vunpack.c.h.b16 %v682
        %v879 = vunpack.c.l.b16 %v683
        %v880 = vunpack.c.h.b16 %v683
        %v881 = vunpack.c.l.b16 %v684
        %v882 = vunpack.c.h.b16 %v684
        %v883 = vunpack.c.l.b16 %v685
        %v884 = vunpack.c.h.b16 %v685
        %v885 = vunpack.c.l.b16 %v686
        %v886 = vunpack.c.h.b16 %v686
        %v887 = vunpack.c.l.b16 %v687
        %v888 = vunpack.c.h.b16 %v687
        %v889 = vunpack.c.l.b16 %v688
        %v890 = vunpack.c.h.b16 %v688
        %v891 = vunpack.c.l.b16 %v689
        %v892 = vunpack.c.h.b16 %v689
        %v893 = vunpack.c.l.b16 %v690
        %v894 = vunpack.c.h.b16 %v690
        %v895 = vunpack.c.l.b16 %v691
        %v896 = vunpack.c.h.b16 %v691
        %v897 = vunpack.c.l.b16 %v692
        %v898 = vunpack.c.h.b16 %v692
        %v899 = vunpack.c.l.b16 %v693
        %v900 = vunpack.c.h.b16 %v693
        %v901 = vunpack.c.l.b16 %v694
        %v902 = vunpack.c.h.b16 %v694
        %v903 = vunpack.c.l.b16 %v695
        %v904 = vunpack.c.h.b16 %v695
        %v905 = vunpack.c.l.b16 %v696
        %v906 = vunpack.c.h.b16 %v696
        %v907 = vunpack.c.l.b16 %v697
        %v908 = vunpack.c.h.b16 %v697
        %v909 = vunpack.c.l.b16 %v698
        %v910 = vunpack.c.h.b16 %v698
        %v911 = vunpack.c.l.b16 %v699
        %v912 = vunpack.c.h.b16 %v699
        %v913 = vunpack.c.l.b16 %v700
        %v914 = vunpack.c.h.b16 %v700
        %v915 = vunpack.c.l.b16 %v701
        %v916 = vunpack.c.h.b16 %v701
        %v917 = vunpack.c.l.b16 %v702
        %v918 = vunpack.c.h.b16 %v702
        %v919 = vunpack.c.l.b16 %v703
        %v920 = vunpack.c.h.b16 %v703
        %v921 = vunpack.c.l.b16 %v704
        %v922 = vunpack.c.h.b16 %v704
        %v923 = vunpack.c.l.b16 %v705
        %v924 = vunpack.c.h.b16 %v705
        %v925 = vunpack.c.l.b16 %v706
        %v926 = vunpack.c.h.b16 %v706
        %v927 = vunpack.c.l.b16 %v707
        %v928 = vunpack.c.h.b16 %v707
        %v929 = vunpack.c.l.b16 %v708
        %v930 = vunpack.c.h.b16 %v708
        %v931 = vunpack.c.l.b16 %v709
        %v932 = vunpack.c.h.b16 %v709
        %v933 = vunpack.c.l.b16 %v710
        %v934 = vunpack.c.h.b16 %v710
        %v935 = vunpack.c.l.b16 %v711
        %v936 = vunpack.c.h.b16 %v711
        %v937 = vunpack.c.l.b16 %v712
        %v938 = vunpack.c.h.b16 %v712
        %v939 = vunpack.c.l.b16 %v713
        %v940 = vunpack.c.h.b16 %v713
        %v941 = vunpack.c.l.b16 %v714
        %v942 = vunpack.c.h.b16 %v714
        %v943 = vunpack.c.l.b16 %v715
        %v944 = vunpack.c.h.b16 %v715
        %v945 = vunpack.c.l.b16 %v716
        %v946 = vunpack.c.h.b16 %v716
        %v947 = vunpack.c.l.b16 %v717
        %v948 = vunpack.c.h.b16 %v717
        %v949 = vunpack.c.l.b16 %v718
        %v950 = vunpack.c.h.b16 %v718
        %v951 = vunpack.c.l.b16 %v719
        %v952 = vunpack.c.h.b16 %v719
        %v953 = vunpack.c.l.b16 %v720
        %v954 = vunpack.c.h.b16 %v720
        %v955 = vunpack.c.l.b16 %v721
        %v956 = vunpack.c.h.b16 %v721
        %v957 = vunpack.c.l.b16 %v722
        %v958 = vunpack.c.h.b16 %v722
        %v959 = vunpack.c.l.b16 %v723
        %v960 = vunpack.c.h.b16 %v723
        %v961 = vunpack.c.l.b16 %v724
        %v962 = vunpack.c.h.b16 %v724
        %v963 = vunpack.c.l.b16 %v725
        %v964 = vunpack.c.h.b16 %v725
        %v965 = vunpack.c.l.b16 %v726
        %v966 = vunpack.c.h.b16 %v726
        %v967 = vunpack.c.l.b16 %v727
        %v968 = vunpack.c.h.b16 %v727
        %v969 = vunpack.c.l.b16 %v728
        %v970 = vunpack.c.h.b16 %v728
        %v971 = vunpack.c.l.b16 %v729
        %v972 = vunpack.c.h.b16 %v729
        %v973 = vunpack.c.l.b16 %v730
        %v974 = vunpack.c.h.b16 %v730
        %v975 = vunpack.c.l.b16 %v731
        %v976 = vunpack.c.h.b16 %v731
        %v977 = vunpack.c.l.b16 %v732
        %v978 = vunpack.c.h.b16 %v732
        %v979 = vunpack.c.l.b16 %v733
        %v980 = vunpack.c.h.b16 %v733
        %v981 = vunpack.c.l.b16 %v734
        %v982 = vunpack.c.h.b16 %v734
        %v983 = vunpack.c.l.b16 %v735
        %v984 = vunpack.c.h.b16 %v735
        %v985 = vunpack.c.l.b16 %v736
        %v986 = vunpack.c.h.b16 %v736
        %v987 = vunpack.c.l.b16 %v737
        %v988 = vunpack.c.h.b16 %v737
        %v989 = vunpack.c.l.b16 %v738
        %v990 = vunpack.c.h.b16 %v738
        %v991 = vunpack.c.l.b16 %v739
        %v992 = vunpack.c.h.b16 %v739
        %v993 = vunpack.c.l.b16 %v740
        %v994 = vunpack.c.h.b16 %v740
        %v995 = vunpack.c.l.b16 %v741
        %v996 = vunpack.c.h.b16 %v741
        %v997 = vunpack.c.l.b16 %v742
        %v998 = vunpack.c.h.b16 %v742
        %v999 = vunpack.c.l.b16 %v743
        %v1000 = vunpack.c.h.b16 %v743
        %v1001 = vunpack.c.l.b16 %v744
        %v1002 = vunpack.c.h.b16 %v744
        %v1003 = vunpack.c.l.b16 %v745
        %v1004 = vunpack.c.h.b16 %v745
        %v1005 = vunpack.c.l.b16 %v746
        %v1006 = vunpack.c.h.b16 %v746
        %v1007 = vunpack.c.l.b16 %v747
        %v1008 = vunpack.c.h.b16 %v747
        %v1009 = vunpack.c.l.b16 %v748
        %v1010 = vunpack.c.h.b16 %v748
        %v1011 = vunpack.c.l.b16 %v749
        %v1012 = vunpack.c.h.b16 %v749
        %v1013 = vunpack.c.l.b16 %v750
        %v1014 = vunpack.c.h.b16 %v750
        %v1015 = vunpack.c.l.b16 %v751
        %v1016 = vunpack.c.h.b16 %v751
        %v1017 = vunpack.c.l.b16 %v752
        %v1018 = vunpack.c.h.b16 %v752
        %v1019 = vunpack.c.l.b16 %v753
        %v1020 = vunpack.c.h.b16 %v753
        %v1021 = vunpack.c.l.b16 %v754
        %v1022 = vunpack.c.h.b16 %v754
        %v1023 = vunpack.c.l.b16 %v755
        %v1024 = vunpack.c.h.b16 %v755
        %v1025 = vunpack.c.l.b16 %v756
        %v1026 = vunpack.c.h.b16 %v756
        %v1027 = vunpack.c.l.b16 %v757
        %v1028 = vunpack.c.h.b16 %v757
        %v1029 = vunpack.c.l.b16 %v758
        %v1030 = vunpack.c.h.b16 %v758
        %v1031 = vunpack.c.l.b16 %v759
        %v1032 = vunpack.c.h.b16 %v759
        %v1033 = vunpack.c.l.b16 %v760
        %v1034 = vunpack.c.h.b16 %v760
        %v1035 = vunpack.c.l.b16 %v761
        %v1036 = vunpack.c.h.b16 %v761
        %v1037 = vunpack.c.l.b16 %v762
        %v1038 = vunpack.c.h.b16 %v762
        %v1039 = vunpack.c.l.b16 %v763
        %v1040 = vunpack.c.h.b16 %v763
        %v1041 = vunpack.c.l.b16 %v764
        %v1042 = vunpack.c.h.b16 %v764
        %v1043 = vunpack.c.l.b16 %v765
        %v1044 = vunpack.c.h.b16 %v765
        %v1045 = vunpack.c.l.b16 %v766
        %v1046 = vunpack.c.h.b16 %v766
        %v1047 = vunpack.c.l.b16 %v767
        %v1048 = vunpack.c.h.b16 %v767
        %v1049 = vunpack.c.l.b16 %v768
        %v1050 = vunpack.c.h.b16 %v768
        %v1051 = vunpack.c.l.b16 %v769
        %v1052 = vunpack.c.h.b16 %v769
        %v1053 = vunpack.c.l.b16 %v770
        %v1054 = vunpack.c.h.b16 %v770
        %v1055 = vunpack.c.l.b16 %v771
        %v1056 = vunpack.c.h.b16 %v771
        %v1057 = vunpack.c.l.b16 %v772
        %v1058 = vunpack.c.h.b16 %v772
        %v1059 = vunpack.c.l.b16 %v773
        %v1060 = vunpack.c.h.b16 %v773
        %v1061 = vunpack.c.l.b16 %v774
        %v1062 = vunpack.c.h.b16 %v774
        %v1063 = vpack.c.b16 %v877, %v871
        %v1064 = vpack.c.b16 %v878, %v872
        %v1065 = vpack.c.b16 %v879, %v873
        %v1066 = vpack.c.b16 %v880, %v874
        %v1067 = vpack.c.b16 %v881, %v875
        %v1068 = vpack.c.b16 %v882, %v876
        %v1069 = vpack.c.b16 %v889, %v883
        %v1070 = vpack.c.b16 %v890, %v884
        %v1071 = vpack.c.b16 %v891, %v885
        %v1072 = vpack.c.b16 %v892, %v886
        %v1073 = vpack.c.b16 %v893, %v887
        %v1074 = vpack.c.b16 %v894, %v888
        %v1075 = vpack.c.b16 %v901, %v895
        %v1076 = vpack.c.b16 %v902, %v896
        %v1077 = vpack.c.b16 %v903, %v897
        %v1078 = vpack.c.b16 %v904, %v898
        %v1079 = vpack.c.b16 %v905, %v899
        %v1080 = vpack.c.b16 %v906, %v900
        %v1081 = vpack.c.b16 %v913, %v907
        %v1082 = vpack.c.b16 %v914, %v908
        %v1083 = vpack.c.b16 %v915, %v909
        %v1084 = vpack.c.b16 %v916, %v910
        %v1085 = vpack.c.b16 %v917, %v911
        %v1086 = vpack.c.b16 %v918, %v912
        %v1087 = vpack.c.b16 %v925, %v919
        %v1088 = vpack.c.b16 %v926, %v920
        %v1089 = vpack.c.b16 %v927, %v921
        %v1090 = vpack.c.b16 %v928, %v922
        %v1091 = vpack.c.b16 %v929, %v923
        %v1092 = vpack.c.b16 %v930, %v924
        %v1093 = vpack.c.b16 %v937, %v931
        %v1094 = vpack.c.b16 %v938, %v932
        %v1095 = vpack.c.b16 %v939, %v933
        %v1096 = vpack.c.b16 %v940, %v934
        %v1097 = vpack.c.b16 %v941, %v935
        %v1098 = vpack.c.b16 %v942, %v936
        %v1099 = vpack.c.b16 %v949, %v943
        %v1100 = vpack.c.b16 %v950, %v944
        %v1101 = vpack.c.b16 %v951, %v945
        %v1102 = vpack.c.b16 %v952, %v946
        %v1103 = vpack.c.b16 %v953, %v947
        %v1104 = vpack.c.b16 %v954, %v948
        %v1105 = vpack.c.b16 %v961, %v955
        %v1106 = vpack.c.b16 %v962, %v956
        %v1107 = vpack.c.b16 %v963, %v957
        %v1108 = vpack.c.b16 %v964, %v958
        %v1109 = vpack.c.b16 %v965, %v959
        %v1110 = vpack.c.b16 %v966, %v960
        %v1111 = vpack.c.b16 %v973, %v967
        %v1112 = vpack.c.b16 %v974, %v968
        %v1113 = vpack.c.b16 %v975, %v969
        %v1114 = vpack.c.b16 %v976, %v970
        %v1115 = vpack.c.b16 %v977, %v971
        %v1116 = vpack.c.b16 %v978, %v972
        %v1117 = vpack.c.b16 %v985, %v979
        %v1118 = vpack.c.b16 %v986, %v980
        %v1119 = vpack.c.b16 %v987, %v981
        %v1120 = vpack.c.b16 %v988, %v982
        %v1121 = vpack.c.b16 %v989, %v983
        %v1122 = vpack.c.b16 %v990, %v984
        %v1123 = vpack.c.b16 %v997, %v991
        %v1124 = vpack.c.b16 %v998, %v992
        %v1125 = vpack.c.b16 %v999, %v993
        %v1126 = vpack.c.b16 %v1000, %v994
        %v1127 = vpack.c.b16 %v1001, %v995
        %v1128 = vpack.c.b16 %v1002, %v996
        %v1129 = vpack.c.b16 %v1009, %v1003
        %v1130 = vpack.c.b16 %v1010, %v1004
        %v1131 = vpack.c.b16 %v1011, %v1005
        %v1132 = vpack.c.b16 %v1012, %v1006
        %v1133 = vpack.c.b16 %v1013, %v1007
        %v1134 = vpack.c.b16 %v1014, %v1008
        %v1135 = vpack.c.b16 %v1021, %v1015
        %v1136 = vpack.c.b16 %v1022, %v1016
        %v1137 = vpack.c.b16 %v1023, %v1017
        %v1138 = vpack.c.b16 %v1024, %v1018
        %v1139 = vpack.c.b16 %v1025, %v1019
        %v1140 = vpack.c.b16 %v1026, %v1020
        %v1141 = vpack.c.b16 %v1033, %v1027
        %v1142 = vpack.c.b16 %v1034, %v1028
        %v1143 = vpack.c.b16 %v1035, %v1029
        %v1144 = vpack.c.b16 %v1036, %v1030
        %v1145 = vpack.c.b16 %v1037, %v1031
        %v1146 = vpack.c.b16 %v1038, %v1032
        %v1147 = vpack.c.b16 %v1045, %v1039
        %v1148 = vpack.c.b16 %v1046, %v1040
        %v1149 = vpack.c.b16 %v1047, %v1041
        %v1150 = vpack.c.b16 %v1048, %v1042
        %v1151 = vpack.c.b16 %v1049, %v1043
        %v1152 = vpack.c.b16 %v1050, %v1044
        %v1153 = vpack.c.b16 %v1057, %v1051
        %v1154 = vpack.c.b16 %v1058, %v1052
        %v1155 = vpack.c.b16 %v1059, %v1053
        %v1156 = vpack.c.b16 %v1060, %v1054
        %v1157 = vpack.c.b16 %v1061, %v1055
        %v1158 = vpack.c.b16 %v1062, %v1056
        %1255 = vmatprep.subr.bf16.mxu0 %v1064
        %1256 = vmatpush1.bf16.msra.mxu0 %v1063
        %1257 = vmatprep.subr.bf16.mxu0 %v1070
        %1258 = vmatpush1.bf16.msra.mxu0 %v1069
        %1259 = vmatprep.subr.bf16.mxu0 %v1076
        %1260 = vmatpush1.bf16.msra.mxu0 %v1075
        %1261 = vmatprep.subr.bf16.mxu0 %v1082
        %1262 = vmatpush1.bf16.msra.mxu0 %v1081
        %1263 = vmatprep.subr.bf16.mxu0 %v1088
        %1264 = vmatpush1.bf16.msra.mxu0 %v1087
        %1265 = vmatprep.subr.bf16.mxu0 %v1094
        %1266 = vmatpush1.bf16.msra.mxu0 %v1093
        %1267 = vmatprep.subr.bf16.mxu0 %v1100
        %1268 = vmatpush1.bf16.msra.mxu0 %v1099
        %1269 = vmatprep.subr.bf16.mxu0 %v1106
        %1270 = vmatpush1.bf16.msra.mxu0 %v1105
        %1271 = vmatprep.subr.bf16.mxu0 %v1112
        %1272 = vmatpush1.bf16.msra.mxu0 %v1111
        %1273 = vmatprep.subr.bf16.mxu0 %v1118
        %1274 = vmatpush1.bf16.msra.mxu0 %v1117
        %1275 = vmatprep.subr.bf16.mxu0 %v1124
        %1276 = vmatpush1.bf16.msra.mxu0 %v1123
        %1277 = vmatprep.subr.bf16.mxu0 %v1130
        %1278 = vmatpush1.bf16.msra.mxu0 %v1129
        %1279 = vmatprep.subr.bf16.mxu0 %v1136
        %1280 = vmatpush1.bf16.msra.mxu0 %v1135
        %1281 = vmatprep.subr.bf16.mxu0 %v1142
        %1282 = vmatpush1.bf16.msra.mxu0 %v1141
        %1283 = vmatprep.subr.bf16.mxu0 %v1148
        %1284 = vmatpush1.bf16.msra.mxu0 %v1147
        %1285 = vmatprep.subr.bf16.mxu0 %v1154
        %1286 = vmatpush1.bf16.msra.mxu0 %v1153
        %1287 = vmatprep.mubr.bf16.mxu0 %v664
        %1288 = vmatmul.mubr.bf16.gmra.mrb[0].mxu0 %v663
        %v1289 = vpop.f32.mrb[0].mxu0
        %v1290 = vadd.f32 0.0, %v1289
        %v1291 = vpop.f32.mrb[0].mxu0
        %v1292 = vadd.f32 0.0, %v1291
        %v1293 = vpop.f32.mrb[0].mxu0
        %v1294 = vadd.f32 0.0, %v1293
        %v1295 = vpop.f32.mrb[0].mxu0
        %v1296 = vadd.f32 0.0, %v1295
        %1297 = vmatprep.mubr.bf16.mxu0 %v666
        %1298 = vmatmul.mubr.bf16.gmra.mrb[0].mxu0 %v665
        %v1299 = vpop.f32.mrb[0].mxu0
        %v1300 = vadd.f32 0.0, %v1299
        %v1301 = vpop.f32.mrb[0].mxu0
        %v1302 = vadd.f32 0.0, %v1301
        %v1303 = vpop.f32.mrb[0].mxu0
        %v1304 = vadd.f32 0.0, %v1303
        %v1305 = vpop.f32.mrb[0].mxu0
        %v1306 = vadd.f32 0.0, %v1305
        %1307 = vmatprep.mubr.bf16.mxu0 %v668
        %1308 = vmatmul.mubr.bf16.gmra.mrb[0].mxu0 %v667
        %v1309 = vpop.f32.mrb[0].mxu0
        %v1310 = vadd.f32 0.0, %v1309
        %v1311 = vpop.f32.mrb[0].mxu0
        %v1312 = vadd.f32 0.0, %v1311
        %v1313 = vpop.f32.mrb[0].mxu0
        %v1314 = vadd.f32 0.0, %v1313
        %v1315 = vpop.f32.mrb[0].mxu0
        %v1316 = vadd.f32 0.0, %v1315
        %1317 = vmatprep.mubr.bf16.mxu0 %v670
        %1318 = vmatmul.mubr.bf16.gmra.mrb[0].mxu0 %v669
        %v1319 = vpop.f32.mrb[0].mxu0
        %v1320 = vadd.f32 0.0, %v1319
        %v1321 = vpop.f32.mrb[0].mxu0
        %v1322 = vadd.f32 0.0, %v1321
        %v1323 = vpop.f32.mrb[0].mxu0
        %v1324 = vadd.f32 0.0, %v1323
        %v1325 = vpop.f32.mrb[0].mxu0
        %v1326 = vadd.f32 0.0, %v1325
        %1327 = vmatprep.mubr.bf16.mxu0 %v672
        %1328 = vmatmul.mubr.bf16.gmra.mrb[0].mxu0 %v671
        %v1329 = vpop.f32.mrb[0].mxu0
        %v1330 = vadd.f32 0.0, %v1329
        %v1331 = vpop.f32.mrb[0].mxu0
        %v1332 = vadd.f32 0.0, %v1331
        %v1333 = vpop.f32.mrb[0].mxu0
        %v1334 = vadd.f32 0.0, %v1333
        %v1335 = vpop.f32.mrb[0].mxu0
        %v1336 = vadd.f32 0.0, %v1335
        %1337 = vmatprep.mubr.bf16.mxu0 %v674
        %1338 = vmatmul.mubr.bf16.gmra.mrb[0].mxu0 %v673
        %v1339 = vpop.f32.mrb[0].mxu0
        %v1340 = vadd.f32 0.0, %v1339
        %v1341 = vpop.f32.mrb[0].mxu0
        %v1342 = vadd.f32 0.0, %v1341
        %v1343 = vpop.f32.mrb[0].mxu0
        %v1344 = vadd.f32 0.0, %v1343
        %v1345 = vpop.f32.mrb[0].mxu0
        %v1346 = vadd.f32 0.0, %v1345
        %1347 = vmatprep.mubr.bf16.mxu0 %v676
        %1348 = vmatmul.mubr.bf16.gmra.mrb[0].mxu0 %v675
        %v1349 = vpop.f32.mrb[0].mxu0
        %v1350 = vadd.f32 0.0, %v1349
        %v1351 = vpop.f32.mrb[0].mxu0
        %v1352 = vadd.f32 0.0, %v1351
        %v1353 = vpop.f32.mrb[0].mxu0
        %v1354 = vadd.f32 0.0, %v1353
        %v1355 = vpop.f32.mrb[0].mxu0
        %v1356 = vadd.f32 0.0, %v1355
        %1357 = vmatprep.mubr.bf16.mxu0 %v678
        %1358 = vmatmul.mubr.bf16.gmra.mrb[0].mxu0 %v677
        %v1359 = vpop.f32.mrb[0].mxu0
        %v1360 = vadd.f32 0.0, %v1359
        %v1361 = vpop.f32.mrb[0].mxu0
        %v1362 = vadd.f32 0.0, %v1361
        %v1363 = vpop.f32.mrb[0].mxu0
        %v1364 = vadd.f32 0.0, %v1363
        %v1365 = vpop.f32.mrb[0].mxu0
        %v1366 = vadd.f32 0.0, %v1365
        %1367 = vdwg.mxu0
        %1368 = vmatprep.subr.bf16.mxu0 %v1066
        %1369 = vmatpush1.bf16.msra.mxu0 %v1065
        %1370 = vmatprep.subr.bf16.mxu0 %v1072
        %1371 = vmatpush1.bf16.msra.mxu0 %v1071
        %1372 = vmatprep.subr.bf16.mxu0 %v1078
        %1373 = vmatpush1.bf16.msra.mxu0 %v1077
        %1374 = vmatprep.subr.bf16.mxu0 %v1084
        %1375 = vmatpush1.bf16.msra.mxu0 %v1083
        %1376 = vmatprep.subr.bf16.mxu0 %v1090
        %1377 = vmatpush1.bf16.msra.mxu0 %v1089
        %1378 = vmatprep.subr.bf16.mxu0 %v1096
        %1379 = vmatpush1.bf16.msra.mxu0 %v1095
        %1380 = vmatprep.subr.bf16.mxu0 %v1102
        %1381 = vmatpush1.bf16.msra.mxu0 %v1101
        %1382 = vmatprep.subr.bf16.mxu0 %v1108
        %1383 = vmatpush1.bf16.msra.mxu0 %v1107
        %1384 = vmatprep.subr.bf16.mxu0 %v1114
        %1385 = vmatpush1.bf16.msra.mxu0 %v1113
        %1386 = vmatprep.subr.bf16.mxu0 %v1120
        %1387 = vmatpush1.bf16.msra.mxu0 %v1119
        %1388 = vmatprep.subr.bf16.mxu0 %v1126
        %1389 = vmatpush1.bf16.msra.mxu0 %v1125
        %1390 = vmatprep.subr.bf16.mxu0 %v1132
        %1391 = vmatpush1.bf16.msra.mxu0 %v1131
        %1392 = vmatprep.subr.bf16.mxu0 %v1138
        %1393 = vmatpush1.bf16.msra.mxu0 %v1137
        %1394 = vmatprep.subr.bf16.mxu0 %v1144
        %1395 = vmatpush1.bf16.msra.mxu0 %v1143
        %1396 = vmatprep.subr.bf16.mxu0 %v1150
        %1397 = vmatpush1.bf16.msra.mxu0 %v1149
        %1398 = vmatprep.subr.bf16.mxu0 %v1156
        %1399 = vmatpush1.bf16.msra.mxu0 %v1155
        %1400 = vmatprep.mubr.bf16.mxu0 %v664
        %1401 = vmatmul.mubr.bf16.gmra.mrb[0].mxu0 %v663
        %v1402 = vpop.f32.mrb[0].mxu0
        %v1403 = vadd.f32 0.0, %v1402
        %v1404 = vpop.f32.mrb[0].mxu0
        %v1405 = vadd.f32 0.0, %v1404
        %v1406 = vpop.f32.mrb[0].mxu0
        %v1407 = vadd.f32 0.0, %v1406
        %v1408 = vpop.f32.mrb[0].mxu0
        %v1409 = vadd.f32 0.0, %v1408
        %1410 = vmatprep.mubr.bf16.mxu0 %v666
        %1411 = vmatmul.mubr.bf16.gmra.mrb[0].mxu0 %v665
        %v1412 = vpop.f32.mrb[0].mxu0
        %v1413 = vadd.f32 0.0, %v1412
        %v1414 = vpop.f32.mrb[0].mxu0
        %v1415 = vadd.f32 0.0, %v1414
        %v1416 = vpop.f32.mrb[0].mxu0
        %v1417 = vadd.f32 0.0, %v1416
        %v1418 = vpop.f32.mrb[0].mxu0
        %v1419 = vadd.f32 0.0, %v1418
        %1420 = vmatprep.mubr.bf16.mxu0 %v668
        %1421 = vmatmul.mubr.bf16.gmra.mrb[0].mxu0 %v667
        %v1422 = vpop.f32.mrb[0].mxu0
        %v1423 = vadd.f32 0.0, %v1422
        %v1424 = vpop.f32.mrb[0].mxu0
        %v1425 = vadd.f32 0.0, %v1424
        %v1426 = vpop.f32.mrb[0].mxu0
        %v1427 = vadd.f32 0.0, %v1426
        %v1428 = vpop.f32.mrb[0].mxu0
        %v1429 = vadd.f32 0.0, %v1428
        %1430 = vmatprep.mubr.bf16.mxu0 %v670
        %1431 = vmatmul.mubr.bf16.gmra.mrb[0].mxu0 %v669
        %v1432 = vpop.f32.mrb[0].mxu0
        %v1433 = vadd.f32 0.0, %v1432
        %v1434 = vpop.f32.mrb[0].mxu0
        %v1435 = vadd.f32 0.0, %v1434
        %v1436 = vpop.f32.mrb[0].mxu0
        %v1437 = vadd.f32 0.0, %v1436
        %v1438 = vpop.f32.mrb[0].mxu0
        %v1439 = vadd.f32 0.0, %v1438
        %1440 = vmatprep.mubr.bf16.mxu0 %v672
        %1441 = vmatmul.mubr.bf16.gmra.mrb[0].mxu0 %v671
        %v1442 = vpop.f32.mrb[0].mxu0
        %v1443 = vadd.f32 0.0, %v1442
        %v1444 = vpop.f32.mrb[0].mxu0
        %v1445 = vadd.f32 0.0, %v1444
        %v1446 = vpop.f32.mrb[0].mxu0
        %v1447 = vadd.f32 0.0, %v1446
        %v1448 = vpop.f32.mrb[0].mxu0
        %v1449 = vadd.f32 0.0, %v1448
        %1450 = vmatprep.mubr.bf16.mxu0 %v674
        %1451 = vmatmul.mubr.bf16.gmra.mrb[0].mxu0 %v673
        %v1452 = vpop.f32.mrb[0].mxu0
        %v1453 = vadd.f32 0.0, %v1452
        %v1454 = vpop.f32.mrb[0].mxu0
        %v1455 = vadd.f32 0.0, %v1454
        %v1456 = vpop.f32.mrb[0].mxu0
        %v1457 = vadd.f32 0.0, %v1456
        %v1458 = vpop.f32.mrb[0].mxu0
        %v1459 = vadd.f32 0.0, %v1458
        %1460 = vmatprep.mubr.bf16.mxu0 %v676
        %1461 = vmatmul.mubr.bf16.gmra.mrb[0].mxu0 %v675
        %v1462 = vpop.f32.mrb[0].mxu0
        %v1463 = vadd.f32 0.0, %v1462
        %v1464 = vpop.f32.mrb[0].mxu0
        %v1465 = vadd.f32 0.0, %v1464
        %v1466 = vpop.f32.mrb[0].mxu0
        %v1467 = vadd.f32 0.0, %v1466
        %v1468 = vpop.f32.mrb[0].mxu0
        %v1469 = vadd.f32 0.0, %v1468
        %1470 = vmatprep.mubr.bf16.mxu0 %v678
        %1471 = vmatmul.mubr.bf16.gmra.mrb[0].mxu0 %v677
        %v1472 = vpop.f32.mrb[0].mxu0
        %v1473 = vadd.f32 0.0, %v1472
        %v1474 = vpop.f32.mrb[0].mxu0
        %v1475 = vadd.f32 0.0, %v1474
        %v1476 = vpop.f32.mrb[0].mxu0
        %v1477 = vadd.f32 0.0, %v1476
        %v1478 = vpop.f32.mrb[0].mxu0
        %v1479 = vadd.f32 0.0, %v1478
        %1480 = vdwg.mxu0
        %1481 = vmatprep.subr.bf16.mxu0 %v1068
        %1482 = vmatpush1.bf16.msra.mxu0 %v1067
        %1483 = vmatprep.subr.bf16.mxu0 %v1074
        %1484 = vmatpush1.bf16.msra.mxu0 %v1073
        %1485 = vmatprep.subr.bf16.mxu0 %v1080
        %1486 = vmatpush1.bf16.msra.mxu0 %v1079
        %1487 = vmatprep.subr.bf16.mxu0 %v1086
        %1488 = vmatpush1.bf16.msra.mxu0 %v1085
        %1489 = vmatprep.subr.bf16.mxu0 %v1092
        %1490 = vmatpush1.bf16.msra.mxu0 %v1091
        %1491 = vmatprep.subr.bf16.mxu0 %v1098
        %1492 = vmatpush1.bf16.msra.mxu0 %v1097
        %1493 = vmatprep.subr.bf16.mxu0 %v1104
        %1494 = vmatpush1.bf16.msra.mxu0 %v1103
        %1495 = vmatprep.subr.bf16.mxu0 %v1110
        %1496 = vmatpush1.bf16.msra.mxu0 %v1109
        %1497 = vmatprep.subr.bf16.mxu0 %v1116
        %1498 = vmatpush1.bf16.msra.mxu0 %v1115
        %1499 = vmatprep.subr.bf16.mxu0 %v1122
        %1500 = vmatpush1.bf16.msra.mxu0 %v1121
        %1501 = vmatprep.subr.bf16.mxu0 %v1128
        %1502 = vmatpush1.bf16.msra.mxu0 %v1127
        %1503 = vmatprep.subr.bf16.mxu0 %v1134
        %1504 = vmatpush1.bf16.msra.mxu0 %v1133
        %1505 = vmatprep.subr.bf16.mxu0 %v1140
        %1506 = vmatpush1.bf16.msra.mxu0 %v1139
        %1507 = vmatprep.subr.bf16.mxu0 %v1146
        %1508 = vmatpush1.bf16.msra.mxu0 %v1145
        %1509 = vmatprep.subr.bf16.mxu0 %v1152
        %1510 = vmatpush1.bf16.msra.mxu0 %v1151
        %1511 = vmatprep.subr.bf16.mxu0 %v1158
        %1512 = vmatpush1.bf16.msra.mxu0 %v1157
        %1513 = vmatprep.mubr.bf16.mxu0 %v664
        %1514 = vmatmul.mubr.bf16.gmra.mrb[0].mxu0 %v663
        %v1515 = vpop.f32.mrb[0].mxu0
        %v1516 = vadd.f32 0.0, %v1515
        %v1517 = vpop.f32.mrb[0].mxu0
        %v1518 = vadd.f32 0.0, %v1517
        %v1519 = vpop.f32.mrb[0].mxu0
        %v1520 = vadd.f32 0.0, %v1519
        %v1521 = vpop.f32.mrb[0].mxu0
        %v1522 = vadd.f32 0.0, %v1521
        %1523 = vmatprep.mubr.bf16.mxu0 %v666
        %1524 = vmatmul.mubr.bf16.gmra.mrb[0].mxu0 %v665
        %v1525 = vpop.f32.mrb[0].mxu0
        %v1526 = vadd.f32 0.0, %v1525
        %v1527 = vpop.f32.mrb[0].mxu0
        %v1528 = vadd.f32 0.0, %v1527
        %v1529 = vpop.f32.mrb[0].mxu0
        %v1530 = vadd.f32 0.0, %v1529
        %v1531 = vpop.f32.mrb[0].mxu0
        %v1532 = vadd.f32 0.0, %v1531
        %1533 = vmatprep.mubr.bf16.mxu0 %v668
        %1534 = vmatmul.mubr.bf16.gmra.mrb[0].mxu0 %v667
        %v1535 = vpop.f32.mrb[0].mxu0
        %v1536 = vadd.f32 0.0, %v1535
        %v1537 = vpop.f32.mrb[0].mxu0
        %v1538 = vadd.f32 0.0, %v1537
        %v1539 = vpop.f32.mrb[0].mxu0
        %v1540 = vadd.f32 0.0, %v1539
        %v1541 = vpop.f32.mrb[0].mxu0
        %v1542 = vadd.f32 0.0, %v1541
        %1543 = vmatprep.mubr.bf16.mxu0 %v670
        %1544 = vmatmul.mubr.bf16.gmra.mrb[0].mxu0 %v669
        %v1545 = vpop.f32.mrb[0].mxu0
        %v1546 = vadd.f32 0.0, %v1545
        %v1547 = vpop.f32.mrb[0].mxu0
        %v1548 = vadd.f32 0.0, %v1547
        %v1549 = vpop.f32.mrb[0].mxu0
        %v1550 = vadd.f32 0.0, %v1549
        %v1551 = vpop.f32.mrb[0].mxu0
        %v1552 = vadd.f32 0.0, %v1551
        %1553 = vmatprep.mubr.bf16.mxu0 %v672
        %1554 = vmatmul.mubr.bf16.gmra.mrb[0].mxu0 %v671
        %v1555 = vpop.f32.mrb[0].mxu0
        %v1556 = vadd.f32 0.0, %v1555
        %v1557 = vpop.f32.mrb[0].mxu0
        %v1558 = vadd.f32 0.0, %v1557
        %v1559 = vpop.f32.mrb[0].mxu0
        %v1560 = vadd.f32 0.0, %v1559
        %v1561 = vpop.f32.mrb[0].mxu0
        %v1562 = vadd.f32 0.0, %v1561
        %1563 = vmatprep.mubr.bf16.mxu0 %v674
        %1564 = vmatmul.mubr.bf16.gmra.mrb[0].mxu0 %v673
        %v1565 = vpop.f32.mrb[0].mxu0
        %v1566 = vadd.f32 0.0, %v1565
        %v1567 = vpop.f32.mrb[0].mxu0
        %v1568 = vadd.f32 0.0, %v1567
        %v1569 = vpop.f32.mrb[0].mxu0
        %v1570 = vadd.f32 0.0, %v1569
        %v1571 = vpop.f32.mrb[0].mxu0
        %v1572 = vadd.f32 0.0, %v1571
        %1573 = vmatprep.mubr.bf16.mxu0 %v676
        %1574 = vmatmul.mubr.bf16.gmra.mrb[0].mxu0 %v675
        %v1575 = vpop.f32.mrb[0].mxu0
        %v1576 = vadd.f32 0.0, %v1575
        %v1577 = vpop.f32.mrb[0].mxu0
        %v1578 = vadd.f32 0.0, %v1577
        %v1579 = vpop.f32.mrb[0].mxu0
        %v1580 = vadd.f32 0.0, %v1579
        %v1581 = vpop.f32.mrb[0].mxu0
        %v1582 = vadd.f32 0.0, %v1581
        %1583 = vmatprep.mubr.bf16.mxu0 %v678
        %1584 = vmatmul.mubr.bf16.gmra.mrb[0].mxu0 %v677
        %v1585 = vpop.f32.mrb[0].mxu0
        %v1586 = vadd.f32 0.0, %v1585
        %v1587 = vpop.f32.mrb[0].mxu0
        %v1588 = vadd.f32 0.0, %v1587
        %v1589 = vpop.f32.mrb[0].mxu0
        %v1590 = vadd.f32 0.0, %v1589
        %v1591 = vpop.f32.mrb[0].mxu0
        %v1592 = vadd.f32 0.0, %v1591
        %1593 = vdwg.mxu0
        %v1594 = vld [vmem:[%s360] sm:$0xff]
        %v1595 = vld [vmem:[%s360 + $0x8] sm:$0xff]
        %v1596 = vld [vmem:[%s360 + $0x10] sm:$0xff]
        %v1597 = vld [vmem:[%s360 + $0x18] sm:$0xff]
        %v1598 = vld [vmem:[%s360 + $0x20] sm:$0xff]
        %v1599 = vld [vmem:[%s360 + $0x28] sm:$0xff]
        %v1600 = vld [vmem:[%s360 + $0x30] sm:$0xff]
        %v1601 = vld [vmem:[%s360 + $0x38] sm:$0xff]
        %v1602 = vld [vmem:[%s360 + $0x40] sm:$0xff]
        %v1603 = vld [vmem:[%s360 + $0x48] sm:$0xff]
        %v1604 = vld [vmem:[%s360 + $0x50] sm:$0xff]
        %v1605 = vld [vmem:[%s360 + $0x58] sm:$0xff]
        %v1606 = vld [vmem:[%s360 + $0x60] sm:$0xff]
        %v1607 = vld [vmem:[%s360 + $0x68] sm:$0xff]
        %v1608 = vld [vmem:[%s360 + $0x70] sm:$0xff]
        %v1609 = vld [vmem:[%s360 + $0x78] sm:$0xff]
        %v1610 = vld [vmem:[%s369] sm:$0xff]
        %v1611 = vld [vmem:[%s369 + $0x8] sm:$0xff]
        %v1612 = vld [vmem:[%s369 + $0x10] sm:$0xff]
        %v1613 = vld [vmem:[%s369 + $0x18] sm:$0xff]
        %v1614 = vld [vmem:[%s369 + $0x20] sm:$0xff]
        %v1615 = vld [vmem:[%s369 + $0x28] sm:$0xff]
        %v1616 = vld [vmem:[%s369 + $0x30] sm:$0xff]
        %v1617 = vld [vmem:[%s369 + $0x38] sm:$0xff]
        %v1618 = vld [vmem:[%s369 + $0x40] sm:$0xff]
        %v1619 = vld [vmem:[%s369 + $0x48] sm:$0xff]
        %v1620 = vld [vmem:[%s369 + $0x50] sm:$0xff]
        %v1621 = vld [vmem:[%s369 + $0x58] sm:$0xff]
        %v1622 = vld [vmem:[%s369 + $0x60] sm:$0xff]
        %v1623 = vld [vmem:[%s369 + $0x68] sm:$0xff]
        %v1624 = vld [vmem:[%s369 + $0x70] sm:$0xff]
        %v1625 = vld [vmem:[%s369 + $0x78] sm:$0xff]
        %v1626 = vmul.f32 %v1594, 0.125
        %v1627 = vmul.f32 %v1595, 0.125
        %v1628 = vmul.f32 %v1596, 0.125
        %v1629 = vmul.f32 %v1597, 0.125
        %v1630 = vmul.f32 %v1598, 0.125
        %v1631 = vmul.f32 %v1599, 0.125
        %v1632 = vmul.f32 %v1600, 0.125
        %v1633 = vmul.f32 %v1601, 0.125
        %v1634 = vmul.f32 %v1602, 0.125
        %v1635 = vmul.f32 %v1603, 0.125
        %v1636 = vmul.f32 %v1604, 0.125
        %v1637 = vmul.f32 %v1605, 0.125
        %v1638 = vmul.f32 %v1606, 0.125
        %v1639 = vmul.f32 %v1607, 0.125
        %v1640 = vmul.f32 %v1608, 0.125
        %v1641 = vmul.f32 %v1609, 0.125
        %v1642 = vmul.f32 %v1610, 0.125
        %v1643 = vmul.f32 %v1611, 0.125
        %v1644 = vmul.f32 %v1612, 0.125
        %v1645 = vmul.f32 %v1613, 0.125
        %v1646 = vmul.f32 %v1614, 0.125
        %v1647 = vmul.f32 %v1615, 0.125
        %v1648 = vmul.f32 %v1616, 0.125
        %v1649 = vmul.f32 %v1617, 0.125
        %v1650 = vmul.f32 %v1618, 0.125
        %v1651 = vmul.f32 %v1619, 0.125
        %v1652 = vmul.f32 %v1620, 0.125
        %v1653 = vmul.f32 %v1621, 0.125
        %v1654 = vmul.f32 %v1622, 0.125
        %v1655 = vmul.f32 %v1623, 0.125
        %v1656 = vmul.f32 %v1624, 0.125
        %v1657 = vmul.f32 %v1625, 0.125
        %v1658 = vmul.f32 %v1290, %v1626
        %v1659 = vmul.f32 %v1294, %v1627
        %v1660 = vmul.f32 %v1300, %v1628
        %v1661 = vmul.f32 %v1304, %v1629
        %v1662 = vmul.f32 %v1310, %v1630
        %v1663 = vmul.f32 %v1314, %v1631
        %v1664 = vmul.f32 %v1320, %v1632
        %v1665 = vmul.f32 %v1324, %v1633
        %v1666 = vmul.f32 %v1330, %v1634
        %v1667 = vmul.f32 %v1334, %v1635
        %v1668 = vmul.f32 %v1340, %v1636
        %v1669 = vmul.f32 %v1344, %v1637
        %v1670 = vmul.f32 %v1350, %v1638
        %v1671 = vmul.f32 %v1354, %v1639
        %v1672 = vmul.f32 %v1360, %v1640
        %v1673 = vmul.f32 %v1364, %v1641
        %1690 = vrot.lane.b32.xlu0 %v1290, 96
        %v1691 = vpop.permute.xlu0 %1690
        %1692 = vrot.lane.b32.xlu0 %v1294, 96
        %v1693 = vpop.permute.xlu0 %1692
        %1694 = vrot.lane.b32.xlu0 %v1300, 96
        %v1695 = vpop.permute.xlu0 %1694
        %1696 = vrot.lane.b32.xlu0 %v1304, 96
        %v1697 = vpop.permute.xlu0 %1696
        %1698 = vrot.lane.b32.xlu0 %v1310, 96
        %v1699 = vpop.permute.xlu0 %1698
        %1700 = vrot.lane.b32.xlu0 %v1314, 96
        %v1701 = vpop.permute.xlu0 %1700
        %1702 = vrot.lane.b32.xlu0 %v1320, 96
        %v1703 = vpop.permute.xlu0 %1702
        %1704 = vrot.lane.b32.xlu0 %v1324, 96
        %v1705 = vpop.permute.xlu0 %1704
        %1706 = vrot.lane.b32.xlu0 %v1330, 96
        %v1707 = vpop.permute.xlu0 %1706
        %1708 = vrot.lane.b32.xlu0 %v1334, 96
        %v1709 = vpop.permute.xlu0 %1708
        %1710 = vrot.lane.b32.xlu0 %v1340, 96
        %v1711 = vpop.permute.xlu0 %1710
        %1712 = vrot.lane.b32.xlu0 %v1344, 96
        %v1713 = vpop.permute.xlu0 %1712
        %1714 = vrot.lane.b32.xlu0 %v1350, 96
        %v1715 = vpop.permute.xlu0 %1714
        %1716 = vrot.lane.b32.xlu0 %v1354, 96
        %v1717 = vpop.permute.xlu0 %1716
        %1718 = vrot.lane.b32.xlu0 %v1360, 96
        %v1719 = vpop.permute.xlu0 %1718
        %1720 = vrot.lane.b32.xlu0 %v1364, 96
        %v1721 = vpop.permute.xlu0 %1720
        %1738 = vrot.lane.b32.xlu0 %v1290, 32
        %v1739 = vpop.permute.xlu0 %1738
        %1740 = vrot.lane.b32.xlu0 %v1294, 32
        %v1741 = vpop.permute.xlu0 %1740
        %1742 = vrot.lane.b32.xlu0 %v1300, 32
        %v1743 = vpop.permute.xlu0 %1742
        %1744 = vrot.lane.b32.xlu0 %v1304, 32
        %v1745 = vpop.permute.xlu0 %1744
        %1746 = vrot.lane.b32.xlu0 %v1310, 32
        %v1747 = vpop.permute.xlu0 %1746
        %1748 = vrot.lane.b32.xlu0 %v1314, 32
        %v1749 = vpop.permute.xlu0 %1748
        %1750 = vrot.lane.b32.xlu0 %v1320, 32
        %v1751 = vpop.permute.xlu0 %1750
        %1752 = vrot.lane.b32.xlu0 %v1324, 32
        %v1753 = vpop.permute.xlu0 %1752
        %1754 = vrot.lane.b32.xlu0 %v1330, 32
        %v1755 = vpop.permute.xlu0 %1754
        %1756 = vrot.lane.b32.xlu0 %v1334, 32
        %v1757 = vpop.permute.xlu0 %1756
        %1758 = vrot.lane.b32.xlu0 %v1340, 32
        %v1759 = vpop.permute.xlu0 %1758
        %1760 = vrot.lane.b32.xlu0 %v1344, 32
        %v1761 = vpop.permute.xlu0 %1760
        %1762 = vrot.lane.b32.xlu0 %v1350, 32
        %v1763 = vpop.permute.xlu0 %1762
        %1764 = vrot.lane.b32.xlu0 %v1354, 32
        %v1765 = vpop.permute.xlu0 %1764
        %1766 = vrot.lane.b32.xlu0 %v1360, 32
        %v1767 = vpop.permute.xlu0 %1766
        %1768 = vrot.lane.b32.xlu0 %v1364, 32
        %v1769 = vpop.permute.xlu0 %1768
        %vm1786 = vcmask 261120
        %v1787 = vsel %vm1786, %v1691, %v1739
        %v1788 = vsel %vm1786, %v1693, %v1741
        %v1789 = vsel %vm1786, %v1695, %v1743
        %v1790 = vsel %vm1786, %v1697, %v1745
        %v1791 = vsel %vm1786, %v1699, %v1747
        %v1792 = vsel %vm1786, %v1701, %v1749
        %v1793 = vsel %vm1786, %v1703, %v1751
        %v1794 = vsel %vm1786, %v1705, %v1753
        %v1795 = vsel %vm1786, %v1707, %v1755
        %v1796 = vsel %vm1786, %v1709, %v1757
        %v1797 = vsel %vm1786, %v1711, %v1759
        %v1798 = vsel %vm1786, %v1713, %v1761
        %v1799 = vsel %vm1786, %v1715, %v1763
        %v1800 = vsel %vm1786, %v1717, %v1765
        %v1801 = vsel %vm1786, %v1719, %v1767
        %v1802 = vsel %vm1786, %v1721, %v1769
        %v1803 = vmul.f32 %v1787, %v1642
        %v1804 = vmul.f32 %v1788, %v1643
        %v1805 = vmul.f32 %v1789, %v1644
        %v1806 = vmul.f32 %v1790, %v1645
        %v1807 = vmul.f32 %v1791, %v1646
        %v1808 = vmul.f32 %v1792, %v1647
        %v1809 = vmul.f32 %v1793, %v1648
        %v1810 = vmul.f32 %v1794, %v1649
        %v1811 = vmul.f32 %v1795, %v1650
        %v1812 = vmul.f32 %v1796, %v1651
        %v1813 = vmul.f32 %v1797, %v1652
        %v1814 = vmul.f32 %v1798, %v1653
        %v1815 = vmul.f32 %v1799, %v1654
        %v1816 = vmul.f32 %v1800, %v1655
        %v1817 = vmul.f32 %v1801, %v1656
        %v1818 = vmul.f32 %v1802, %v1657
        %v1819 = vadd.f32 %v1658, %v1803
        %v1820 = vadd.f32 %v1659, %v1804
        %v1821 = vadd.f32 %v1660, %v1805
        %v1822 = vadd.f32 %v1661, %v1806
        %v1823 = vadd.f32 %v1662, %v1807
        %v1824 = vadd.f32 %v1663, %v1808
        %v1825 = vadd.f32 %v1664, %v1809
        %v1826 = vadd.f32 %v1665, %v1810
        %v1827 = vadd.f32 %v1666, %v1811
        %v1828 = vadd.f32 %v1667, %v1812
        %v1829 = vadd.f32 %v1668, %v1813
        %v1830 = vadd.f32 %v1669, %v1814
        %v1831 = vadd.f32 %v1670, %v1815
        %v1832 = vadd.f32 %v1671, %v1816
        %v1833 = vadd.f32 %v1672, %v1817
        %v1834 = vadd.f32 %v1673, %v1818
        %v1835 = vmul.f32 %v1403, %v1594
        %v1836 = vmul.f32 %v1407, %v1595
        %v1837 = vmul.f32 %v1413, %v1596
        %v1838 = vmul.f32 %v1417, %v1597
        %v1839 = vmul.f32 %v1423, %v1598
        %v1840 = vmul.f32 %v1427, %v1599
        %v1841 = vmul.f32 %v1433, %v1600
        %v1842 = vmul.f32 %v1437, %v1601
        %v1843 = vmul.f32 %v1443, %v1602
        %v1844 = vmul.f32 %v1447, %v1603
        %v1845 = vmul.f32 %v1453, %v1604
        %v1846 = vmul.f32 %v1457, %v1605
        %v1847 = vmul.f32 %v1463, %v1606
        %v1848 = vmul.f32 %v1467, %v1607
        %v1849 = vmul.f32 %v1473, %v1608
        %v1850 = vmul.f32 %v1477, %v1609
        %1867 = vrot.lane.b32.xlu0 %v1403, 96
        %v1868 = vpop.permute.xlu0 %1867
        %1869 = vrot.lane.b32.xlu0 %v1407, 96
        %v1870 = vpop.permute.xlu0 %1869
        %1871 = vrot.lane.b32.xlu0 %v1413, 96
        %v1872 = vpop.permute.xlu0 %1871
        %1873 = vrot.lane.b32.xlu0 %v1417, 96
        %v1874 = vpop.permute.xlu0 %1873
        %1875 = vrot.lane.b32.xlu0 %v1423, 96
        %v1876 = vpop.permute.xlu0 %1875
        %1877 = vrot.lane.b32.xlu0 %v1427, 96
        %v1878 = vpop.permute.xlu0 %1877
        %1879 = vrot.lane.b32.xlu0 %v1433, 96
        %v1880 = vpop.permute.xlu0 %1879
        %1881 = vrot.lane.b32.xlu0 %v1437, 96
        %v1882 = vpop.permute.xlu0 %1881
        %1883 = vrot.lane.b32.xlu0 %v1443, 96
        %v1884 = vpop.permute.xlu0 %1883
        %1885 = vrot.lane.b32.xlu0 %v1447, 96
        %v1886 = vpop.permute.xlu0 %1885
        %1887 = vrot.lane.b32.xlu0 %v1453, 96
        %v1888 = vpop.permute.xlu0 %1887
        %1889 = vrot.lane.b32.xlu0 %v1457, 96
        %v1890 = vpop.permute.xlu0 %1889
        %1891 = vrot.lane.b32.xlu0 %v1463, 96
        %v1892 = vpop.permute.xlu0 %1891
        %1893 = vrot.lane.b32.xlu0 %v1467, 96
        %v1894 = vpop.permute.xlu0 %1893
        %1895 = vrot.lane.b32.xlu0 %v1473, 96
        %v1896 = vpop.permute.xlu0 %1895
        %1897 = vrot.lane.b32.xlu0 %v1477, 96
        %v1898 = vpop.permute.xlu0 %1897
        %1915 = vrot.lane.b32.xlu0 %v1403, 32
        %v1916 = vpop.permute.xlu0 %1915
        %1917 = vrot.lane.b32.xlu0 %v1407, 32
        %v1918 = vpop.permute.xlu0 %1917
        %1919 = vrot.lane.b32.xlu0 %v1413, 32
        %v1920 = vpop.permute.xlu0 %1919
        %1921 = vrot.lane.b32.xlu0 %v1417, 32
        %v1922 = vpop.permute.xlu0 %1921
        %1923 = vrot.lane.b32.xlu0 %v1423, 32
        %v1924 = vpop.permute.xlu0 %1923
        %1925 = vrot.lane.b32.xlu0 %v1427, 32
        %v1926 = vpop.permute.xlu0 %1925
        %1927 = vrot.lane.b32.xlu0 %v1433, 32
        %v1928 = vpop.permute.xlu0 %1927
        %1929 = vrot.lane.b32.xlu0 %v1437, 32
        %v1930 = vpop.permute.xlu0 %1929
        %1931 = vrot.lane.b32.xlu0 %v1443, 32
        %v1932 = vpop.permute.xlu0 %1931
        %1933 = vrot.lane.b32.xlu0 %v1447, 32
        %v1934 = vpop.permute.xlu0 %1933
        %1935 = vrot.lane.b32.xlu0 %v1453, 32
        %v1936 = vpop.permute.xlu0 %1935
        %1937 = vrot.lane.b32.xlu0 %v1457, 32
        %v1938 = vpop.permute.xlu0 %1937
        %1939 = vrot.lane.b32.xlu0 %v1463, 32
        %v1940 = vpop.permute.xlu0 %1939
        %1941 = vrot.lane.b32.xlu0 %v1467, 32
        %v1942 = vpop.permute.xlu0 %1941
        %1943 = vrot.lane.b32.xlu0 %v1473, 32
        %v1944 = vpop.permute.xlu0 %1943
        %1945 = vrot.lane.b32.xlu0 %v1477, 32
        %v1946 = vpop.permute.xlu0 %1945
        %v1963 = vsel %vm1786, %v1868, %v1916
        %v1964 = vsel %vm1786, %v1870, %v1918
        %v1965 = vsel %vm1786, %v1872, %v1920
        %v1966 = vsel %vm1786, %v1874, %v1922
        %v1967 = vsel %vm1786, %v1876, %v1924
        %v1968 = vsel %vm1786, %v1878, %v1926
        %v1969 = vsel %vm1786, %v1880, %v1928
        %v1970 = vsel %vm1786, %v1882, %v1930
        %v1971 = vsel %vm1786, %v1884, %v1932
        %v1972 = vsel %vm1786, %v1886, %v1934
        %v1973 = vsel %vm1786, %v1888, %v1936
        %v1974 = vsel %vm1786, %v1890, %v1938
        %v1975 = vsel %vm1786, %v1892, %v1940
        %v1976 = vsel %vm1786, %v1894, %v1942
        %v1977 = vsel %vm1786, %v1896, %v1944
        %v1978 = vsel %vm1786, %v1898, %v1946
        %v1979 = vmul.f32 %v1963, %v1610
        %v1980 = vmul.f32 %v1964, %v1611
        %v1981 = vmul.f32 %v1965, %v1612
        %v1982 = vmul.f32 %v1966, %v1613
        %v1983 = vmul.f32 %v1967, %v1614
        %v1984 = vmul.f32 %v1968, %v1615
        %v1985 = vmul.f32 %v1969, %v1616
        %v1986 = vmul.f32 %v1970, %v1617
        %v1987 = vmul.f32 %v1971, %v1618
        %v1988 = vmul.f32 %v1972, %v1619
        %v1989 = vmul.f32 %v1973, %v1620
        %v1990 = vmul.f32 %v1974, %v1621
        %v1991 = vmul.f32 %v1975, %v1622
        %v1992 = vmul.f32 %v1976, %v1623
        %v1993 = vmul.f32 %v1977, %v1624
        %v1994 = vmul.f32 %v1978, %v1625
        %v1995 = vadd.f32 %v1835, %v1979
        %v1996 = vadd.f32 %v1836, %v1980
        %v1997 = vadd.f32 %v1837, %v1981
        %v1998 = vadd.f32 %v1838, %v1982
        %v1999 = vadd.f32 %v1839, %v1983
        %v2000 = vadd.f32 %v1840, %v1984
        %v2001 = vadd.f32 %v1841, %v1985
        %v2002 = vadd.f32 %v1842, %v1986
        %v2003 = vadd.f32 %v1843, %v1987
        %v2004 = vadd.f32 %v1844, %v1988
        %v2005 = vadd.f32 %v1845, %v1989
        %v2006 = vadd.f32 %v1846, %v1990
        %v2007 = vadd.f32 %v1847, %v1991
        %v2008 = vadd.f32 %v1848, %v1992
        %v2009 = vadd.f32 %v1849, %v1993
        %v2010 = vadd.f32 %v1850, %v1994
        %2027 = vrot.lane.b32.xlu0 %v1626, 64
        %v2028 = vpop.permute.xlu0 %2027
        %2029 = vrot.lane.b32.xlu0 %v1627, 64
        %v2030 = vpop.permute.xlu0 %2029
        %2031 = vrot.lane.b32.xlu0 %v1628, 64
        %v2032 = vpop.permute.xlu0 %2031
        %2033 = vrot.lane.b32.xlu0 %v1629, 64
        %v2034 = vpop.permute.xlu0 %2033
        %2035 = vrot.lane.b32.xlu0 %v1630, 64
        %v2036 = vpop.permute.xlu0 %2035
        %2037 = vrot.lane.b32.xlu0 %v1631, 64
        %v2038 = vpop.permute.xlu0 %2037
        %2039 = vrot.lane.b32.xlu0 %v1632, 64
        %v2040 = vpop.permute.xlu0 %2039
        %2041 = vrot.lane.b32.xlu0 %v1633, 64
        %v2042 = vpop.permute.xlu0 %2041
        %2043 = vrot.lane.b32.xlu0 %v1634, 64
        %v2044 = vpop.permute.xlu0 %2043
        %2045 = vrot.lane.b32.xlu0 %v1635, 64
        %v2046 = vpop.permute.xlu0 %2045
        %2047 = vrot.lane.b32.xlu0 %v1636, 64
        %v2048 = vpop.permute.xlu0 %2047
        %2049 = vrot.lane.b32.xlu0 %v1637, 64
        %v2050 = vpop.permute.xlu0 %2049
        %2051 = vrot.lane.b32.xlu0 %v1638, 64
        %v2052 = vpop.permute.xlu0 %2051
        %2053 = vrot.lane.b32.xlu0 %v1639, 64
        %v2054 = vpop.permute.xlu0 %2053
        %2055 = vrot.lane.b32.xlu0 %v1640, 64
        %v2056 = vpop.permute.xlu0 %2055
        %2057 = vrot.lane.b32.xlu0 %v1641, 64
        %v2058 = vpop.permute.xlu0 %2057
        %v2075 = vmul.f32 %v1290, %v2028
        %v2076 = vmul.f32 %v1294, %v2030
        %v2077 = vmul.f32 %v1300, %v2032
        %v2078 = vmul.f32 %v1304, %v2034
        %v2079 = vmul.f32 %v1310, %v2036
        %v2080 = vmul.f32 %v1314, %v2038
        %v2081 = vmul.f32 %v1320, %v2040
        %v2082 = vmul.f32 %v1324, %v2042
        %v2083 = vmul.f32 %v1330, %v2044
        %v2084 = vmul.f32 %v1334, %v2046
        %v2085 = vmul.f32 %v1340, %v2048
        %v2086 = vmul.f32 %v1344, %v2050
        %v2087 = vmul.f32 %v1350, %v2052
        %v2088 = vmul.f32 %v1354, %v2054
        %v2089 = vmul.f32 %v1360, %v2056
        %v2090 = vmul.f32 %v1364, %v2058
        %v2091 = vsel %vm1786, %v1739, %v1691
        %v2092 = vsel %vm1786, %v1741, %v1693
        %v2093 = vsel %vm1786, %v1743, %v1695
        %v2094 = vsel %vm1786, %v1745, %v1697
        %v2095 = vsel %vm1786, %v1747, %v1699
        %v2096 = vsel %vm1786, %v1749, %v1701
        %v2097 = vsel %vm1786, %v1751, %v1703
        %v2098 = vsel %vm1786, %v1753, %v1705
        %v2099 = vsel %vm1786, %v1755, %v1707
        %v2100 = vsel %vm1786, %v1757, %v1709
        %v2101 = vsel %vm1786, %v1759, %v1711
        %v2102 = vsel %vm1786, %v1761, %v1713
        %v2103 = vsel %vm1786, %v1763, %v1715
        %v2104 = vsel %vm1786, %v1765, %v1717
        %v2105 = vsel %vm1786, %v1767, %v1719
        %v2106 = vsel %vm1786, %v1769, %v1721
        %v2107 = vmul.f32 %v2091, %v1642
        %v2108 = vmul.f32 %v2092, %v1643
        %v2109 = vmul.f32 %v2093, %v1644
        %v2110 = vmul.f32 %v2094, %v1645
        %v2111 = vmul.f32 %v2095, %v1646
        %v2112 = vmul.f32 %v2096, %v1647
        %v2113 = vmul.f32 %v2097, %v1648
        %v2114 = vmul.f32 %v2098, %v1649
        %v2115 = vmul.f32 %v2099, %v1650
        %v2116 = vmul.f32 %v2100, %v1651
        %v2117 = vmul.f32 %v2101, %v1652
        %v2118 = vmul.f32 %v2102, %v1653
        %v2119 = vmul.f32 %v2103, %v1654
        %v2120 = vmul.f32 %v2104, %v1655
        %v2121 = vmul.f32 %v2105, %v1656
        %v2122 = vmul.f32 %v2106, %v1657
        %2139 = vrot.lane.b32.xlu0 %v2107, 64
        %v2140 = vpop.permute.xlu0 %2139
        %2141 = vrot.lane.b32.xlu0 %v2108, 64
        %v2142 = vpop.permute.xlu0 %2141
        %2143 = vrot.lane.b32.xlu0 %v2109, 64
        %v2144 = vpop.permute.xlu0 %2143
        %2145 = vrot.lane.b32.xlu0 %v2110, 64
        %v2146 = vpop.permute.xlu0 %2145
        %2147 = vrot.lane.b32.xlu0 %v2111, 64
        %v2148 = vpop.permute.xlu0 %2147
        %2149 = vrot.lane.b32.xlu0 %v2112, 64
        %v2150 = vpop.permute.xlu0 %2149
        %2151 = vrot.lane.b32.xlu0 %v2113, 64
        %v2152 = vpop.permute.xlu0 %2151
        %2153 = vrot.lane.b32.xlu0 %v2114, 64
        %v2154 = vpop.permute.xlu0 %2153
        %2155 = vrot.lane.b32.xlu0 %v2115, 64
        %v2156 = vpop.permute.xlu0 %2155
        %2157 = vrot.lane.b32.xlu0 %v2116, 64
        %v2158 = vpop.permute.xlu0 %2157
        %2159 = vrot.lane.b32.xlu0 %v2117, 64
        %v2160 = vpop.permute.xlu0 %2159
        %2161 = vrot.lane.b32.xlu0 %v2118, 64
        %v2162 = vpop.permute.xlu0 %2161
        %2163 = vrot.lane.b32.xlu0 %v2119, 64
        %v2164 = vpop.permute.xlu0 %2163
        %2165 = vrot.lane.b32.xlu0 %v2120, 64
        %v2166 = vpop.permute.xlu0 %2165
        %2167 = vrot.lane.b32.xlu0 %v2121, 64
        %v2168 = vpop.permute.xlu0 %2167
        %2169 = vrot.lane.b32.xlu0 %v2122, 64
        %v2170 = vpop.permute.xlu0 %2169
        %v2187 = vadd.f32 %v2075, %v2140
        %v2188 = vadd.f32 %v2076, %v2142
        %v2189 = vadd.f32 %v2077, %v2144
        %v2190 = vadd.f32 %v2078, %v2146
        %v2191 = vadd.f32 %v2079, %v2148
        %v2192 = vadd.f32 %v2080, %v2150
        %v2193 = vadd.f32 %v2081, %v2152
        %v2194 = vadd.f32 %v2082, %v2154
        %v2195 = vadd.f32 %v2083, %v2156
        %v2196 = vadd.f32 %v2084, %v2158
        %v2197 = vadd.f32 %v2085, %v2160
        %v2198 = vadd.f32 %v2086, %v2162
        %v2199 = vadd.f32 %v2087, %v2164
        %v2200 = vadd.f32 %v2088, %v2166
        %v2201 = vadd.f32 %v2089, %v2168
        %v2202 = vadd.f32 %v2090, %v2170
        %2219 = vrot.lane.b32.xlu0 %v1594, 64
        %v2220 = vpop.permute.xlu0 %2219
        %2221 = vrot.lane.b32.xlu0 %v1595, 64
        %v2222 = vpop.permute.xlu0 %2221
        %2223 = vrot.lane.b32.xlu0 %v1596, 64
        %v2224 = vpop.permute.xlu0 %2223
        %2225 = vrot.lane.b32.xlu0 %v1597, 64
        %v2226 = vpop.permute.xlu0 %2225
        %2227 = vrot.lane.b32.xlu0 %v1598, 64
        %v2228 = vpop.permute.xlu0 %2227
        %2229 = vrot.lane.b32.xlu0 %v1599, 64
        %v2230 = vpop.permute.xlu0 %2229
        %2231 = vrot.lane.b32.xlu0 %v1600, 64
        %v2232 = vpop.permute.xlu0 %2231
        %2233 = vrot.lane.b32.xlu0 %v1601, 64
        %v2234 = vpop.permute.xlu0 %2233
        %2235 = vrot.lane.b32.xlu0 %v1602, 64
        %v2236 = vpop.permute.xlu0 %2235
        %2237 = vrot.lane.b32.xlu0 %v1603, 64
        %v2238 = vpop.permute.xlu0 %2237
        %2239 = vrot.lane.b32.xlu0 %v1604, 64
        %v2240 = vpop.permute.xlu0 %2239
        %2241 = vrot.lane.b32.xlu0 %v1605, 64
        %v2242 = vpop.permute.xlu0 %2241
        %2243 = vrot.lane.b32.xlu0 %v1606, 64
        %v2244 = vpop.permute.xlu0 %2243
        %2245 = vrot.lane.b32.xlu0 %v1607, 64
        %v2246 = vpop.permute.xlu0 %2245
        %2247 = vrot.lane.b32.xlu0 %v1608, 64
        %v2248 = vpop.permute.xlu0 %2247
        %2249 = vrot.lane.b32.xlu0 %v1609, 64
        %v2250 = vpop.permute.xlu0 %2249
        %v2267 = vmul.f32 %v1403, %v2220
        %v2268 = vmul.f32 %v1407, %v2222
        %v2269 = vmul.f32 %v1413, %v2224
        %v2270 = vmul.f32 %v1417, %v2226
        %v2271 = vmul.f32 %v1423, %v2228
        %v2272 = vmul.f32 %v1427, %v2230
        %v2273 = vmul.f32 %v1433, %v2232
        %v2274 = vmul.f32 %v1437, %v2234
        %v2275 = vmul.f32 %v1443, %v2236
        %v2276 = vmul.f32 %v1447, %v2238
        %v2277 = vmul.f32 %v1453, %v2240
        %v2278 = vmul.f32 %v1457, %v2242
        %v2279 = vmul.f32 %v1463, %v2244
        %v2280 = vmul.f32 %v1467, %v2246
        %v2281 = vmul.f32 %v1473, %v2248
        %v2282 = vmul.f32 %v1477, %v2250
        %v2283 = vsel %vm1786, %v1916, %v1868
        %v2284 = vsel %vm1786, %v1918, %v1870
        %v2285 = vsel %vm1786, %v1920, %v1872
        %v2286 = vsel %vm1786, %v1922, %v1874
        %v2287 = vsel %vm1786, %v1924, %v1876
        %v2288 = vsel %vm1786, %v1926, %v1878
        %v2289 = vsel %vm1786, %v1928, %v1880
        %v2290 = vsel %vm1786, %v1930, %v1882
        %v2291 = vsel %vm1786, %v1932, %v1884
        %v2292 = vsel %vm1786, %v1934, %v1886
        %v2293 = vsel %vm1786, %v1936, %v1888
        %v2294 = vsel %vm1786, %v1938, %v1890
        %v2295 = vsel %vm1786, %v1940, %v1892
        %v2296 = vsel %vm1786, %v1942, %v1894
        %v2297 = vsel %vm1786, %v1944, %v1896
        %v2298 = vsel %vm1786, %v1946, %v1898
        %v2299 = vmul.f32 %v2283, %v1610
        %v2300 = vmul.f32 %v2284, %v1611
        %v2301 = vmul.f32 %v2285, %v1612
        %v2302 = vmul.f32 %v2286, %v1613
        %v2303 = vmul.f32 %v2287, %v1614
        %v2304 = vmul.f32 %v2288, %v1615
        %v2305 = vmul.f32 %v2289, %v1616
        %v2306 = vmul.f32 %v2290, %v1617
        %v2307 = vmul.f32 %v2291, %v1618
        %v2308 = vmul.f32 %v2292, %v1619
        %v2309 = vmul.f32 %v2293, %v1620
        %v2310 = vmul.f32 %v2294, %v1621
        %v2311 = vmul.f32 %v2295, %v1622
        %v2312 = vmul.f32 %v2296, %v1623
        %v2313 = vmul.f32 %v2297, %v1624
        %v2314 = vmul.f32 %v2298, %v1625
        %2331 = vrot.lane.b32.xlu0 %v2299, 64
        %v2332 = vpop.permute.xlu0 %2331
        %2333 = vrot.lane.b32.xlu0 %v2300, 64
        %v2334 = vpop.permute.xlu0 %2333
        %2335 = vrot.lane.b32.xlu0 %v2301, 64
        %v2336 = vpop.permute.xlu0 %2335
        %2337 = vrot.lane.b32.xlu0 %v2302, 64
        %v2338 = vpop.permute.xlu0 %2337
        %2339 = vrot.lane.b32.xlu0 %v2303, 64
        %v2340 = vpop.permute.xlu0 %2339
        %2341 = vrot.lane.b32.xlu0 %v2304, 64
        %v2342 = vpop.permute.xlu0 %2341
        %2343 = vrot.lane.b32.xlu0 %v2305, 64
        %v2344 = vpop.permute.xlu0 %2343
        %2345 = vrot.lane.b32.xlu0 %v2306, 64
        %v2346 = vpop.permute.xlu0 %2345
        %2347 = vrot.lane.b32.xlu0 %v2307, 64
        %v2348 = vpop.permute.xlu0 %2347
        %2349 = vrot.lane.b32.xlu0 %v2308, 64
        %v2350 = vpop.permute.xlu0 %2349
        %2351 = vrot.lane.b32.xlu0 %v2309, 64
        %v2352 = vpop.permute.xlu0 %2351
        %2353 = vrot.lane.b32.xlu0 %v2310, 64
        %v2354 = vpop.permute.xlu0 %2353
        %2355 = vrot.lane.b32.xlu0 %v2311, 64
        %v2356 = vpop.permute.xlu0 %2355
        %2357 = vrot.lane.b32.xlu0 %v2312, 64
        %v2358 = vpop.permute.xlu0 %2357
        %2359 = vrot.lane.b32.xlu0 %v2313, 64
        %v2360 = vpop.permute.xlu0 %2359
        %2361 = vrot.lane.b32.xlu0 %v2314, 64
        %v2362 = vpop.permute.xlu0 %2361
        %v2379 = vadd.f32 %v2267, %v2332
        %v2380 = vadd.f32 %v2268, %v2334
        %v2381 = vadd.f32 %v2269, %v2336
        %v2382 = vadd.f32 %v2270, %v2338
        %v2383 = vadd.f32 %v2271, %v2340
        %v2384 = vadd.f32 %v2272, %v2342
        %v2385 = vadd.f32 %v2273, %v2344
        %v2386 = vadd.f32 %v2274, %v2346
        %v2387 = vadd.f32 %v2275, %v2348
        %v2388 = vadd.f32 %v2276, %v2350
        %v2389 = vadd.f32 %v2277, %v2352
        %v2390 = vadd.f32 %v2278, %v2354
        %v2391 = vadd.f32 %v2279, %v2356
        %v2392 = vadd.f32 %v2280, %v2358
        %v2393 = vadd.f32 %v2281, %v2360
        %v2394 = vadd.f32 %v2282, %v2362
        %v2395 = vmul.f32 %v1292, %v1626
        %v2396 = vmul.f32 %v1296, %v1627
        %v2397 = vmul.f32 %v1302, %v1628
        %v2398 = vmul.f32 %v1306, %v1629
        %v2399 = vmul.f32 %v1312, %v1630
        %v2400 = vmul.f32 %v1316, %v1631
        %v2401 = vmul.f32 %v1322, %v1632
        %v2402 = vmul.f32 %v1326, %v1633
        %v2403 = vmul.f32 %v1332, %v1634
        %v2404 = vmul.f32 %v1336, %v1635
        %v2405 = vmul.f32 %v1342, %v1636
        %v2406 = vmul.f32 %v1346, %v1637
        %v2407 = vmul.f32 %v1352, %v1638
        %v2408 = vmul.f32 %v1356, %v1639
        %v2409 = vmul.f32 %v1362, %v1640
        %v2410 = vmul.f32 %v1366, %v1641
        %2427 = vrot.lane.b32.xlu0 %v1292, 96
        %v2428 = vpop.permute.xlu0 %2427
        %2429 = vrot.lane.b32.xlu0 %v1296, 96
        %v2430 = vpop.permute.xlu0 %2429
        %2431 = vrot.lane.b32.xlu0 %v1302, 96
        %v2432 = vpop.permute.xlu0 %2431
        %2433 = vrot.lane.b32.xlu0 %v1306, 96
        %v2434 = vpop.permute.xlu0 %2433
        %2435 = vrot.lane.b32.xlu0 %v1312, 96
        %v2436 = vpop.permute.xlu0 %2435
        %2437 = vrot.lane.b32.xlu0 %v1316, 96
        %v2438 = vpop.permute.xlu0 %2437
        %2439 = vrot.lane.b32.xlu0 %v1322, 96
        %v2440 = vpop.permute.xlu0 %2439
        %2441 = vrot.lane.b32.xlu0 %v1326, 96
        %v2442 = vpop.permute.xlu0 %2441
        %2443 = vrot.lane.b32.xlu0 %v1332, 96
        %v2444 = vpop.permute.xlu0 %2443
        %2445 = vrot.lane.b32.xlu0 %v1336, 96
        %v2446 = vpop.permute.xlu0 %2445
        %2447 = vrot.lane.b32.xlu0 %v1342, 96
        %v2448 = vpop.permute.xlu0 %2447
        %2449 = vrot.lane.b32.xlu0 %v1346, 96
        %v2450 = vpop.permute.xlu0 %2449
        %2451 = vrot.lane.b32.xlu0 %v1352, 96
        %v2452 = vpop.permute.xlu0 %2451
        %2453 = vrot.lane.b32.xlu0 %v1356, 96
        %v2454 = vpop.permute.xlu0 %2453
        %2455 = vrot.lane.b32.xlu0 %v1362, 96
        %v2456 = vpop.permute.xlu0 %2455
        %2457 = vrot.lane.b32.xlu0 %v1366, 96
        %v2458 = vpop.permute.xlu0 %2457
        %2475 = vrot.lane.b32.xlu0 %v1292, 32
        %v2476 = vpop.permute.xlu0 %2475
        %2477 = vrot.lane.b32.xlu0 %v1296, 32
        %v2478 = vpop.permute.xlu0 %2477
        %2479 = vrot.lane.b32.xlu0 %v1302, 32
        %v2480 = vpop.permute.xlu0 %2479
        %2481 = vrot.lane.b32.xlu0 %v1306, 32
        %v2482 = vpop.permute.xlu0 %2481
        %2483 = vrot.lane.b32.xlu0 %v1312, 32
        %v2484 = vpop.permute.xlu0 %2483
        %2485 = vrot.lane.b32.xlu0 %v1316, 32
        %v2486 = vpop.permute.xlu0 %2485
        %2487 = vrot.lane.b32.xlu0 %v1322, 32
        %v2488 = vpop.permute.xlu0 %2487
        %2489 = vrot.lane.b32.xlu0 %v1326, 32
        %v2490 = vpop.permute.xlu0 %2489
        %2491 = vrot.lane.b32.xlu0 %v1332, 32
        %v2492 = vpop.permute.xlu0 %2491
        %2493 = vrot.lane.b32.xlu0 %v1336, 32
        %v2494 = vpop.permute.xlu0 %2493
        %2495 = vrot.lane.b32.xlu0 %v1342, 32
        %v2496 = vpop.permute.xlu0 %2495
        %2497 = vrot.lane.b32.xlu0 %v1346, 32
        %v2498 = vpop.permute.xlu0 %2497
        %2499 = vrot.lane.b32.xlu0 %v1352, 32
        %v2500 = vpop.permute.xlu0 %2499
        %2501 = vrot.lane.b32.xlu0 %v1356, 32
        %v2502 = vpop.permute.xlu0 %2501
        %2503 = vrot.lane.b32.xlu0 %v1362, 32
        %v2504 = vpop.permute.xlu0 %2503
        %2505 = vrot.lane.b32.xlu0 %v1366, 32
        %v2506 = vpop.permute.xlu0 %2505
        %v2523 = vsel %vm1786, %v2428, %v2476
        %v2524 = vsel %vm1786, %v2430, %v2478
        %v2525 = vsel %vm1786, %v2432, %v2480
        %v2526 = vsel %vm1786, %v2434, %v2482
        %v2527 = vsel %vm1786, %v2436, %v2484
        %v2528 = vsel %vm1786, %v2438, %v2486
        %v2529 = vsel %vm1786, %v2440, %v2488
        %v2530 = vsel %vm1786, %v2442, %v2490
        %v2531 = vsel %vm1786, %v2444, %v2492
        %v2532 = vsel %vm1786, %v2446, %v2494
        %v2533 = vsel %vm1786, %v2448, %v2496
        %v2534 = vsel %vm1786, %v2450, %v2498
        %v2535 = vsel %vm1786, %v2452, %v2500
        %v2536 = vsel %vm1786, %v2454, %v2502
        %v2537 = vsel %vm1786, %v2456, %v2504
        %v2538 = vsel %vm1786, %v2458, %v2506
        %v2539 = vmul.f32 %v2523, %v1642
        %v2540 = vmul.f32 %v2524, %v1643
        %v2541 = vmul.f32 %v2525, %v1644
        %v2542 = vmul.f32 %v2526, %v1645
        %v2543 = vmul.f32 %v2527, %v1646
        %v2544 = vmul.f32 %v2528, %v1647
        %v2545 = vmul.f32 %v2529, %v1648
        %v2546 = vmul.f32 %v2530, %v1649
        %v2547 = vmul.f32 %v2531, %v1650
        %v2548 = vmul.f32 %v2532, %v1651
        %v2549 = vmul.f32 %v2533, %v1652
        %v2550 = vmul.f32 %v2534, %v1653
        %v2551 = vmul.f32 %v2535, %v1654
        %v2552 = vmul.f32 %v2536, %v1655
        %v2553 = vmul.f32 %v2537, %v1656
        %v2554 = vmul.f32 %v2538, %v1657
        %v2555 = vadd.f32 %v2395, %v2539
        %v2556 = vadd.f32 %v2396, %v2540
        %v2557 = vadd.f32 %v2397, %v2541
        %v2558 = vadd.f32 %v2398, %v2542
        %v2559 = vadd.f32 %v2399, %v2543
        %v2560 = vadd.f32 %v2400, %v2544
        %v2561 = vadd.f32 %v2401, %v2545
        %v2562 = vadd.f32 %v2402, %v2546
        %v2563 = vadd.f32 %v2403, %v2547
        %v2564 = vadd.f32 %v2404, %v2548
        %v2565 = vadd.f32 %v2405, %v2549
        %v2566 = vadd.f32 %v2406, %v2550
        %v2567 = vadd.f32 %v2407, %v2551
        %v2568 = vadd.f32 %v2408, %v2552
        %v2569 = vadd.f32 %v2409, %v2553
        %v2570 = vadd.f32 %v2410, %v2554
        %v2571 = vmul.f32 %v1405, %v1594
        %v2572 = vmul.f32 %v1409, %v1595
        %v2573 = vmul.f32 %v1415, %v1596
        %v2574 = vmul.f32 %v1419, %v1597
        %v2575 = vmul.f32 %v1425, %v1598
        %v2576 = vmul.f32 %v1429, %v1599
        %v2577 = vmul.f32 %v1435, %v1600
        %v2578 = vmul.f32 %v1439, %v1601
        %v2579 = vmul.f32 %v1445, %v1602
        %v2580 = vmul.f32 %v1449, %v1603
        %v2581 = vmul.f32 %v1455, %v1604
        %v2582 = vmul.f32 %v1459, %v1605
        %v2583 = vmul.f32 %v1465, %v1606
        %v2584 = vmul.f32 %v1469, %v1607
        %v2585 = vmul.f32 %v1475, %v1608
        %v2586 = vmul.f32 %v1479, %v1609
        %2603 = vrot.lane.b32.xlu0 %v1405, 96
        %v2604 = vpop.permute.xlu0 %2603
        %2605 = vrot.lane.b32.xlu0 %v1409, 96
        %v2606 = vpop.permute.xlu0 %2605
        %2607 = vrot.lane.b32.xlu0 %v1415, 96
        %v2608 = vpop.permute.xlu0 %2607
        %2609 = vrot.lane.b32.xlu0 %v1419, 96
        %v2610 = vpop.permute.xlu0 %2609
        %2611 = vrot.lane.b32.xlu0 %v1425, 96
        %v2612 = vpop.permute.xlu0 %2611
        %2613 = vrot.lane.b32.xlu0 %v1429, 96
        %v2614 = vpop.permute.xlu0 %2613
        %2615 = vrot.lane.b32.xlu0 %v1435, 96
        %v2616 = vpop.permute.xlu0 %2615
        %2617 = vrot.lane.b32.xlu0 %v1439, 96
        %v2618 = vpop.permute.xlu0 %2617
        %2619 = vrot.lane.b32.xlu0 %v1445, 96
        %v2620 = vpop.permute.xlu0 %2619
        %2621 = vrot.lane.b32.xlu0 %v1449, 96
        %v2622 = vpop.permute.xlu0 %2621
        %2623 = vrot.lane.b32.xlu0 %v1455, 96
        %v2624 = vpop.permute.xlu0 %2623
        %2625 = vrot.lane.b32.xlu0 %v1459, 96
        %v2626 = vpop.permute.xlu0 %2625
        %2627 = vrot.lane.b32.xlu0 %v1465, 96
        %v2628 = vpop.permute.xlu0 %2627
        %2629 = vrot.lane.b32.xlu0 %v1469, 96
        %v2630 = vpop.permute.xlu0 %2629
        %2631 = vrot.lane.b32.xlu0 %v1475, 96
        %v2632 = vpop.permute.xlu0 %2631
        %2633 = vrot.lane.b32.xlu0 %v1479, 96
        %v2634 = vpop.permute.xlu0 %2633
        %2651 = vrot.lane.b32.xlu0 %v1405, 32
        %v2652 = vpop.permute.xlu0 %2651
        %2653 = vrot.lane.b32.xlu0 %v1409, 32
        %v2654 = vpop.permute.xlu0 %2653
        %2655 = vrot.lane.b32.xlu0 %v1415, 32
        %v2656 = vpop.permute.xlu0 %2655
        %2657 = vrot.lane.b32.xlu0 %v1419, 32
        %v2658 = vpop.permute.xlu0 %2657
        %2659 = vrot.lane.b32.xlu0 %v1425, 32
        %v2660 = vpop.permute.xlu0 %2659
        %2661 = vrot.lane.b32.xlu0 %v1429, 32
        %v2662 = vpop.permute.xlu0 %2661
        %2663 = vrot.lane.b32.xlu0 %v1435, 32
        %v2664 = vpop.permute.xlu0 %2663
        %2665 = vrot.lane.b32.xlu0 %v1439, 32
        %v2666 = vpop.permute.xlu0 %2665
        %2667 = vrot.lane.b32.xlu0 %v1445, 32
        %v2668 = vpop.permute.xlu0 %2667
        %2669 = vrot.lane.b32.xlu0 %v1449, 32
        %v2670 = vpop.permute.xlu0 %2669
        %2671 = vrot.lane.b32.xlu0 %v1455, 32
        %v2672 = vpop.permute.xlu0 %2671
        %2673 = vrot.lane.b32.xlu0 %v1459, 32
        %v2674 = vpop.permute.xlu0 %2673
        %2675 = vrot.lane.b32.xlu0 %v1465, 32
        %v2676 = vpop.permute.xlu0 %2675
        %2677 = vrot.lane.b32.xlu0 %v1469, 32
        %v2678 = vpop.permute.xlu0 %2677
        %2679 = vrot.lane.b32.xlu0 %v1475, 32
        %v2680 = vpop.permute.xlu0 %2679
        %2681 = vrot.lane.b32.xlu0 %v1479, 32
        %v2682 = vpop.permute.xlu0 %2681
        %v2699 = vsel %vm1786, %v2604, %v2652
        %v2700 = vsel %vm1786, %v2606, %v2654
        %v2701 = vsel %vm1786, %v2608, %v2656
        %v2702 = vsel %vm1786, %v2610, %v2658
        %v2703 = vsel %vm1786, %v2612, %v2660
        %v2704 = vsel %vm1786, %v2614, %v2662
        %v2705 = vsel %vm1786, %v2616, %v2664
        %v2706 = vsel %vm1786, %v2618, %v2666
        %v2707 = vsel %vm1786, %v2620, %v2668
        %v2708 = vsel %vm1786, %v2622, %v2670
        %v2709 = vsel %vm1786, %v2624, %v2672
        %v2710 = vsel %vm1786, %v2626, %v2674
        %v2711 = vsel %vm1786, %v2628, %v2676
        %v2712 = vsel %vm1786, %v2630, %v2678
        %v2713 = vsel %vm1786, %v2632, %v2680
        %v2714 = vsel %vm1786, %v2634, %v2682
        %v2715 = vmul.f32 %v2699, %v1610
        %v2716 = vmul.f32 %v2700, %v1611
        %v2717 = vmul.f32 %v2701, %v1612
        %v2718 = vmul.f32 %v2702, %v1613
        %v2719 = vmul.f32 %v2703, %v1614
        %v2720 = vmul.f32 %v2704, %v1615
        %v2721 = vmul.f32 %v2705, %v1616
        %v2722 = vmul.f32 %v2706, %v1617
        %v2723 = vmul.f32 %v2707, %v1618
        %v2724 = vmul.f32 %v2708, %v1619
        %v2725 = vmul.f32 %v2709, %v1620
        %v2726 = vmul.f32 %v2710, %v1621
        %v2727 = vmul.f32 %v2711, %v1622
        %v2728 = vmul.f32 %v2712, %v1623
        %v2729 = vmul.f32 %v2713, %v1624
        %v2730 = vmul.f32 %v2714, %v1625
        %v2731 = vadd.f32 %v2571, %v2715
        %v2732 = vadd.f32 %v2572, %v2716
        %v2733 = vadd.f32 %v2573, %v2717
        %v2734 = vadd.f32 %v2574, %v2718
        %v2735 = vadd.f32 %v2575, %v2719
        %v2736 = vadd.f32 %v2576, %v2720
        %v2737 = vadd.f32 %v2577, %v2721
        %v2738 = vadd.f32 %v2578, %v2722
        %v2739 = vadd.f32 %v2579, %v2723
        %v2740 = vadd.f32 %v2580, %v2724
        %v2741 = vadd.f32 %v2581, %v2725
        %v2742 = vadd.f32 %v2582, %v2726
        %v2743 = vadd.f32 %v2583, %v2727
        %v2744 = vadd.f32 %v2584, %v2728
        %v2745 = vadd.f32 %v2585, %v2729
        %v2746 = vadd.f32 %v2586, %v2730
        %v2747 = vmul.f32 %v1292, %v2028
        %v2748 = vmul.f32 %v1296, %v2030
        %v2749 = vmul.f32 %v1302, %v2032
        %v2750 = vmul.f32 %v1306, %v2034
        %v2751 = vmul.f32 %v1312, %v2036
        %v2752 = vmul.f32 %v1316, %v2038
        %v2753 = vmul.f32 %v1322, %v2040
        %v2754 = vmul.f32 %v1326, %v2042
        %v2755 = vmul.f32 %v1332, %v2044
        %v2756 = vmul.f32 %v1336, %v2046
        %v2757 = vmul.f32 %v1342, %v2048
        %v2758 = vmul.f32 %v1346, %v2050
        %v2759 = vmul.f32 %v1352, %v2052
        %v2760 = vmul.f32 %v1356, %v2054
        %v2761 = vmul.f32 %v1362, %v2056
        %v2762 = vmul.f32 %v1366, %v2058
        %v2763 = vsel %vm1786, %v2476, %v2428
        %v2764 = vsel %vm1786, %v2478, %v2430
        %v2765 = vsel %vm1786, %v2480, %v2432
        %v2766 = vsel %vm1786, %v2482, %v2434
        %v2767 = vsel %vm1786, %v2484, %v2436
        %v2768 = vsel %vm1786, %v2486, %v2438
        %v2769 = vsel %vm1786, %v2488, %v2440
        %v2770 = vsel %vm1786, %v2490, %v2442
        %v2771 = vsel %vm1786, %v2492, %v2444
        %v2772 = vsel %vm1786, %v2494, %v2446
        %v2773 = vsel %vm1786, %v2496, %v2448
        %v2774 = vsel %vm1786, %v2498, %v2450
        %v2775 = vsel %vm1786, %v2500, %v2452
        %v2776 = vsel %vm1786, %v2502, %v2454
        %v2777 = vsel %vm1786, %v2504, %v2456
        %v2778 = vsel %vm1786, %v2506, %v2458
        %v2779 = vmul.f32 %v2763, %v1642
        %v2780 = vmul.f32 %v2764, %v1643
        %v2781 = vmul.f32 %v2765, %v1644
        %v2782 = vmul.f32 %v2766, %v1645
        %v2783 = vmul.f32 %v2767, %v1646
        %v2784 = vmul.f32 %v2768, %v1647
        %v2785 = vmul.f32 %v2769, %v1648
        %v2786 = vmul.f32 %v2770, %v1649
        %v2787 = vmul.f32 %v2771, %v1650
        %v2788 = vmul.f32 %v2772, %v1651
        %v2789 = vmul.f32 %v2773, %v1652
        %v2790 = vmul.f32 %v2774, %v1653
        %v2791 = vmul.f32 %v2775, %v1654
        %v2792 = vmul.f32 %v2776, %v1655
        %v2793 = vmul.f32 %v2777, %v1656
        %v2794 = vmul.f32 %v2778, %v1657
        %2811 = vrot.lane.b32.xlu0 %v2779, 64
        %v2812 = vpop.permute.xlu0 %2811
        %2813 = vrot.lane.b32.xlu0 %v2780, 64
        %v2814 = vpop.permute.xlu0 %2813
        %2815 = vrot.lane.b32.xlu0 %v2781, 64
        %v2816 = vpop.permute.xlu0 %2815
        %2817 = vrot.lane.b32.xlu0 %v2782, 64
        %v2818 = vpop.permute.xlu0 %2817
        %2819 = vrot.lane.b32.xlu0 %v2783, 64
        %v2820 = vpop.permute.xlu0 %2819
        %2821 = vrot.lane.b32.xlu0 %v2784, 64
        %v2822 = vpop.permute.xlu0 %2821
        %2823 = vrot.lane.b32.xlu0 %v2785, 64
        %v2824 = vpop.permute.xlu0 %2823
        %2825 = vrot.lane.b32.xlu0 %v2786, 64
        %v2826 = vpop.permute.xlu0 %2825
        %2827 = vrot.lane.b32.xlu0 %v2787, 64
        %v2828 = vpop.permute.xlu0 %2827
        %2829 = vrot.lane.b32.xlu0 %v2788, 64
        %v2830 = vpop.permute.xlu0 %2829
        %2831 = vrot.lane.b32.xlu0 %v2789, 64
        %v2832 = vpop.permute.xlu0 %2831
        %2833 = vrot.lane.b32.xlu0 %v2790, 64
        %v2834 = vpop.permute.xlu0 %2833
        %2835 = vrot.lane.b32.xlu0 %v2791, 64
        %v2836 = vpop.permute.xlu0 %2835
        %2837 = vrot.lane.b32.xlu0 %v2792, 64
        %v2838 = vpop.permute.xlu0 %2837
        %2839 = vrot.lane.b32.xlu0 %v2793, 64
        %v2840 = vpop.permute.xlu0 %2839
        %2841 = vrot.lane.b32.xlu0 %v2794, 64
        %v2842 = vpop.permute.xlu0 %2841
        %v2859 = vadd.f32 %v2747, %v2812
        %v2860 = vadd.f32 %v2748, %v2814
        %v2861 = vadd.f32 %v2749, %v2816
        %v2862 = vadd.f32 %v2750, %v2818
        %v2863 = vadd.f32 %v2751, %v2820
        %v2864 = vadd.f32 %v2752, %v2822
        %v2865 = vadd.f32 %v2753, %v2824
        %v2866 = vadd.f32 %v2754, %v2826
        %v2867 = vadd.f32 %v2755, %v2828
        %v2868 = vadd.f32 %v2756, %v2830
        %v2869 = vadd.f32 %v2757, %v2832
        %v2870 = vadd.f32 %v2758, %v2834
        %v2871 = vadd.f32 %v2759, %v2836
        %v2872 = vadd.f32 %v2760, %v2838
        %v2873 = vadd.f32 %v2761, %v2840
        %v2874 = vadd.f32 %v2762, %v2842
        %v2875 = vmul.f32 %v1405, %v2220
        %v2876 = vmul.f32 %v1409, %v2222
        %v2877 = vmul.f32 %v1415, %v2224
        %v2878 = vmul.f32 %v1419, %v2226
        %v2879 = vmul.f32 %v1425, %v2228
        %v2880 = vmul.f32 %v1429, %v2230
        %v2881 = vmul.f32 %v1435, %v2232
        %v2882 = vmul.f32 %v1439, %v2234
        %v2883 = vmul.f32 %v1445, %v2236
        %v2884 = vmul.f32 %v1449, %v2238
        %v2885 = vmul.f32 %v1455, %v2240
        %v2886 = vmul.f32 %v1459, %v2242
        %v2887 = vmul.f32 %v1465, %v2244
        %v2888 = vmul.f32 %v1469, %v2246
        %v2889 = vmul.f32 %v1475, %v2248
        %v2890 = vmul.f32 %v1479, %v2250
        %v2891 = vsel %vm1786, %v2652, %v2604
        %v2892 = vsel %vm1786, %v2654, %v2606
        %v2893 = vsel %vm1786, %v2656, %v2608
        %v2894 = vsel %vm1786, %v2658, %v2610
        %v2895 = vsel %vm1786, %v2660, %v2612
        %v2896 = vsel %vm1786, %v2662, %v2614
        %v2897 = vsel %vm1786, %v2664, %v2616
        %v2898 = vsel %vm1786, %v2666, %v2618
        %v2899 = vsel %vm1786, %v2668, %v2620
        %v2900 = vsel %vm1786, %v2670, %v2622
        %v2901 = vsel %vm1786, %v2672, %v2624
        %v2902 = vsel %vm1786, %v2674, %v2626
        %v2903 = vsel %vm1786, %v2676, %v2628
        %v2904 = vsel %vm1786, %v2678, %v2630
        %v2905 = vsel %vm1786, %v2680, %v2632
        %v2906 = vsel %vm1786, %v2682, %v2634
        %v2907 = vmul.f32 %v2891, %v1610
        %v2908 = vmul.f32 %v2892, %v1611
        %v2909 = vmul.f32 %v2893, %v1612
        %v2910 = vmul.f32 %v2894, %v1613
        %v2911 = vmul.f32 %v2895, %v1614
        %v2912 = vmul.f32 %v2896, %v1615
        %v2913 = vmul.f32 %v2897, %v1616
        %v2914 = vmul.f32 %v2898, %v1617
        %v2915 = vmul.f32 %v2899, %v1618
        %v2916 = vmul.f32 %v2900, %v1619
        %v2917 = vmul.f32 %v2901, %v1620
        %v2918 = vmul.f32 %v2902, %v1621
        %v2919 = vmul.f32 %v2903, %v1622
        %v2920 = vmul.f32 %v2904, %v1623
        %v2921 = vmul.f32 %v2905, %v1624
        %v2922 = vmul.f32 %v2906, %v1625
        %2939 = vrot.lane.b32.xlu0 %v2907, 64
        %v2940 = vpop.permute.xlu0 %2939
        %2941 = vrot.lane.b32.xlu0 %v2908, 64
        %v2942 = vpop.permute.xlu0 %2941
        %2943 = vrot.lane.b32.xlu0 %v2909, 64
        %v2944 = vpop.permute.xlu0 %2943
        %2945 = vrot.lane.b32.xlu0 %v2910, 64
        %v2946 = vpop.permute.xlu0 %2945
        %2947 = vrot.lane.b32.xlu0 %v2911, 64
        %v2948 = vpop.permute.xlu0 %2947
        %2949 = vrot.lane.b32.xlu0 %v2912, 64
        %v2950 = vpop.permute.xlu0 %2949
        %2951 = vrot.lane.b32.xlu0 %v2913, 64
        %v2952 = vpop.permute.xlu0 %2951
        %2953 = vrot.lane.b32.xlu0 %v2914, 64
        %v2954 = vpop.permute.xlu0 %2953
        %2955 = vrot.lane.b32.xlu0 %v2915, 64
        %v2956 = vpop.permute.xlu0 %2955
        %2957 = vrot.lane.b32.xlu0 %v2916, 64
        %v2958 = vpop.permute.xlu0 %2957
        %2959 = vrot.lane.b32.xlu0 %v2917, 64
        %v2960 = vpop.permute.xlu0 %2959
        %2961 = vrot.lane.b32.xlu0 %v2918, 64
        %v2962 = vpop.permute.xlu0 %2961
        %2963 = vrot.lane.b32.xlu0 %v2919, 64
        %v2964 = vpop.permute.xlu0 %2963
        %2965 = vrot.lane.b32.xlu0 %v2920, 64
        %v2966 = vpop.permute.xlu0 %2965
        %2967 = vrot.lane.b32.xlu0 %v2921, 64
        %v2968 = vpop.permute.xlu0 %2967
        %2969 = vrot.lane.b32.xlu0 %v2922, 64
        %v2970 = vpop.permute.xlu0 %2969
        %v2987 = vadd.f32 %v2875, %v2940
        %v2988 = vadd.f32 %v2876, %v2942
        %v2989 = vadd.f32 %v2877, %v2944
        %v2990 = vadd.f32 %v2878, %v2946
        %v2991 = vadd.f32 %v2879, %v2948
        %v2992 = vadd.f32 %v2880, %v2950
        %v2993 = vadd.f32 %v2881, %v2952
        %v2994 = vadd.f32 %v2882, %v2954
        %v2995 = vadd.f32 %v2883, %v2956
        %v2996 = vadd.f32 %v2884, %v2958
        %v2997 = vadd.f32 %v2885, %v2960
        %v2998 = vadd.f32 %v2886, %v2962
        %v2999 = vadd.f32 %v2887, %v2964
        %v3000 = vadd.f32 %v2888, %v2966
        %v3001 = vadd.f32 %v2889, %v2968
        %v3002 = vadd.f32 %v2890, %v2970
        %vm3003 = vcmask 523264
        %v3004 = vsel %vm3003, %v1819, %v2187
        %v3005 = vsel %vm3003, %v1820, %v2188
        %v3006 = vsel %vm3003, %v1821, %v2189
        %v3007 = vsel %vm3003, %v1822, %v2190
        %v3008 = vsel %vm3003, %v1823, %v2191
        %v3009 = vsel %vm3003, %v1824, %v2192
        %v3010 = vsel %vm3003, %v1825, %v2193
        %v3011 = vsel %vm3003, %v1826, %v2194
        %v3012 = vsel %vm3003, %v1827, %v2195
        %v3013 = vsel %vm3003, %v1828, %v2196
        %v3014 = vsel %vm3003, %v1829, %v2197
        %v3015 = vsel %vm3003, %v1830, %v2198
        %v3016 = vsel %vm3003, %v1831, %v2199
        %v3017 = vsel %vm3003, %v1832, %v2200
        %v3018 = vsel %vm3003, %v1833, %v2201
        %v3019 = vsel %vm3003, %v1834, %v2202
        %v3020 = vsel %vm3003, %v2555, %v2859
        %v3021 = vsel %vm3003, %v2556, %v2860
        %v3022 = vsel %vm3003, %v2557, %v2861
        %v3023 = vsel %vm3003, %v2558, %v2862
        %v3024 = vsel %vm3003, %v2559, %v2863
        %v3025 = vsel %vm3003, %v2560, %v2864
        %v3026 = vsel %vm3003, %v2561, %v2865
        %v3027 = vsel %vm3003, %v2562, %v2866
        %v3028 = vsel %vm3003, %v2563, %v2867
        %v3029 = vsel %vm3003, %v2564, %v2868
        %v3030 = vsel %vm3003, %v2565, %v2869
        %v3031 = vsel %vm3003, %v2566, %v2870
        %v3032 = vsel %vm3003, %v2567, %v2871
        %v3033 = vsel %vm3003, %v2568, %v2872
        %v3034 = vsel %vm3003, %v2569, %v2873
        %v3035 = vsel %vm3003, %v2570, %v2874
        %v3036 = vpack.c.bf16 %v3005, %v3004
        %v3037 = vpack.c.bf16 %v3021, %v3020
        %v3038 = vpack.c.bf16 %v3007, %v3006
        %v3039 = vpack.c.bf16 %v3023, %v3022
        %v3040 = vpack.c.bf16 %v3009, %v3008
        %v3041 = vpack.c.bf16 %v3025, %v3024
        %v3042 = vpack.c.bf16 %v3011, %v3010
        %v3043 = vpack.c.bf16 %v3027, %v3026
        %v3044 = vpack.c.bf16 %v3013, %v3012
        %v3045 = vpack.c.bf16 %v3029, %v3028
        %v3046 = vpack.c.bf16 %v3015, %v3014
        %v3047 = vpack.c.bf16 %v3031, %v3030
        %v3048 = vpack.c.bf16 %v3017, %v3016
        %v3049 = vpack.c.bf16 %v3033, %v3032
        %v3050 = vpack.c.bf16 %v3019, %v3018
        %v3051 = vpack.c.bf16 %v3035, %v3034
        %v3068 = vunpack.c.l.b16 %v3036
        %v3069 = vunpack.c.l.b16 %v3037
        %v3070 = vunpack.c.h.b16 %v3036
        %v3071 = vunpack.c.h.b16 %v3037
        %v3072 = vunpack.c.l.b16 %v3038
        %v3073 = vunpack.c.l.b16 %v3039
        %v3074 = vunpack.c.h.b16 %v3038
        %v3075 = vunpack.c.h.b16 %v3039
        %v3076 = vunpack.c.l.b16 %v3040
        %v3077 = vunpack.c.l.b16 %v3041
        %v3078 = vunpack.c.h.b16 %v3040
        %v3079 = vunpack.c.h.b16 %v3041
        %v3080 = vunpack.c.l.b16 %v3042
        %v3081 = vunpack.c.l.b16 %v3043
        %v3082 = vunpack.c.h.b16 %v3042
        %v3083 = vunpack.c.h.b16 %v3043
        %v3084 = vunpack.c.l.b16 %v3044
        %v3085 = vunpack.c.l.b16 %v3045
        %v3086 = vunpack.c.h.b16 %v3044
        %v3087 = vunpack.c.h.b16 %v3045
        %v3088 = vunpack.c.l.b16 %v3046
        %v3089 = vunpack.c.l.b16 %v3047
        %v3090 = vunpack.c.h.b16 %v3046
        %v3091 = vunpack.c.h.b16 %v3047
        %v3092 = vunpack.c.l.b16 %v3048
        %v3093 = vunpack.c.l.b16 %v3049
        %v3094 = vunpack.c.h.b16 %v3048
        %v3095 = vunpack.c.h.b16 %v3049
        %v3096 = vunpack.c.l.b16 %v3050
        %v3097 = vunpack.c.l.b16 %v3051
        %v3098 = vunpack.c.h.b16 %v3050
        %v3099 = vunpack.c.h.b16 %v3051
        %v3100 = vpack.c.b16 %v3069, %v3068
        %v3101 = vpack.c.b16 %v3071, %v3070
        %v3102 = vpack.c.b16 %v3073, %v3072
        %v3103 = vpack.c.b16 %v3075, %v3074
        %v3104 = vpack.c.b16 %v3077, %v3076
        %v3105 = vpack.c.b16 %v3079, %v3078
        %v3106 = vpack.c.b16 %v3081, %v3080
        %v3107 = vpack.c.b16 %v3083, %v3082
        %v3108 = vpack.c.b16 %v3085, %v3084
        %v3109 = vpack.c.b16 %v3087, %v3086
        %v3110 = vpack.c.b16 %v3089, %v3088
        %v3111 = vpack.c.b16 %v3091, %v3090
        %v3112 = vpack.c.b16 %v3093, %v3092
        %v3113 = vpack.c.b16 %v3095, %v3094
        %v3114 = vpack.c.b16 %v3097, %v3096
        %v3115 = vpack.c.b16 %v3099, %v3098
        %3132 = vst [vmem:[%s405] sm:$0xff] %v3100
        %3133 = vst [vmem:[%s405 + $0x8] sm:$0xff] %v3101
        %3134 = vst [vmem:[%s405 + $0x10] sm:$0xff] %v3102
        %3135 = vst [vmem:[%s405 + $0x18] sm:$0xff] %v3103
        %3136 = vst [vmem:[%s405 + $0x20] sm:$0xff] %v3104
        %3137 = vst [vmem:[%s405 + $0x28] sm:$0xff] %v3105
        %3138 = vst [vmem:[%s405 + $0x30] sm:$0xff] %v3106
        %3139 = vst [vmem:[%s405 + $0x38] sm:$0xff] %v3107
        %3140 = vst [vmem:[%s405 + $0x40] sm:$0xff] %v3108
        %3141 = vst [vmem:[%s405 + $0x48] sm:$0xff] %v3109
        %3142 = vst [vmem:[%s405 + $0x50] sm:$0xff] %v3110
        %3143 = vst [vmem:[%s405 + $0x58] sm:$0xff] %v3111
        %3144 = vst [vmem:[%s405 + $0x60] sm:$0xff] %v3112
        %3145 = vst [vmem:[%s405 + $0x68] sm:$0xff] %v3113
        %3146 = vst [vmem:[%s405 + $0x70] sm:$0xff] %v3114
        %3147 = vst [vmem:[%s405 + $0x78] sm:$0xff] %v3115
        %v3148 = vsel %vm3003, %v1995, %v2379
        %v3149 = vsel %vm3003, %v1996, %v2380
        %v3150 = vsel %vm3003, %v1997, %v2381
        %v3151 = vsel %vm3003, %v1998, %v2382
        %v3152 = vsel %vm3003, %v1999, %v2383
        %v3153 = vsel %vm3003, %v2000, %v2384
        %v3154 = vsel %vm3003, %v2001, %v2385
        %v3155 = vsel %vm3003, %v2002, %v2386
        %v3156 = vsel %vm3003, %v2003, %v2387
        %v3157 = vsel %vm3003, %v2004, %v2388
        %v3158 = vsel %vm3003, %v2005, %v2389
        %v3159 = vsel %vm3003, %v2006, %v2390
        %v3160 = vsel %vm3003, %v2007, %v2391
        %v3161 = vsel %vm3003, %v2008, %v2392
        %v3162 = vsel %vm3003, %v2009, %v2393
        %v3163 = vsel %vm3003, %v2010, %v2394
        %v3164 = vsel %vm3003, %v2731, %v2987
        %v3165 = vsel %vm3003, %v2732, %v2988
        %v3166 = vsel %vm3003, %v2733, %v2989
        %v3167 = vsel %vm3003, %v2734, %v2990
        %v3168 = vsel %vm3003, %v2735, %v2991
        %v3169 = vsel %vm3003, %v2736, %v2992
        %v3170 = vsel %vm3003, %v2737, %v2993
        %v3171 = vsel %vm3003, %v2738, %v2994
        %v3172 = vsel %vm3003, %v2739, %v2995
        %v3173 = vsel %vm3003, %v2740, %v2996
        %v3174 = vsel %vm3003, %v2741, %v2997
        %v3175 = vsel %vm3003, %v2742, %v2998
        %v3176 = vsel %vm3003, %v2743, %v2999
        %v3177 = vsel %vm3003, %v2744, %v3000
        %v3178 = vsel %vm3003, %v2745, %v3001
        %v3179 = vsel %vm3003, %v2746, %v3002
        %v3180 = vpack.c.bf16 %v3149, %v3148
        %v3181 = vpack.c.bf16 %v3165, %v3164
        %v3182 = vpack.c.bf16 %v3151, %v3150
        %v3183 = vpack.c.bf16 %v3167, %v3166
        %v3184 = vpack.c.bf16 %v3153, %v3152
        %v3185 = vpack.c.bf16 %v3169, %v3168
        %v3186 = vpack.c.bf16 %v3155, %v3154
        %v3187 = vpack.c.bf16 %v3171, %v3170
        %v3188 = vpack.c.bf16 %v3157, %v3156
        %v3189 = vpack.c.bf16 %v3173, %v3172
        %v3190 = vpack.c.bf16 %v3159, %v3158
        %v3191 = vpack.c.bf16 %v3175, %v3174
        %v3192 = vpack.c.bf16 %v3161, %v3160
        %v3193 = vpack.c.bf16 %v3177, %v3176
        %v3194 = vpack.c.bf16 %v3163, %v3162
        %v3195 = vpack.c.bf16 %v3179, %v3178
        %v3212 = vunpack.c.l.b16 %v3180
        %v3213 = vunpack.c.l.b16 %v3181
        %v3214 = vunpack.c.h.b16 %v3180
        %v3215 = vunpack.c.h.b16 %v3181
        %v3216 = vunpack.c.l.b16 %v3182
        %v3217 = vunpack.c.l.b16 %v3183
        %v3218 = vunpack.c.h.b16 %v3182
        %v3219 = vunpack.c.h.b16 %v3183
        %v3220 = vunpack.c.l.b16 %v3184
        %v3221 = vunpack.c.l.b16 %v3185
        %v3222 = vunpack.c.h.b16 %v3184
        %v3223 = vunpack.c.h.b16 %v3185
        %v3224 = vunpack.c.l.b16 %v3186
        %v3225 = vunpack.c.l.b16 %v3187
        %v3226 = vunpack.c.h.b16 %v3186
        %v3227 = vunpack.c.h.b16 %v3187
        %v3228 = vunpack.c.l.b16 %v3188
        %v3229 = vunpack.c.l.b16 %v3189
        %v3230 = vunpack.c.h.b16 %v3188
        %v3231 = vunpack.c.h.b16 %v3189
        %v3232 = vunpack.c.l.b16 %v3190
        %v3233 = vunpack.c.l.b16 %v3191
        %v3234 = vunpack.c.h.b16 %v3190
        %v3235 = vunpack.c.h.b16 %v3191
        %v3236 = vunpack.c.l.b16 %v3192
        %v3237 = vunpack.c.l.b16 %v3193
        %v3238 = vunpack.c.h.b16 %v3192
        %v3239 = vunpack.c.h.b16 %v3193
        %v3240 = vunpack.c.l.b16 %v3194
        %v3241 = vunpack.c.l.b16 %v3195
        %v3242 = vunpack.c.h.b16 %v3194
        %v3243 = vunpack.c.h.b16 %v3195
        %v3244 = vpack.c.b16 %v3213, %v3212
        %v3245 = vpack.c.b16 %v3215, %v3214
        %v3246 = vpack.c.b16 %v3217, %v3216
        %v3247 = vpack.c.b16 %v3219, %v3218
        %v3248 = vpack.c.b16 %v3221, %v3220
        %v3249 = vpack.c.b16 %v3223, %v3222
        %v3250 = vpack.c.b16 %v3225, %v3224
        %v3251 = vpack.c.b16 %v3227, %v3226
        %v3252 = vpack.c.b16 %v3229, %v3228
        %v3253 = vpack.c.b16 %v3231, %v3230
        %v3254 = vpack.c.b16 %v3233, %v3232
        %v3255 = vpack.c.b16 %v3235, %v3234
        %v3256 = vpack.c.b16 %v3237, %v3236
        %v3257 = vpack.c.b16 %v3239, %v3238
        %v3258 = vpack.c.b16 %v3241, %v3240
        %v3259 = vpack.c.b16 %v3243, %v3242
        %3276 = vst [vmem:[%s412] sm:$0xff] %v3244
        %3277 = vst [vmem:[%s412 + $0x8] sm:$0xff] %v3245
        %3278 = vst [vmem:[%s412 + $0x10] sm:$0xff] %v3246
        %3279 = vst [vmem:[%s412 + $0x18] sm:$0xff] %v3247
        %3280 = vst [vmem:[%s412 + $0x20] sm:$0xff] %v3248
        %3281 = vst [vmem:[%s412 + $0x28] sm:$0xff] %v3249
        %3282 = vst [vmem:[%s412 + $0x30] sm:$0xff] %v3250
        %3283 = vst [vmem:[%s412 + $0x38] sm:$0xff] %v3251
        %3284 = vst [vmem:[%s412 + $0x40] sm:$0xff] %v3252
        %3285 = vst [vmem:[%s412 + $0x48] sm:$0xff] %v3253
        %3286 = vst [vmem:[%s412 + $0x50] sm:$0xff] %v3254
        %3287 = vst [vmem:[%s412 + $0x58] sm:$0xff] %v3255
        %3288 = vst [vmem:[%s412 + $0x60] sm:$0xff] %v3256
        %3289 = vst [vmem:[%s412 + $0x68] sm:$0xff] %v3257
        %3290 = vst [vmem:[%s412 + $0x70] sm:$0xff] %v3258
        %3291 = vst [vmem:[%s412 + $0x78] sm:$0xff] %v3259
        %v3292 = vpack.c.bf16 %v1520, %v1516
        %v3293 = vpack.c.bf16 %v1522, %v1518
        %v3294 = vpack.c.bf16 %v1530, %v1526
        %v3295 = vpack.c.bf16 %v1532, %v1528
        %v3296 = vpack.c.bf16 %v1540, %v1536
        %v3297 = vpack.c.bf16 %v1542, %v1538
        %v3298 = vpack.c.bf16 %v1550, %v1546
        %v3299 = vpack.c.bf16 %v1552, %v1548
        %v3300 = vpack.c.bf16 %v1560, %v1556
        %v3301 = vpack.c.bf16 %v1562, %v1558
        %v3302 = vpack.c.bf16 %v1570, %v1566
        %v3303 = vpack.c.bf16 %v1572, %v1568
        %v3304 = vpack.c.bf16 %v1580, %v1576
        %v3305 = vpack.c.bf16 %v1582, %v1578
        %v3306 = vpack.c.bf16 %v1590, %v1586
        %v3307 = vpack.c.bf16 %v1592, %v1588
        %v3324 = vunpack.c.l.b16 %v3292
        %v3325 = vunpack.c.l.b16 %v3293
        %v3326 = vunpack.c.h.b16 %v3292
        %v3327 = vunpack.c.h.b16 %v3293
        %v3328 = vunpack.c.l.b16 %v3294
        %v3329 = vunpack.c.l.b16 %v3295
        %v3330 = vunpack.c.h.b16 %v3294
        %v3331 = vunpack.c.h.b16 %v3295
        %v3332 = vunpack.c.l.b16 %v3296
        %v3333 = vunpack.c.l.b16 %v3297
        %v3334 = vunpack.c.h.b16 %v3296
        %v3335 = vunpack.c.h.b16 %v3297
        %v3336 = vunpack.c.l.b16 %v3298
        %v3337 = vunpack.c.l.b16 %v3299
        %v3338 = vunpack.c.h.b16 %v3298
        %v3339 = vunpack.c.h.b16 %v3299
        %v3340 = vunpack.c.l.b16 %v3300
        %v3341 = vunpack.c.l.b16 %v3301
        %v3342 = vunpack.c.h.b16 %v3300
        %v3343 = vunpack.c.h.b16 %v3301
        %v3344 = vunpack.c.l.b16 %v3302
        %v3345 = vunpack.c.l.b16 %v3303
        %v3346 = vunpack.c.h.b16 %v3302
        %v3347 = vunpack.c.h.b16 %v3303
        %v3348 = vunpack.c.l.b16 %v3304
        %v3349 = vunpack.c.l.b16 %v3305
        %v3350 = vunpack.c.h.b16 %v3304
        %v3351 = vunpack.c.h.b16 %v3305
        %v3352 = vunpack.c.l.b16 %v3306
        %v3353 = vunpack.c.l.b16 %v3307
        %v3354 = vunpack.c.h.b16 %v3306
        %v3355 = vunpack.c.h.b16 %v3307
        %v3356 = vpack.c.b16 %v3325, %v3324
        %v3357 = vpack.c.b16 %v3327, %v3326
        %v3358 = vpack.c.b16 %v3329, %v3328
        %v3359 = vpack.c.b16 %v3331, %v3330
        %v3360 = vpack.c.b16 %v3333, %v3332
        %v3361 = vpack.c.b16 %v3335, %v3334
        %v3362 = vpack.c.b16 %v3337, %v3336
        %v3363 = vpack.c.b16 %v3339, %v3338
        %v3364 = vpack.c.b16 %v3341, %v3340
        %v3365 = vpack.c.b16 %v3343, %v3342
        %v3366 = vpack.c.b16 %v3345, %v3344
        %v3367 = vpack.c.b16 %v3347, %v3346
        %v3368 = vpack.c.b16 %v3349, %v3348
        %v3369 = vpack.c.b16 %v3351, %v3350
        %v3370 = vpack.c.b16 %v3353, %v3352
        %v3371 = vpack.c.b16 %v3355, %v3354
        %3388 = vst [vmem:[%s419] sm:$0xff] %v3356
        %3389 = vst [vmem:[%s419 + $0x8] sm:$0xff] %v3357
        %3390 = vst [vmem:[%s419 + $0x10] sm:$0xff] %v3358
        %3391 = vst [vmem:[%s419 + $0x18] sm:$0xff] %v3359
        %3392 = vst [vmem:[%s419 + $0x20] sm:$0xff] %v3360
        %3393 = vst [vmem:[%s419 + $0x28] sm:$0xff] %v3361
        %3394 = vst [vmem:[%s419 + $0x30] sm:$0xff] %v3362
        %3395 = vst [vmem:[%s419 + $0x38] sm:$0xff] %v3363
        %3396 = vst [vmem:[%s419 + $0x40] sm:$0xff] %v3364
        %3397 = vst [vmem:[%s419 + $0x48] sm:$0xff] %v3365
        %3398 = vst [vmem:[%s419 + $0x50] sm:$0xff] %v3366
        %3399 = vst [vmem:[%s419 + $0x58] sm:$0xff] %v3367
        %3400 = vst [vmem:[%s419 + $0x60] sm:$0xff] %v3368
        %3401 = vst [vmem:[%s419 + $0x68] sm:$0xff] %v3369
        %3402 = vst [vmem:[%s419 + $0x70] sm:$0xff] %v3370
        %3403 = vst [vmem:[%s419 + $0x78] sm:$0xff] %v3371
        %s3404 = sand.u32 %s160, 1
        %s3405 = scalar_lea.sflag [#allocation4], %s3404
        %s3406 = sand.u32 %s160, 1
        %s3407 = smul.addr %s3406, 128
        %s3408 = scalar_lea.vmem [#allocation11], %s3407
        %s3409 = sand.u32 %s32, 1
        %s3410 = scalar_lea.sflag [#allocation13], %s3409
        %s3411 = sand.u32 %s186, 1
        %s3412 = smul.addr %s3411, 128
        %s3413 = scalar_lea.vmem [#allocation12], %s3412
        %s3414 = sand.u32 %s32, 1
        %s3415 = scalar_lea.sflag [#allocation13], %s3414
        %s3416 = sand.u32 %s212, 1
        %s3417 = smul.addr %s3416, 128
        %s3418 = scalar_lea.vmem [#allocation14], %s3417
        // Predicated region
        $region61: #{tpu_custom_call.1} parent=39 // pred_check
          %p3419 = pneg %p170
        $region62: #{tpu_custom_call.1} parent=39 // pred_check_branch
          %3421 = sbr.rel (%p3419) target = $region64
        $region63: #{tpu_custom_call.1} parent=39 // pred_region
          %s3422 = smul.u32 16, %s32
          %s3424 = ssub.s32 2048, 2048
          %3425 = vsyncadd %s3405, %s3424
          %s3426 = smul.addr %s3422, 2
          %s3427 = smul.addr %s3426, 64
          %s3428 = scalar_lea.hbm %s5, %s3427
          %s3429 = sshll.u32 %s3408, 4
          %s3430 = int_to_ptr.vmem [resolvable:$true] %s3429
          %3435 = dma.vmem_to_hbm [thread:$0]  %s3430, 2048, %s3428, %s3405, 128, 128, 8
        $region64: #{tpu_custom_call.1} parent=39 // pred_fallthru
          _
        // Predicated region
        $region65: #{tpu_custom_call.1} parent=39 // pred_check
          %p3436 = pneg %p196
        $region66: #{tpu_custom_call.1} parent=39 // pred_check_branch
          %3438 = sbr.rel (%p3436) target = $region68
        $region67: #{tpu_custom_call.1} parent=39 // pred_region
          %s3439 = smul.u32 16, %s32
          %s3441 = ssub.s32 2048, 2048
          %3442 = vsyncadd %s3410, %s3441
          %s3443 = smul.addr %s3439, 2
          %s3444 = smul.addr %s3443, 64
          %s3445 = scalar_lea.hbm %s6, %s3444
          %s3446 = sshll.u32 %s3413, 4
          %s3447 = int_to_ptr.vmem [resolvable:$true] %s3446
          %3452 = dma.vmem_to_hbm [thread:$0]  %s3447, 2048, %s3445, %s3410, 128, 128, 8
        $region68: #{tpu_custom_call.1} parent=39 // pred_fallthru
          _
        // Predicated region
        $region69: #{tpu_custom_call.1} parent=39 // pred_check
          %p3453 = pneg %p222
        $region70: #{tpu_custom_call.1} parent=39 // pred_check_branch
          %3455 = sbr.rel (%p3453) target = $region72
        $region71: #{tpu_custom_call.1} parent=39 // pred_region
          %s3456 = smul.u32 16, %s32
          %s3458 = ssub.s32 2048, 2048
          %3459 = vsyncadd %s3415, %s3458
          %s3460 = smul.addr %s3456, 2
          %s3461 = smul.addr %s3460, 64
          %s3462 = scalar_lea.hbm %s7, %s3461
          %s3463 = sshll.u32 %s3418, 4
          %s3464 = int_to_ptr.vmem [resolvable:$true] %s3463
          %3469 = dma.vmem_to_hbm [thread:$0]  %s3464, 2048, %s3462, %s3415, 128, 128, 8
        $region72: #{tpu_custom_call.1} parent=39 // pred_fallthru
          _
      $region40: #{tpu_custom_call.1} parent=5 // pred_fallthru
        _
      %p3470 = scmp.le.s32.totalorder 2, %s27
      // Predicated region
      $region73: #{tpu_custom_call.1} parent=5 // pred_check
        %p3471 = pneg %p3470
      $region74: #{tpu_custom_call.1} parent=5 // pred_check_branch
        %3473 = sbr.rel (%p3471) target = $region76
      $region75: #{tpu_custom_call.1} parent=5 // pred_region
        %s3474 = ssub.s32 %s27, 2
        // Predicated region
        $region77: #{tpu_custom_call.1} parent=75 // pred_check
          %p3475 = pneg %p176
        $region78: #{tpu_custom_call.1} parent=75 // pred_check_branch
          %3477 = sbr.rel (%p3475) target = $region80
        $region79: #{tpu_custom_call.1} parent=75 // pred_region
          %s3478 = sand.u32 %s161, 1
          %s3479 = scalar_lea.sflag [#allocation4], %s3478
          %s3480 = sand.u32 %s161, 1
          %s3481 = smul.addr %s3480, 128
          %s3482 = scalar_lea.vmem [#allocation11], %s3481
          %3483 = dma.done %s3479, 2048
        $region80: #{tpu_custom_call.1} parent=75 // pred_fallthru
          _
        // Predicated region
        $region81: #{tpu_custom_call.1} parent=75 // pred_check
          %p3484 = pneg %p202
        $region82: #{tpu_custom_call.1} parent=75 // pred_check_branch
          %3486 = sbr.rel (%p3484) target = $region84
        $region83: #{tpu_custom_call.1} parent=75 // pred_region
          %s3487 = sand.u32 %s33, 1
          %s3488 = scalar_lea.sflag [#allocation13], %s3487
          %s3489 = sand.u32 %s187, 1
          %s3490 = smul.addr %s3489, 128
          %s3491 = scalar_lea.vmem [#allocation12], %s3490
          %3492 = dma.done %s3488, 2048
        $region84: #{tpu_custom_call.1} parent=75 // pred_fallthru
          _
        // Predicated region
        $region85: #{tpu_custom_call.1} parent=75 // pred_check
          %p3493 = pneg %p228
        $region86: #{tpu_custom_call.1} parent=75 // pred_check_branch
          %3495 = sbr.rel (%p3493) target = $region88
        $region87: #{tpu_custom_call.1} parent=75 // pred_region
          %s3496 = sand.u32 %s33, 1
          %s3497 = scalar_lea.sflag [#allocation13], %s3496
          %s3498 = sand.u32 %s213, 1
          %s3499 = smul.addr %s3498, 128
          %s3500 = scalar_lea.vmem [#allocation14], %s3499
          %3501 = dma.done %s3497, 2048
        $region88: #{tpu_custom_call.1} parent=75 // pred_fallthru
          _
      $region76: #{tpu_custom_call.1} parent=5 // pred_fallthru
        _
    $region6: #{tpu_custom_call.1} parent=1 // loop_footer
      %s31 = sadd.s32 1, %s27
    $region7: #{tpu_custom_call.1} parent=1 // loop_footer_branch
      %26 = sbr.rel target = $region3
    $region8: #{tpu_custom_call.1} parent=1 // loop_exit
      _
    %3502 = vsyncpa [#allocation3], 1
    %s3503 = scalar_lea.sflag [#allocation3], 1
    %3504 = vsyncpa %s3503, 1
    %3505 = vsyncpa [#allocation6], 1
    %3506 = vsyncpa [#allocation9], 1
    %s3507 = scalar_lea.sflag [#allocation9], 1
    %3508 = vsyncpa %s3507, 1
    %3509 = vsyncpa [#allocation4], 1
    %s3510 = scalar_lea.sflag [#allocation4], 1
    %3511 = vsyncpa %s3510, 1
    %3512 = vsyncpa [#allocation13], 1
    %s3513 = scalar_lea.sflag [#allocation13], 1
    %3514 = vsyncpa %s3513, 1

</llo_original>
